<compile_context>
chip_gen: v7x
topology: tpu7x:2x2x1
jax: 0.10.0
libtpu: 0.0.40
codegen_flags: <defaults>
</compile_context>

<pallas_src>
import math
import numpy as np
import jax
import jax.numpy as jnp
from jax import lax
from jax.experimental import pallas as pl
from jax.experimental.pallas import tpu as pltpu

NEG_BIG = 1.0e12


def _round_up(x, m):
    return (x + m - 1) // m * m


def _vmem_limit_bytes():
    """~7/8 of physical VMEM, capped at 112 MiB (-> ~56 MiB on v7x)."""
    try:
        cap = int(pltpu.get_tpu_info().vmem_capacity_bytes)
    except Exception:
        cap = 128 * 1024 * 1024
    return min(cap * 7 // 8, 112 * 1024 * 1024)


def _default_tq(s_pad):
    if s_pad <= 128:
        return s_pad
    try:
        kind = jax.devices()[0].device_kind.lower()
    except Exception:
        kind = ""
    # v6e: 256-row MXU + 128 MiB VMEM -> larger query tiles pay off there.
    if "v6" in kind and s_pad % 256 == 0:
        return 256
    return 128


def _make_global_pointer_kernel(heads, head_size, scr_dtype):
    hs = head_size
    hs2 = 2 * hs
    neg = NEG_BIG / math.sqrt(hs)          # penalty pre-scaled by 1/sqrt(hs)

    def kernel(x_ref, w_ref, b_ref, cos_ref, sina_ref, sinb_ref,
               mcol_ref, mrow_ref, o_ref, qscr_ref, kscr_ref, prow_ref):
        qt = pl.program_id(1)
        S_pad = kscr_ref.shape[1]
        TQ = o_ref.shape[2]

        # ---- once per batch: per-head projection + RoPE + key-pad fold ----
        @pl.when(qt == 0)
        def _():
            x = x_ref[0]                         # (S_pad, H)  proj dtype
            mcol = mcol_ref[0]                   # (S_pad, 1)  1=token 0=pad
            cos = cos_ref[...]                   # (S_pad, 2*hs), qscale in q half
            sina = sina_ref[...]
            sinb = sinb_ref[...]
            for h in range(heads):               # static unroll, once per batch
                ph = jnp.dot(x, w_ref[h],
                             preferred_element_type=jnp.float32) + b_ref[h]
                # rotate-half-interleaved RoPE via two lane rolls; the wrap
                # positions are zeroed by the signed sina/sinb tables.
                roll_m1 = pltpu.roll(ph, hs2 - 1, axis=1)     # ph[c+1]
                roll_p1 = pltpu.roll(ph, 1, axis=1)           # ph[c-1]
                rope = ph * cos + roll_m1 * sina + roll_p1 * sinb
                qscr_ref[h] = rope[:, :hs].astype(scr_dtype)
                # fold the multiplicative key-pad mask into the k rows
                kscr_ref[h] = (rope[:, hs:] * mcol).astype(scr_dtype)
            # key-pad part of the additive penalty, shared by every q tile
            prow_ref[...] = (1.0 - mrow_ref[0]) * neg          # (1, S_pad)

        # ---- per q tile: batched-over-heads QK + one masked store ----------
        row = qt * TQ + lax.broadcasted_iota(jnp.int32, (TQ, S_pad), 0)
        col = lax.broadcasted_iota(jnp.int32, (TQ, S_pad), 1)
        penalty = prow_ref[...] + (row > col).astype(jnp.float32) * neg

        q_start = pl.multiple_of(qt * TQ, TQ)
        q = qscr_ref[:, pl.ds(q_start, TQ), :]                 # (heads, TQ, hs)
        k = kscr_ref[...]                                      # (heads, S_pad, hs)
        logits = lax.dot_general(q, k, (((2,), (2,)), ((0,), (0,))),
                                 preferred_element_type=jnp.float32)
        o_ref[0] = (logits - penalty[None, :, :]).astype(o_ref.dtype)

    return kernel


def global_pointer2(x, mask, weight, bias, heads, head_size, rope=True,
                    proj_dtype=jnp.bfloat16, out_dtype=jnp.float32, tq=None):
    """Pallas implementation of GlobalPointer2.forward.

    x:      (B, S, H) activations
    mask:   (B, S)    1 = real token, 0 = padding
    weight: (H, heads*head_size*2)  transposed nn.Linear weight
    bias:   (heads*head_size*2,)
    """
    B, S, H = x.shape
    hs = head_size
    hs2 = 2 * hs
    D = heads * hs2
    assert hs % 2 == 0, "head_size must be even for RoPE"
    assert weight.shape == (H, D) and bias.shape == (D,)

    # Pad S to a multiple of 128 (>= 128) so output stores are lane-dense;
    # the pad is sliced off before returning.
    S_pad = _round_up(S, 128)
    TQ = min(tq if tq is not None else _default_tq(S_pad), S_pad)
    assert S_pad % TQ == 0
    NQ = S_pad // TQ
    pad = S_pad - S

    scr_dtype = proj_dtype

    xp = jnp.pad(x, ((0, 0), (0, pad), (0, 0))).astype(proj_dtype)
    # nn.Linear output columns are grouped per head (torch.split along -1).
    w3 = jnp.asarray(weight, proj_dtype).reshape(H, heads, hs2).transpose(1, 0, 2)
    b3 = jnp.asarray(bias, jnp.float32).reshape(1, heads, hs2).transpose(1, 0, 2)
    maskp = jnp.pad(mask.astype(jnp.float32), ((0, 0), (0, pad)))
    mask_col = maskp.reshape(B, S_pad, 1)     # broadcast over feature columns
    mask_row = maskp.reshape(B, 1, S_pad)     # broadcast over query rows

    # --- period-tiled RoPE tables: (S_pad, 2*hs), identical for every head --
    if rope:
        pos = np.arange(S_pad, dtype=np.float32)[:, None]
        idx = np.arange(hs // 2, dtype=np.float32)
        inv_freq = np.power(10000.0, -2.0 * idx / hs)
        ang = pos * inv_freq                                   # (S_pad, hs//2)
        cos = np.repeat(np.cos(ang), 2, axis=-1)               # (S_pad, hs)
        sin = np.repeat(np.sin(ang), 2, axis=-1)
    else:
        cos = np.ones((S_pad, hs), np.float32)
        sin = np.zeros((S_pad, hs), np.float32)
    qscale = 1.0 / math.sqrt(hs)                               # folded into q half
    cos_p = np.concatenate([cos * qscale, cos], axis=1).astype(np.float32)
    sin_p = np.concatenate([sin * qscale, sin], axis=1)
    even = (np.arange(hs2) % 2) == 0
    sina_p = np.where(even, -sin_p, 0.0).astype(np.float32)    # pairs with x[c+1]
    sinb_p = np.where(even, 0.0, sin_p).astype(np.float32)     # pairs with x[c-1]

    kernel = _make_global_pointer_kernel(heads, hs, scr_dtype)
    const2 = lambda b, q: (0, 0)
    const3 = lambda b, q: (0, 0, 0)
    batch3 = lambda b, q: (b, 0, 0)
    sbuf = pl.Buffered(1)      # single-buffer operands that never change
                               # across the q-tile axis (constants + per-batch)

    out = pl.pallas_call(
        kernel,
        out_shape=jax.ShapeDtypeStruct((B, heads, S_pad, S_pad), out_dtype),
        grid_spec=pltpu.PrefetchScalarGridSpec(
            num_scalar_prefetch=0,
            grid=(B, NQ),
            in_specs=[
                pl.BlockSpec((1, S_pad, H), batch3, pipeline_mode=sbuf),    # x
                pl.BlockSpec((heads, H, hs2), const3, pipeline_mode=sbuf),  # W
                pl.BlockSpec((heads, 1, hs2), const3, pipeline_mode=sbuf),  # bias
                pl.BlockSpec((S_pad, hs2), const2, pipeline_mode=sbuf),     # cos
                pl.BlockSpec((S_pad, hs2), const2, pipeline_mode=sbuf),     # sin_a
                pl.BlockSpec((S_pad, hs2), const2, pipeline_mode=sbuf),     # sin_b
                pl.BlockSpec((1, S_pad, 1), batch3, pipeline_mode=sbuf),    # mask col
                pl.BlockSpec((1, 1, S_pad), batch3, pipeline_mode=sbuf),    # mask row
            ],
            out_specs=pl.BlockSpec((1, heads, TQ, S_pad),
                                   lambda b, q: (b, 0, q, 0)),
            scratch_shapes=[
                pltpu.VMEM((heads, S_pad, hs), scr_dtype),     # q (RoPE'd, scaled)
                pltpu.VMEM((heads, S_pad, hs), scr_dtype),     # k (RoPE'd, pad-folded)
                pltpu.VMEM((1, S_pad), jnp.float32),           # key-pad penalty row
            ]),
        compiler_params=pltpu.CompilerParams(
            # TODO(synk): for small-B v7x inference, hoist the qt==0 projection
            # +RoPE into its own pallas_call so the q-tile axis can be marked
            # "parallel" and the second TensorCore is used.
            dimension_semantics=("parallel", "arbitrary"),
            vmem_limit_bytes=_vmem_limit_bytes(),
        ),
    )(xp, w3, b3, jnp.asarray(cos_p), jnp.asarray(sina_p), jnp.asarray(sinb_p),
      mask_col, mask_row)

    if pad:
        out = out[:, :, :S, :S]
    return out


def ref_global_pointer2(x, mask, weight, bias, heads, head_size, rope=True):
    """Pure-JAX reference mirroring the PyTorch forward exactly."""
    B, S, H = x.shape
    outputs = jnp.matmul(x, weight, precision="highest") + bias    # (B, S, D)
    outputs = outputs.reshape(B, S, heads, 2 * head_size)
    qw, kw = outputs[..., :head_size], outputs[..., head_size:]
    if rope:
        pos = jnp.arange(S, dtype=jnp.float32)[:, None]
        idx = jnp.arange(head_size // 2, dtype=jnp.float32)
        inv_freq = jnp.power(10000.0, -2.0 * idx / head_size)
        ang = pos * inv_freq
        cos_pos = jnp.repeat(jnp.cos(ang), 2, -1)[None, :, None, :]
        sin_pos = jnp.repeat(jnp.sin(ang), 2, -1)[None, :, None, :]
        qw2 = jnp.stack([-qw[..., 1::2], qw[..., ::2]], -1).reshape(qw.shape)
        kw2 = jnp.stack([-kw[..., 1::2], kw[..., ::2]], -1).reshape(kw.shape)
        qw = qw * cos_pos + qw2 * sin_pos
        kw = kw * cos_pos + kw2 * sin_pos
    logits = jnp.einsum('bmhd,bnhd->bhmn', qw, kw, precision="highest")
    padm = mask[:, None, None, :].astype(jnp.float32)
    logits = logits * padm - (1.0 - padm) * NEG_BIG
    tril = jnp.tril(jnp.ones((S, S), jnp.float32), -1)
    logits = logits - tril * NEG_BIG
    return logits / head_size ** 0.5


if __name__ == "__main__":
    B, S, HIDDEN = 2, 8, 32
    HEADS, HEAD_SIZE = 4, 64     # 2*head_size == 128 -> lane-width RoPE period
    D = HEADS * HEAD_SIZE * 2

    key = jax.random.PRNGKey(0)
    kx, kw, kb = jax.random.split(key, 3)
    x = jax.random.normal(kx, (B, S, HIDDEN), dtype=jnp.float32)
    weight = 0.1 * jax.random.normal(kw, (HIDDEN, D), dtype=jnp.float32)
    bias = 0.01 * jax.random.normal(kb, (D,), dtype=jnp.float32)

    # deterministic pad mask: sequence lengths [8, 6]
    lengths = jnp.array([8, 6], dtype=jnp.int32)
    mask = (jnp.arange(S)[None, :] < lengths[:, None]).astype(jnp.float32)

    ref = ref_global_pointer2(x, mask, weight, bias, HEADS, HEAD_SIZE, rope=True)

    # strict-accuracy path (f32 projection / scratch / output)
    out_f32 = global_pointer2(x, mask, weight, bias, HEADS, HEAD_SIZE, rope=True,
                              proj_dtype=jnp.float32, out_dtype=jnp.float32)
    out_f32 = jax.block_until_ready(out_f32)
    np.testing.assert_allclose(np.asarray(out_f32), np.asarray(ref),
                               rtol=1e-3, atol=1e-2)

    # fast path (bf16 projection + bf16 scratch/QK on the MXU, f32 logits)
    out_bf16 = global_pointer2(x, mask, weight, bias, HEADS, HEAD_SIZE, rope=True,
                               proj_dtype=jnp.bfloat16, out_dtype=jnp.float32)
    out_bf16 = jax.block_until_ready(out_bf16)
    np.testing.assert_allclose(np.asarray(out_bf16), np.asarray(ref),
                               rtol=2e-2, atol=6e-2)

    # writeback-optimized path (bf16 logits: halves the dominant HBM write)
    out_bf16o = global_pointer2(x, mask, weight, bias, HEADS, HEAD_SIZE, rope=True,
                                proj_dtype=jnp.bfloat16, out_dtype=jnp.bfloat16)
    out_bf16o = jax.block_until_ready(out_bf16o)
    np.testing.assert_allclose(np.asarray(out_bf16o, dtype=np.float32),
                               np.asarray(ref), rtol=3e-2, atol=1e-1)

    print("KERNEL_OK")
</pallas_src>

<mosaic_0001>
module attributes {stable_mosaic.version = 11 : i64} {
  func.func @kernel(%arg0: i32, %arg1: i32, %arg2: memref<1x128x32xf32, #tpu.memory_space<vmem>>, %arg3: memref<4x32x128xf32, #tpu.memory_space<vmem>>, %arg4: memref<4x1x128xf32, #tpu.memory_space<vmem>>, %arg5: memref<128x128xf32, #tpu.memory_space<vmem>>, %arg6: memref<128x128xf32, #tpu.memory_space<vmem>>, %arg7: memref<128x128xf32, #tpu.memory_space<vmem>>, %arg8: memref<1x128x1xf32, #tpu.memory_space<vmem>>, %arg9: memref<1x1x128xf32, #tpu.memory_space<vmem>>, %arg10: memref<1x4x128x128xf32, #tpu.memory_space<vmem>>, %arg11: memref<4x128x64xf32, #tpu.memory_space<vmem>>, %arg12: memref<4x128x64xf32, #tpu.memory_space<vmem>>, %arg13: memref<1x128xf32, #tpu.memory_space<vmem>>) attributes {dimension_semantics = [#tpu.dimension_semantics<parallel>, #tpu.dimension_semantics<arbitrary>], iteration_bounds = array<i64: 2, 1>, scalar_prefetch = 0 : i64, scratch_operands = 3 : i64, tpu.core_type = #tpu.core_type<tc>, window_params = [{pipeline_mode = #tpu.pipeline_mode<synchronous>, transform_indices = @transform_0, window_bounds = array<i64: 1, 128, 32>}, {pipeline_mode = #tpu.pipeline_mode<synchronous>, transform_indices = @transform_1, window_bounds = array<i64: 4, 32, 128>}, {pipeline_mode = #tpu.pipeline_mode<synchronous>, transform_indices = @transform_2, window_bounds = array<i64: 4, 1, 128>}, {pipeline_mode = #tpu.pipeline_mode<synchronous>, transform_indices = @transform_3, window_bounds = array<i64: 128, 128>}, {pipeline_mode = #tpu.pipeline_mode<synchronous>, transform_indices = @transform_4, window_bounds = array<i64: 128, 128>}, {pipeline_mode = #tpu.pipeline_mode<synchronous>, transform_indices = @transform_5, window_bounds = array<i64: 128, 128>}, {pipeline_mode = #tpu.pipeline_mode<synchronous>, transform_indices = @transform_6, window_bounds = array<i64: 1, 128, 1>}, {pipeline_mode = #tpu.pipeline_mode<synchronous>, transform_indices = @transform_7, window_bounds = array<i64: 1, 1, 128>}, {transform_indices = @transform_8, window_bounds = array<i64: 1, 4, 128, 128>}]} {
    %c0_i32 = arith.constant 0 : i32
    %0 = arith.cmpi eq, %arg1, %c0_i32 : i32
    %1 = arith.extui %0 : i1 to i32
    %c0_i32_0 = arith.constant 0 : i32
    %2 = arith.cmpi ne, %1, %c0_i32_0 : i32
    scf.if %2 {
      %c0_13 = arith.constant 0 : index
      %c0_14 = arith.constant 0 : index
      %c0_15 = arith.constant 0 : index
      %28 = vector.load %arg2[%c0_13, %c0_14, %c0_15] : memref<1x128x32xf32, #tpu.memory_space<vmem>>, vector<1x128x32xf32>
      %29 = vector.shape_cast %28 : vector<1x128x32xf32> to vector<128x32xf32>
      %c0_16 = arith.constant 0 : index
      %c0_17 = arith.constant 0 : index
      %c0_18 = arith.constant 0 : index
      %30 = vector.load %arg8[%c0_16, %c0_17, %c0_18] : memref<1x128x1xf32, #tpu.memory_space<vmem>>, vector<1x128x1xf32>
      %31 = vector.shape_cast %30 : vector<1x128x1xf32> to vector<128x1xf32>
      %c0_19 = arith.constant 0 : index
      %c0_20 = arith.constant 0 : index
      %32 = vector.load %arg5[%c0_19, %c0_20] : memref<128x128xf32, #tpu.memory_space<vmem>>, vector<128x128xf32>
      %c0_21 = arith.constant 0 : index
      %c0_22 = arith.constant 0 : index
      %33 = vector.load %arg6[%c0_21, %c0_22] : memref<128x128xf32, #tpu.memory_space<vmem>>, vector<128x128xf32>
      %c0_23 = arith.constant 0 : index
      %c0_24 = arith.constant 0 : index
      %34 = vector.load %arg7[%c0_23, %c0_24] : memref<128x128xf32, #tpu.memory_space<vmem>>, vector<128x128xf32>
      %c0_25 = arith.constant 0 : index
      %c0_26 = arith.constant 0 : index
      %c0_27 = arith.constant 0 : index
      %35 = vector.load %arg3[%c0_25, %c0_26, %c0_27] : memref<4x32x128xf32, #tpu.memory_space<vmem>>, vector<1x32x128xf32>
      %36 = vector.shape_cast %35 : vector<1x32x128xf32> to vector<32x128xf32>
      %cst_28 = arith.constant dense<0.000000e+00> : vector<128x128xf32>
      %37 = tpu.matmul %29, %36, %cst_28 {dimension_numbers = #tpu.dot_dimension_numbers<[1], [0], [0], [1], [0, 0, 1, 1], [], []>} : vector<128x32xf32>, vector<32x128xf32>, vector<128x128xf32> -> vector<128x128xf32>
      %c0_29 = arith.constant 0 : index
      %c0_30 = arith.constant 0 : index
      %c0_31 = arith.constant 0 : index
      %38 = vector.load %arg4[%c0_29, %c0_30, %c0_31] : memref<4x1x128xf32, #tpu.memory_space<vmem>>, vector<1x1x128xf32>
      %39 = vector.shape_cast %38 : vector<1x1x128xf32> to vector<1x128xf32>
      %40 = vector.broadcast %39 : vector<1x128xf32> to vector<128x128xf32>
      %41 = arith.addf %37, %40 : vector<128x128xf32>
      %c127_i32 = arith.constant 127 : i32
      %42 = tpu.dynamic_rotate %41 by %c127_i32 dim 1 : vector<128x128xf32>, i32 -> vector<128x128xf32>
      %c1_i32 = arith.constant 1 : i32
      %43 = tpu.dynamic_rotate %41 by %c1_i32 dim 1 : vector<128x128xf32>, i32 -> vector<128x128xf32>
      %44 = arith.mulf %41, %32 : vector<128x128xf32>
      %45 = arith.mulf %42, %33 : vector<128x128xf32>
      %46 = arith.addf %44, %45 : vector<128x128xf32>
      %47 = arith.mulf %43, %34 : vector<128x128xf32>
      %48 = arith.addf %46, %47 : vector<128x128xf32>
      %49 = vector.extract_strided_slice %48 {offsets = [0, 0], sizes = [128, 64], strides = [1, 1]} : vector<128x128xf32> to vector<128x64xf32>
      %c0_32 = arith.constant 0 : index
      %c0_33 = arith.constant 0 : index
      %c0_34 = arith.constant 0 : index
      %50 = vector.load %arg11[%c0_32, %c0_33, %c0_34] : memref<4x128x64xf32, #tpu.memory_space<vmem>>, vector<1x128x64xf32>
      %51 = vector.shape_cast %50 : vector<1x128x64xf32> to vector<128x64xf32>
      %52 = vector.shape_cast %49 : vector<128x64xf32> to vector<1x128x64xf32>
      tpu.vector_store %arg11[%c0_32, %c0_33, %c0_34], %52 {strides = array<i32>} : memref<4x128x64xf32, #tpu.memory_space<vmem>>, vector<1x128x64xf32>,
      %53 = vector.extract_strided_slice %48 {offsets = [0, 64], sizes = [128, 64], strides = [1, 1]} : vector<128x128xf32> to vector<128x64xf32>
      %54 = vector.broadcast %31 : vector<128x1xf32> to vector<128x64xf32>
      %55 = arith.mulf %53, %54 : vector<128x64xf32>
      %c0_35 = arith.constant 0 : index
      %c0_36 = arith.constant 0 : index
      %c0_37 = arith.constant 0 : index
      %56 = vector.load %arg12[%c0_35, %c0_36, %c0_37] : memref<4x128x64xf32, #tpu.memory_space<vmem>>, vector<1x128x64xf32>
      %57 = vector.shape_cast %56 : vector<1x128x64xf32> to vector<128x64xf32>
      %58 = vector.shape_cast %55 : vector<128x64xf32> to vector<1x128x64xf32>
      tpu.vector_store %arg12[%c0_35, %c0_36, %c0_37], %58 {strides = array<i32>} : memref<4x128x64xf32, #tpu.memory_space<vmem>>, vector<1x128x64xf32>,
      %c1 = arith.constant 1 : index
      %c0_38 = arith.constant 0 : index
      %c0_39 = arith.constant 0 : index
      %59 = vector.load %arg3[%c1, %c0_38, %c0_39] : memref<4x32x128xf32, #tpu.memory_space<vmem>>, vector<1x32x128xf32>
      %60 = vector.shape_cast %59 : vector<1x32x128xf32> to vector<32x128xf32>
      %cst_40 = arith.constant dense<0.000000e+00> : vector<128x128xf32>
      %61 = tpu.matmul %29, %60, %cst_40 {dimension_numbers = #tpu.dot_dimension_numbers<[1], [0], [0], [1], [0, 0, 1, 1], [], []>} : vector<128x32xf32>, vector<32x128xf32>, vector<128x128xf32> -> vector<128x128xf32>
      %c1_41 = arith.constant 1 : index
      %c0_42 = arith.constant 0 : index
      %c0_43 = arith.constant 0 : index
      %62 = vector.load %arg4[%c1_41, %c0_42, %c0_43] : memref<4x1x128xf32, #tpu.memory_space<vmem>>, vector<1x1x128xf32>
      %63 = vector.shape_cast %62 : vector<1x1x128xf32> to vector<1x128xf32>
      %64 = vector.broadcast %63 : vector<1x128xf32> to vector<128x128xf32>
      %65 = arith.addf %61, %64 : vector<128x128xf32>
      %c127_i32_44 = arith.constant 127 : i32
      %66 = tpu.dynamic_rotate %65 by %c127_i32_44 dim 1 : vector<128x128xf32>, i32 -> vector<128x128xf32>
      %c1_i32_45 = arith.constant 1 : i32
      %67 = tpu.dynamic_rotate %65 by %c1_i32_45 dim 1 : vector<128x128xf32>, i32 -> vector<128x128xf32>
      %68 = arith.mulf %65, %32 : vector<128x128xf32>
      %69 = arith.mulf %66, %33 : vector<128x128xf32>
      %70 = arith.addf %68, %69 : vector<128x128xf32>
      %71 = arith.mulf %67, %34 : vector<128x128xf32>
      %72 = arith.addf %70, %71 : vector<128x128xf32>
      %73 = vector.extract_strided_slice %72 {offsets = [0, 0], sizes = [128, 64], strides = [1, 1]} : vector<128x128xf32> to vector<128x64xf32>
      %c1_46 = arith.constant 1 : index
      %c0_47 = arith.constant 0 : index
      %c0_48 = arith.constant 0 : index
      %74 = vector.load %arg11[%c1_46, %c0_47, %c0_48] : memref<4x128x64xf32, #tpu.memory_space<vmem>>, vector<1x128x64xf32>
      %75 = vector.shape_cast %74 : vector<1x128x64xf32> to vector<128x64xf32>
      %76 = vector.shape_cast %73 : vector<128x64xf32> to vector<1x128x64xf32>
      tpu.vector_store %arg11[%c1_46, %c0_47, %c0_48], %76 {strides = array<i32>} : memref<4x128x64xf32, #tpu.memory_space<vmem>>, vector<1x128x64xf32>,
      %77 = vector.extract_strided_slice %72 {offsets = [0, 64], sizes = [128, 64], strides = [1, 1]} : vector<128x128xf32> to vector<128x64xf32>
      %78 = vector.broadcast %31 : vector<128x1xf32> to vector<128x64xf32>
      %79 = arith.mulf %77, %78 : vector<128x64xf32>
      %c1_49 = arith.constant 1 : index
      %c0_50 = arith.constant 0 : index
      %c0_51 = arith.constant 0 : index
      %80 = vector.load %arg12[%c1_49, %c0_50, %c0_51] : memref<4x128x64xf32, #tpu.memory_space<vmem>>, vector<1x128x64xf32>
      %81 = vector.shape_cast %80 : vector<1x128x64xf32> to vector<128x64xf32>
      %82 = vector.shape_cast %79 : vector<128x64xf32> to vector<1x128x64xf32>
      tpu.vector_store %arg12[%c1_49, %c0_50, %c0_51], %82 {strides = array<i32>} : memref<4x128x64xf32, #tpu.memory_space<vmem>>, vector<1x128x64xf32>,
      %c2 = arith.constant 2 : index
      %c0_52 = arith.constant 0 : index
      %c0_53 = arith.constant 0 : index
      %83 = vector.load %arg3[%c2, %c0_52, %c0_53] : memref<4x32x128xf32, #tpu.memory_space<vmem>>, vector<1x32x128xf32>
      %84 = vector.shape_cast %83 : vector<1x32x128xf32> to vector<32x128xf32>
      %cst_54 = arith.constant dense<0.000000e+00> : vector<128x128xf32>
      %85 = tpu.matmul %29, %84, %cst_54 {dimension_numbers = #tpu.dot_dimension_numbers<[1], [0], [0], [1], [0, 0, 1, 1], [], []>} : vector<128x32xf32>, vector<32x128xf32>, vector<128x128xf32> -> vector<128x128xf32>
      %c2_55 = arith.constant 2 : index
      %c0_56 = arith.constant 0 : index
      %c0_57 = arith.constant 0 : index
      %86 = vector.load %arg4[%c2_55, %c0_56, %c0_57] : memref<4x1x128xf32, #tpu.memory_space<vmem>>, vector<1x1x128xf32>
      %87 = vector.shape_cast %86 : vector<1x1x128xf32> to vector<1x128xf32>
      %88 = vector.broadcast %87 : vector<1x128xf32> to vector<128x128xf32>
      %89 = arith.addf %85, %88 : vector<128x128xf32>
      %c127_i32_58 = arith.constant 127 : i32
      %90 = tpu.dynamic_rotate %89 by %c127_i32_58 dim 1 : vector<128x128xf32>, i32 -> vector<128x128xf32>
      %c1_i32_59 = arith.constant 1 : i32
      %91 = tpu.dynamic_rotate %89 by %c1_i32_59 dim 1 : vector<128x128xf32>, i32 -> vector<128x128xf32>
      %92 = arith.mulf %89, %32 : vector<128x128xf32>
      %93 = arith.mulf %90, %33 : vector<128x128xf32>
      %94 = arith.addf %92, %93 : vector<128x128xf32>
      %95 = arith.mulf %91, %34 : vector<128x128xf32>
      %96 = arith.addf %94, %95 : vector<128x128xf32>
      %97 = vector.extract_strided_slice %96 {offsets = [0, 0], sizes = [128, 64], strides = [1, 1]} : vector<128x128xf32> to vector<128x64xf32>
      %c2_60 = arith.constant 2 : index
      %c0_61 = arith.constant 0 : index
      %c0_62 = arith.constant 0 : index
      %98 = vector.load %arg11[%c2_60, %c0_61, %c0_62] : memref<4x128x64xf32, #tpu.memory_space<vmem>>, vector<1x128x64xf32>
      %99 = vector.shape_cast %98 : vector<1x128x64xf32> to vector<128x64xf32>
      %100 = vector.shape_cast %97 : vector<128x64xf32> to vector<1x128x64xf32>
      tpu.vector_store %arg11[%c2_60, %c0_61, %c0_62], %100 {strides = array<i32>} : memref<4x128x64xf32, #tpu.memory_space<vmem>>, vector<1x128x64xf32>,
      %101 = vector.extract_strided_slice %96 {offsets = [0, 64], sizes = [128, 64], strides = [1, 1]} : vector<128x128xf32> to vector<128x64xf32>
      %102 = vector.broadcast %31 : vector<128x1xf32> to vector<128x64xf32>
      %103 = arith.mulf %101, %102 : vector<128x64xf32>
      %c2_63 = arith.constant 2 : index
      %c0_64 = arith.constant 0 : index
      %c0_65 = arith.constant 0 : index
      %104 = vector.load %arg12[%c2_63, %c0_64, %c0_65] : memref<4x128x64xf32, #tpu.memory_space<vmem>>, vector<1x128x64xf32>
      %105 = vector.shape_cast %104 : vector<1x128x64xf32> to vector<128x64xf32>
      %106 = vector.shape_cast %103 : vector<128x64xf32> to vector<1x128x64xf32>
      tpu.vector_store %arg12[%c2_63, %c0_64, %c0_65], %106 {strides = array<i32>} : memref<4x128x64xf32, #tpu.memory_space<vmem>>, vector<1x128x64xf32>,
      %c3 = arith.constant 3 : index
      %c0_66 = arith.constant 0 : index
      %c0_67 = arith.constant 0 : index
      %107 = vector.load %arg3[%c3, %c0_66, %c0_67] : memref<4x32x128xf32, #tpu.memory_space<vmem>>, vector<1x32x128xf32>
      %108 = vector.shape_cast %107 : vector<1x32x128xf32> to vector<32x128xf32>
      %cst_68 = arith.constant dense<0.000000e+00> : vector<128x128xf32>
      %109 = tpu.matmul %29, %108, %cst_68 {dimension_numbers = #tpu.dot_dimension_numbers<[1], [0], [0], [1], [0, 0, 1, 1], [], []>} : vector<128x32xf32>, vector<32x128xf32>, vector<128x128xf32> -> vector<128x128xf32>
      %c3_69 = arith.constant 3 : index
      %c0_70 = arith.constant 0 : index
      %c0_71 = arith.constant 0 : index
      %110 = vector.load %arg4[%c3_69, %c0_70, %c0_71] : memref<4x1x128xf32, #tpu.memory_space<vmem>>, vector<1x1x128xf32>
      %111 = vector.shape_cast %110 : vector<1x1x128xf32> to vector<1x128xf32>
      %112 = vector.broadcast %111 : vector<1x128xf32> to vector<128x128xf32>
      %113 = arith.addf %109, %112 : vector<128x128xf32>
      %c127_i32_72 = arith.constant 127 : i32
      %114 = tpu.dynamic_rotate %113 by %c127_i32_72 dim 1 : vector<128x128xf32>, i32 -> vector<128x128xf32>
      %c1_i32_73 = arith.constant 1 : i32
      %115 = tpu.dynamic_rotate %113 by %c1_i32_73 dim 1 : vector<128x128xf32>, i32 -> vector<128x128xf32>
      %116 = arith.mulf %113, %32 : vector<128x128xf32>
      %117 = arith.mulf %114, %33 : vector<128x128xf32>
      %118 = arith.addf %116, %117 : vector<128x128xf32>
      %119 = arith.mulf %115, %34 : vector<128x128xf32>
      %120 = arith.addf %118, %119 : vector<128x128xf32>
      %121 = vector.extract_strided_slice %120 {offsets = [0, 0], sizes = [128, 64], strides = [1, 1]} : vector<128x128xf32> to vector<128x64xf32>
      %c3_74 = arith.constant 3 : index
      %c0_75 = arith.constant 0 : index
      %c0_76 = arith.constant 0 : index
      %122 = vector.load %arg11[%c3_74, %c0_75, %c0_76] : memref<4x128x64xf32, #tpu.memory_space<vmem>>, vector<1x128x64xf32>
      %123 = vector.shape_cast %122 : vector<1x128x64xf32> to vector<128x64xf32>
      %124 = vector.shape_cast %121 : vector<128x64xf32> to vector<1x128x64xf32>
      tpu.vector_store %arg11[%c3_74, %c0_75, %c0_76], %124 {strides = array<i32>} : memref<4x128x64xf32, #tpu.memory_space<vmem>>, vector<1x128x64xf32>,
      %125 = vector.extract_strided_slice %120 {offsets = [0, 64], sizes = [128, 64], strides = [1, 1]} : vector<128x128xf32> to vector<128x64xf32>
      %126 = vector.broadcast %31 : vector<128x1xf32> to vector<128x64xf32>
      %127 = arith.mulf %125, %126 : vector<128x64xf32>
      %c3_77 = arith.constant 3 : index
      %c0_78 = arith.constant 0 : index
      %c0_79 = arith.constant 0 : index
      %128 = vector.load %arg12[%c3_77, %c0_78, %c0_79] : memref<4x128x64xf32, #tpu.memory_space<vmem>>, vector<1x128x64xf32>
      %129 = vector.shape_cast %128 : vector<1x128x64xf32> to vector<128x64xf32>
      %130 = vector.shape_cast %127 : vector<128x64xf32> to vector<1x128x64xf32>
      tpu.vector_store %arg12[%c3_77, %c0_78, %c0_79], %130 {strides = array<i32>} : memref<4x128x64xf32, #tpu.memory_space<vmem>>, vector<1x128x64xf32>,
      %c0_80 = arith.constant 0 : index
      %c0_81 = arith.constant 0 : index
      %c0_82 = arith.constant 0 : index
      %131 = vector.load %arg9[%c0_80, %c0_81, %c0_82] : memref<1x1x128xf32, #tpu.memory_space<vmem>>, vector<1x1x128xf32>
      %132 = vector.shape_cast %131 : vector<1x1x128xf32> to vector<1x128xf32>
      %cst_83 = arith.constant 1.000000e+00 : f32
      %133 = vector.broadcast %cst_83 : f32 to vector<1x128xf32>
      %134 = arith.subf %133, %132 : vector<1x128xf32>
      %cst_84 = arith.constant 1.250000e+11 : f32
      %135 = vector.broadcast %cst_84 : f32 to vector<1x128xf32>
      %136 = arith.mulf %134, %135 : vector<1x128xf32>
      %c0_85 = arith.constant 0 : index
      %c0_86 = arith.constant 0 : index
      %137 = vector.load %arg13[%c0_85, %c0_86] : memref<1x128xf32, #tpu.memory_space<vmem>>, vector<1x128xf32>
      tpu.vector_store %arg13[%c0_85, %c0_86], %136 {strides = array<i32>} : memref<1x128xf32, #tpu.memory_space<vmem>>, vector<1x128xf32>,
    } else {
    }
    %c128_i32 = arith.constant 128 : i32
    %3 = arith.muli %arg1, %c128_i32 : i32
    %4 = tpu.iota {dimensions = array<i32: 0>} : vector<128x128xi32>
    %5 = vector.broadcast %3 : i32 to vector<128x128xi32>
    %6 = arith.addi %5, %4 : vector<128x128xi32>
    %7 = tpu.iota {dimensions = array<i32: 1>} : vector<128x128xi32>
    %c0 = arith.constant 0 : index
    %c0_1 = arith.constant 0 : index
    %8 = vector.load %arg13[%c0, %c0_1] : memref<1x128xf32, #tpu.memory_space<vmem>>, vector<1x128xf32>
    %9 = arith.cmpi sgt, %6, %7 : vector<128x128xi32>
    %10 = arith.extui %9 : vector<128x128xi1> to vector<128x128xi32>
    %11 = arith.sitofp %10 : vector<128x128xi32> to vector<128x128xf32>
    %cst = arith.constant 1.250000e+11 : f32
    %12 = vector.broadcast %cst : f32 to vector<128x128xf32>
    %13 = arith.mulf %11, %12 : vector<128x128xf32>
    %14 = vector.broadcast %8 : vector<1x128xf32> to vector<128x128xf32>
    %15 = arith.addf %14, %13 : vector<128x128xf32>
    %c128_i32_2 = arith.constant 128 : i32
    %16 = arith.muli %arg1, %c128_i32_2 : i32
    %17 = tpu.assume_multiple %16, 128 : i32
    %c0_3 = arith.constant 0 : index
    %18 = arith.index_cast %17 : i32 to index
    %c0_4 = arith.constant 0 : index
    %19 = vector.load %arg11[%c0_3, %18, %c0_4] : memref<4x128x64xf32, #tpu.memory_space<vmem>>, vector<4x128x64xf32>
    %c0_5 = arith.constant 0 : index
    %c0_6 = arith.constant 0 : index
    %c0_7 = arith.constant 0 : index
    %20 = vector.load %arg12[%c0_5, %c0_6, %c0_7] : memref<4x128x64xf32, #tpu.memory_space<vmem>>, vector<4x128x64xf32>
    %cst_8 = arith.constant dense<0.000000e+00> : vector<4x128x128xf32>
    %21 = tpu.matmul %19, %20, %cst_8 {dimension_numbers = #tpu.dot_dimension_numbers<[2], [2], [1], [1], [0, 0, 0, 1, 1, 1], [0], [0]>} : vector<4x128x64xf32>, vector<4x128x64xf32>, vector<4x128x128xf32> -> vector<4x128x128xf32>
    %22 = vector.shape_cast %15 : vector<128x128xf32> to vector<1x128x128xf32>
    %23 = vector.broadcast %22 : vector<1x128x128xf32> to vector<4x128x128xf32>
    %24 = arith.subf %21, %23 : vector<4x128x128xf32>
    %c0_9 = arith.constant 0 : index
    %c0_10 = arith.constant 0 : index
    %c0_11 = arith.constant 0 : index
    %c0_12 = arith.constant 0 : index
    %25 = vector.load %arg10[%c0_9, %c0_10, %c0_11, %c0_12] : memref<1x4x128x128xf32, #tpu.memory_space<vmem>>, vector<1x4x128x128xf32>
    %26 = vector.shape_cast %25 : vector<1x4x128x128xf32> to vector<4x128x128xf32>
    %27 = vector.shape_cast %24 : vector<4x128x128xf32> to vector<1x4x128x128xf32>
    tpu.vector_store %arg10[%c0_9, %c0_10, %c0_11, %c0_12], %27 {strides = array<i32>} : memref<1x4x128x128xf32, #tpu.memory_space<vmem>>, vector<1x4x128x128xf32>,
    return
  }
  func.func @transform_0(%arg0: i32, %arg1: i32) -> (i32, i32, i32) {
    %c0_i32 = arith.constant 0 : i32
    %c0_i32_0 = arith.constant 0 : i32
    %c0_i32_1 = arith.constant 0 : i32
    return %arg0, %c0_i32, %c0_i32_0 : i32, i32, i32
  }
  func.func @transform_1(%arg0: i32, %arg1: i32) -> (i32, i32, i32) {
    %c0_i32 = arith.constant 0 : i32
    %c0_i32_0 = arith.constant 0 : i32
    %c0_i32_1 = arith.constant 0 : i32
    %c0_i32_2 = arith.constant 0 : i32
    return %c0_i32, %c0_i32_0, %c0_i32_1 : i32, i32, i32
  }
  func.func @transform_2(%arg0: i32, %arg1: i32) -> (i32, i32, i32) {
    %c0_i32 = arith.constant 0 : i32
    %c0_i32_0 = arith.constant 0 : i32
    %c0_i32_1 = arith.constant 0 : i32
    %c0_i32_2 = arith.constant 0 : i32
    return %c0_i32, %c0_i32_0, %c0_i32_1 : i32, i32, i32
  }
  func.func @transform_3(%arg0: i32, %arg1: i32) -> (i32, i32) {
    %c0_i32 = arith.constant 0 : i32
    %c0_i32_0 = arith.constant 0 : i32
    %c0_i32_1 = arith.constant 0 : i32
    return %c0_i32, %c0_i32_0 : i32, i32
  }
  func.func @transform_4(%arg0: i32, %arg1: i32) -> (i32, i32) {
    %c0_i32 = arith.constant 0 : i32
    %c0_i32_0 = arith.constant 0 : i32
    %c0_i32_1 = arith.constant 0 : i32
    return %c0_i32, %c0_i32_0 : i32, i32
  }
  func.func @transform_5(%arg0: i32, %arg1: i32) -> (i32, i32) {
    %c0_i32 = arith.constant 0 : i32
    %c0_i32_0 = arith.constant 0 : i32
    %c0_i32_1 = arith.constant 0 : i32
    return %c0_i32, %c0_i32_0 : i32, i32
  }
  func.func @transform_6(%arg0: i32, %arg1: i32) -> (i32, i32, i32) {
    %c0_i32 = arith.constant 0 : i32
    %c0_i32_0 = arith.constant 0 : i32
    %c0_i32_1 = arith.constant 0 : i32
    return %arg0, %c0_i32, %c0_i32_0 : i32, i32, i32
  }
  func.func @transform_7(%arg0: i32, %arg1: i32) -> (i32, i32, i32) {
    %c0_i32 = arith.constant 0 : i32
    %c0_i32_0 = arith.constant 0 : i32
    %c0_i32_1 = arith.constant 0 : i32
    return %arg0, %c0_i32, %c0_i32_0 : i32, i32, i32
  }
  func.func @transform_8(%arg0: i32, %arg1: i32) -> (i32, i32, i32, i32) {
    %c0_i32 = arith.constant 0 : i32
    %c0_i32_0 = arith.constant 0 : i32
    %c0_i32_1 = arith.constant 0 : i32
    return %arg0, %c0_i32, %arg1, %c0_i32_0 : i32, i32, i32, i32
  }
}

</mosaic_0001>

<llo_original>
// kernel: tpu_custom_call.1
$region0: #{tpu_custom_call.1}
  #allocation0 [shape = 'u32[]', space=smem, size = 0x4, offset = 0x4, fixed_abs, tag = 'smem constant byte address 0x4 - core index']
  #allocation1 [shape = 'u32[144,128]{1,0:T(1,128)}', space=vmem, size = 0x12000, scoped, tag = 'internal scratch']
  #allocation2 [shape = 'f32[4,128,64]{2,1,0:T(8,128)}', space=vmem, size = 0x40000, scoped, tag = 'scratch operand']
  #allocation3 [shape = 'f32[4,128,64]{2,1,0:T(8,128)}', space=vmem, size = 0x40000, scoped, tag = 'scratch operand']
  #allocation4 [shape = 'f32[1,128]{1,0:T(1,128)}', space=vmem, size = 0x200, scoped, tag = 'scratch operand']
  %s0 = inlined_call_operand.hbm [shape: f32[2,128,32], index: 0, kind: input, shape index: {}]
  %s1 = inlined_call_operand.hbm [shape: f32[4,32,128], index: 1, kind: input, shape index: {}]
  %s2 = inlined_call_operand.hbm [shape: f32[4,1,128], index: 2, kind: input, shape index: {}]
  %s3 = inlined_call_operand.hbm [shape: f32[128,128], index: 3, kind: input, shape index: {}]
  %s4 = inlined_call_operand.hbm [shape: f32[128,128], index: 4, kind: input, shape index: {}]
  %s5 = inlined_call_operand.hbm [shape: f32[128,128], index: 5, kind: input, shape index: {}]
  %s6 = inlined_call_operand.hbm [shape: f32[2,128,1], index: 6, kind: input, shape index: {}]
  %s7 = inlined_call_operand.hbm [shape: f32[2,1,128], index: 7, kind: input, shape index: {}]
  %s8 = inlined_call_operand.hbm [shape: f32[2,4,128,128], index: 8, kind: output, shape index: {}]
  %s9 = sld [smem:[#allocation0]]
  $region101: #{tpu_custom_call.1} parent=0
    _
  %s11 = ssub.s32 1, %s9
  %s12 = scalar_select 0, %s11, %s9
  $region1: #{tpu_custom_call.1} parent=0
    #allocation5 [shape = 'u8[65536]{0}', space=vmem, size = 0x10000, scoped, tag = 'input window, operand 0, single buffered']
    #allocation6 [shape = 's32[2]{0}', space=sflag, size = 0x8, scoped, tag = 'scoped memory for tpu_custom_call.1']
    #allocation7 [shape = 's32[2]{0}', space=sflag, size = 0x8, scoped, tag = 'scoped memory for tpu_custom_call.1']
    #allocation8 [shape = 'u8[65536]{0}', space=vmem, size = 0x10000, scoped, tag = 'input window, operand 1, single buffered']
    #allocation9 [shape = 's32[1]{0}', space=sflag, size = 0x4, scoped, tag = 'scoped memory for tpu_custom_call.1']
    #allocation10 [shape = 'u8[2048]{0}', space=vmem, size = 0x800, scoped, tag = 'input window, operand 2, single buffered']
    #allocation11 [shape = 'u8[65536]{0}', space=vmem, size = 0x10000, scoped, tag = 'input window, operand 3, single buffered']
    #allocation12 [shape = 's32[1]{0}', space=sflag, size = 0x4, scoped, tag = 'scoped memory for tpu_custom_call.1']
    #allocation13 [shape = 'u8[65536]{0}', space=vmem, size = 0x10000, scoped, tag = 'input window, operand 4, single buffered']
    #allocation14 [shape = 'u8[65536]{0}', space=vmem, size = 0x10000, scoped, tag = 'input window, operand 5, single buffered']
    #allocation15 [shape = 's32[1]{0}', space=sflag, size = 0x4, scoped, tag = 'scoped memory for tpu_custom_call.1']
    #allocation16 [shape = 'u8[65536]{0}', space=vmem, size = 0x10000, scoped, tag = 'input window, operand 6, single buffered']
    #allocation17 [shape = 'u8[512]{0}', space=vmem, size = 0x400, scoped, tag = 'input window, operand 7, single buffered']
    #allocation18 [shape = 's32[1]{0}', space=sflag, size = 0x4, scoped, tag = 'scoped memory for tpu_custom_call.1']
    #allocation19 [shape = 'u8[524288]{0}', space=vmem, size = 0x80000, scoped, tag = 'output window, operand 0']
    %13 = vsyncpa [#allocation6], 0
    %14 = vsyncpa [#allocation9], 0
    %15 = vsyncpa [#allocation12], 0
    %16 = vsyncpa [#allocation15], 0
    %17 = vsyncpa [#allocation18], 0
    %18 = vsyncpa [#allocation7], 0
    %s19 = scalar_lea.sflag [#allocation7], 1
    %20 = vsyncpa %s19, 0
    loop: start=0, step=1, limit=4
    $region2: #{tpu_custom_call.1} parent=1 // loop_pre_header
      _
    $region3: #{tpu_custom_call.1} parent=1 // loop_header
      %s22 = sphi 0, %s26
      %p23 = scmp.ge.s32.totalorder %s22, 4
      %s29 = sphi 0, %s41
      %s30 = sphi 0, %s37
      %s31 = sphi 0, %s29
      %s32 = sphi 0, %s30
      %s33 = sphi 0, %s31
      %s34 = sphi 0, %s32
      %s44 = sphi 0, %s46
      %s47 = sphi 0, %s44
      %s48 = sphi 0, %s47
      %s64 = sphi 0, %s48
      %s68 = sphi 0, %s68
      %s70 = sphi 0, %s68
      %s71 = sphi 0, %s70
      %s85 = sphi 0, %s71
      %s89 = sphi 0, %s89
      %s91 = sphi 0, %s89
      %s92 = sphi 0, %s91
      %s106 = sphi 0, %s92
      %s110 = sphi 0, %s110
      %s112 = sphi 0, %s110
      %s113 = sphi 0, %s112
      %s127 = sphi 0, %s113
      %s131 = sphi 0, %s131
      %s133 = sphi 0, %s131
      %s134 = sphi 0, %s133
      %s148 = sphi 0, %s134
      %s152 = sphi 0, %s152
      %s154 = sphi 0, %s152
      %s155 = sphi 0, %s154
      %s169 = sphi 0, %s155
      %s175 = sphi 0, %s177
      %s178 = sphi 0, %s175
      %s179 = sphi 0, %s178
      %s195 = sphi 0, %s179
      %s201 = sphi 0, %s203
      %s204 = sphi 0, %s201
      %s205 = sphi 0, %s204
      %s221 = sphi 0, %s205
      %s229 = sphi 0, %s231
      %s232 = sphi 0, %s229
      %s233 = sphi 0, %s232
      %s249 = sphi 0, %s233
    $region4: #{tpu_custom_call.1} parent=1 // loop_header_branch
      %25 = sbr.rel (%p23) target = $region8
    $region5: #{tpu_custom_call.1} parent=1 // loop_body
      %s27 = ssub.s32 %s22, 1
      %s28 = ssub.s32 %s22, 2
      %s35 = sadd.s32 1, %s30
      %p36 = scmp.ge.s32.totalorder %s35, 1
      %s37 = scalar_select %p36, 0, %s35
      %s38 = sadd.s32 1, %s29
      %s39 = scalar_select %p36, %s38, %s29
      %p40 = scmp.ge.s32.totalorder %s39, 2
      %s41 = scalar_select %p40, 0, %s39
      %s42 = ssub.s32 %s29, %s41
      %p43 = scmp.eq.s32.totalorder %s42, 0
      %s45 = sadd.s32 %s44, 1
      %s46 = scalar_select %p43, %s44, %s45
      %p49 = pneg %p43
      %p50 = scmp.eq.s32.totalorder %s22, 1
      %p51 = por %p49, %p50
      %p52 = scmp.ne.s32.totalorder %s44, %s47
      %p53 = scmp.eq.s32.totalorder %s22, 0
      %p54 = por %p52, %p53
      %p55 = scmp.ne.s32.totalorder %s44, %s47
      %p56 = scmp.eq.s32.totalorder %s27, 1
      %p57 = por %p55, %p56
      %p58 = scmp.ne.s32.totalorder %s47, %s48
      %p59 = scmp.eq.s32.totalorder %s27, 0
      %p60 = por %p58, %p59
      %p61 = scmp.ne.s32.totalorder %s47, %s48
      %p62 = scmp.eq.s32.totalorder %s28, 1
      %p63 = por %p61, %p62
      %p65 = scmp.ne.s32.totalorder %s48, %s64
      %p66 = scmp.eq.s32.totalorder %s28, 0
      %p67 = por %p65, %p66
      %s69 = sadd.s32 %s68, 1
      %p72 = scmp.eq.s32.totalorder %s22, 1
      %p73 = scmp.ne.s32.totalorder %s68, %s70
      %p74 = scmp.eq.s32.totalorder %s22, 0
      %p75 = por %p73, %p74
      %p76 = scmp.ne.s32.totalorder %s68, %s70
      %p77 = scmp.eq.s32.totalorder %s27, 1
      %p78 = por %p76, %p77
      %p79 = scmp.ne.s32.totalorder %s70, %s71
      %p80 = scmp.eq.s32.totalorder %s27, 0
      %p81 = por %p79, %p80
      %p82 = scmp.ne.s32.totalorder %s70, %s71
      %p83 = scmp.eq.s32.totalorder %s28, 1
      %p84 = por %p82, %p83
      %p86 = scmp.ne.s32.totalorder %s71, %s85
      %p87 = scmp.eq.s32.totalorder %s28, 0
      %p88 = por %p86, %p87
      %s90 = sadd.s32 %s89, 1
      %p93 = scmp.eq.s32.totalorder %s22, 1
      %p94 = scmp.ne.s32.totalorder %s89, %s91
      %p95 = scmp.eq.s32.totalorder %s22, 0
      %p96 = por %p94, %p95
      %p97 = scmp.ne.s32.totalorder %s89, %s91
      %p98 = scmp.eq.s32.totalorder %s27, 1
      %p99 = por %p97, %p98
      %p100 = scmp.ne.s32.totalorder %s91, %s92
      %p101 = scmp.eq.s32.totalorder %s27, 0
      %p102 = por %p100, %p101
      %p103 = scmp.ne.s32.totalorder %s91, %s92
      %p104 = scmp.eq.s32.totalorder %s28, 1
      %p105 = por %p103, %p104
      %p107 = scmp.ne.s32.totalorder %s92, %s106
      %p108 = scmp.eq.s32.totalorder %s28, 0
      %p109 = por %p107, %p108
      %s111 = sadd.s32 %s110, 1
      %p114 = scmp.eq.s32.totalorder %s22, 1
      %p115 = scmp.ne.s32.totalorder %s110, %s112
      %p116 = scmp.eq.s32.totalorder %s22, 0
      %p117 = por %p115, %p116
      %p118 = scmp.ne.s32.totalorder %s110, %s112
      %p119 = scmp.eq.s32.totalorder %s27, 1
      %p120 = por %p118, %p119
      %p121 = scmp.ne.s32.totalorder %s112, %s113
      %p122 = scmp.eq.s32.totalorder %s27, 0
      %p123 = por %p121, %p122
      %p124 = scmp.ne.s32.totalorder %s112, %s113
      %p125 = scmp.eq.s32.totalorder %s28, 1
      %p126 = por %p124, %p125
      %p128 = scmp.ne.s32.totalorder %s113, %s127
      %p129 = scmp.eq.s32.totalorder %s28, 0
      %p130 = por %p128, %p129
      %s132 = sadd.s32 %s131, 1
      %p135 = scmp.eq.s32.totalorder %s22, 1
      %p136 = scmp.ne.s32.totalorder %s131, %s133
      %p137 = scmp.eq.s32.totalorder %s22, 0
      %p138 = por %p136, %p137
      %p139 = scmp.ne.s32.totalorder %s131, %s133
      %p140 = scmp.eq.s32.totalorder %s27, 1
      %p141 = por %p139, %p140
      %p142 = scmp.ne.s32.totalorder %s133, %s134
      %p143 = scmp.eq.s32.totalorder %s27, 0
      %p144 = por %p142, %p143
      %p145 = scmp.ne.s32.totalorder %s133, %s134
      %p146 = scmp.eq.s32.totalorder %s28, 1
      %p147 = por %p145, %p146
      %p149 = scmp.ne.s32.totalorder %s134, %s148
      %p150 = scmp.eq.s32.totalorder %s28, 0
      %p151 = por %p149, %p150
      %s153 = sadd.s32 %s152, 1
      %p156 = scmp.eq.s32.totalorder %s22, 1
      %p157 = scmp.ne.s32.totalorder %s152, %s154
      %p158 = scmp.eq.s32.totalorder %s22, 0
      %p159 = por %p157, %p158
      %p160 = scmp.ne.s32.totalorder %s152, %s154
      %p161 = scmp.eq.s32.totalorder %s27, 1
      %p162 = por %p160, %p161
      %p163 = scmp.ne.s32.totalorder %s154, %s155
      %p164 = scmp.eq.s32.totalorder %s27, 0
      %p165 = por %p163, %p164
      %p166 = scmp.ne.s32.totalorder %s154, %s155
      %p167 = scmp.eq.s32.totalorder %s28, 1
      %p168 = por %p166, %p167
      %p170 = scmp.ne.s32.totalorder %s155, %s169
      %p171 = scmp.eq.s32.totalorder %s28, 0
      %p172 = por %p170, %p171
      %s173 = ssub.s32 %s29, %s41
      %p174 = scmp.eq.s32.totalorder %s173, 0
      %s176 = sadd.s32 %s175, 1
      %s177 = scalar_select %p174, %s175, %s176
      %p180 = pneg %p174
      %p181 = scmp.eq.s32.totalorder %s22, 1
      %p182 = por %p180, %p181
      %p183 = scmp.ne.s32.totalorder %s175, %s178
      %p184 = scmp.eq.s32.totalorder %s22, 0
      %p185 = por %p183, %p184
      %p186 = scmp.ne.s32.totalorder %s175, %s178
      %p187 = scmp.eq.s32.totalorder %s27, 1
      %p188 = por %p186, %p187
      %p189 = scmp.ne.s32.totalorder %s178, %s179
      %p190 = scmp.eq.s32.totalorder %s27, 0
      %p191 = por %p189, %p190
      %p192 = scmp.ne.s32.totalorder %s178, %s179
      %p193 = scmp.eq.s32.totalorder %s28, 1
      %p194 = por %p192, %p193
      %p196 = scmp.ne.s32.totalorder %s179, %s195
      %p197 = scmp.eq.s32.totalorder %s28, 0
      %p198 = por %p196, %p197
      %s199 = ssub.s32 %s29, %s41
      %p200 = scmp.eq.s32.totalorder %s199, 0
      %s202 = sadd.s32 %s201, 1
      %s203 = scalar_select %p200, %s201, %s202
      %p206 = pneg %p200
      %p207 = scmp.eq.s32.totalorder %s22, 1
      %p208 = por %p206, %p207
      %p209 = scmp.ne.s32.totalorder %s201, %s204
      %p210 = scmp.eq.s32.totalorder %s22, 0
      %p211 = por %p209, %p210
      %p212 = scmp.ne.s32.totalorder %s201, %s204
      %p213 = scmp.eq.s32.totalorder %s27, 1
      %p214 = por %p212, %p213
      %p215 = scmp.ne.s32.totalorder %s204, %s205
      %p216 = scmp.eq.s32.totalorder %s27, 0
      %p217 = por %p215, %p216
      %p218 = scmp.ne.s32.totalorder %s204, %s205
      %p219 = scmp.eq.s32.totalorder %s28, 1
      %p220 = por %p218, %p219
      %p222 = scmp.ne.s32.totalorder %s205, %s221
      %p223 = scmp.eq.s32.totalorder %s28, 0
      %p224 = por %p222, %p223
      %s225 = ssub.s32 %s29, %s41
      %s226 = ssub.s32 %s30, %s37
      %s227 = sor.u32 %s225, %s226
      %p228 = scmp.eq.s32.totalorder %s227, 0
      %s230 = sadd.s32 %s229, 1
      %s231 = scalar_select %p228, %s229, %s230
      %p234 = pneg %p228
      %p235 = scmp.eq.s32.totalorder %s22, 1
      %p236 = por %p234, %p235
      %p237 = scmp.ne.s32.totalorder %s229, %s232
      %p238 = scmp.eq.s32.totalorder %s22, 0
      %p239 = por %p237, %p238
      %p240 = scmp.ne.s32.totalorder %s229, %s232
      %p241 = scmp.eq.s32.totalorder %s27, 1
      %p242 = por %p240, %p241
      %p243 = scmp.ne.s32.totalorder %s232, %s233
      %p244 = scmp.eq.s32.totalorder %s27, 0
      %p245 = por %p243, %p244
      %p246 = scmp.ne.s32.totalorder %s232, %s233
      %p247 = scmp.eq.s32.totalorder %s28, 1
      %p248 = por %p246, %p247
      %p250 = scmp.ne.s32.totalorder %s233, %s249
      %p251 = scmp.eq.s32.totalorder %s28, 0
      %p252 = por %p250, %p251
      %p253 = scmp.le.s32.totalorder 1, %s22
      %p254 = scmp.lt.s32.totalorder %s22, 3
      %p255 = pnand %p253, %p254
      %p256 = pneg %p255
      // Predicated region
      $region9: #{tpu_custom_call.1} parent=5 // pred_check
        _
      $region10: #{tpu_custom_call.1} parent=5 // pred_check_branch
        %258 = sbr.rel (%p255) target = $region12
      $region11: #{tpu_custom_call.1} parent=5 // pred_region
        %s259 = ssub.s32 %s22, 1
        // Predicated region
        $region13: #{tpu_custom_call.1} parent=11 // pred_check
          %p260 = pneg %p60
        $region14: #{tpu_custom_call.1} parent=11 // pred_check_branch
          %262 = sbr.rel (%p260) target = $region16
        $region15: #{tpu_custom_call.1} parent=11 // pred_region
          %s264 = ssub.s32 2048, 2048
          %265 = vsyncadd [#allocation6], %s264
          %s266 = smul.addr %s31, 16
          %s267 = smul.addr %s266, 128
          %s268 = scalar_lea.hbm %s0, %s267
          %s269 = sshll.u32 [#allocation5], 4
          %s270 = int_to_ptr.vmem [resolvable:$true] %s269
          %275 = dma.hbm_to_vmem [thread:$0]  %s268, 2048, %s270, [#allocation6], 128, 128, 8
        $region16: #{tpu_custom_call.1} parent=11 // pred_fallthru
          _
        // Predicated region
        $region17: #{tpu_custom_call.1} parent=11 // pred_check
          %p276 = pneg %p81
        $region18: #{tpu_custom_call.1} parent=11 // pred_check_branch
          %278 = sbr.rel (%p276) target = $region20
        $region19: #{tpu_custom_call.1} parent=11 // pred_region
          %s280 = ssub.s32 2048, 2048
          %281 = vsyncadd [#allocation9], %s280
          %s282 = sshll.u32 [#allocation8], 4
          %s283 = int_to_ptr.vmem [resolvable:$true] %s282
          %288 = dma.hbm_to_vmem [thread:$0]  %s1, 2048, %s283, [#allocation9], 128, 128, 8
        $region20: #{tpu_custom_call.1} parent=11 // pred_fallthru
          _
        // Predicated region
        $region21: #{tpu_custom_call.1} parent=11 // pred_check
          %p289 = pneg %p102
        $region22: #{tpu_custom_call.1} parent=11 // pred_check_branch
          %291 = sbr.rel (%p289) target = $region24
        $region23: #{tpu_custom_call.1} parent=11 // pred_region
          %s293 = ssub.s32 64, 64
          %294 = vsyncadd [#allocation9], %s293
          %s295 = sshll.u32 [#allocation10], 4
          %s296 = int_to_ptr.vmem [resolvable:$true] %s295
          %301 = dma.hbm_to_vmem [thread:$0]  %s2, 64, %s296, [#allocation9], 16, 16, 1
        $region24: #{tpu_custom_call.1} parent=11 // pred_fallthru
          _
        // Predicated region
        $region25: #{tpu_custom_call.1} parent=11 // pred_check
          %p302 = pneg %p123
        $region26: #{tpu_custom_call.1} parent=11 // pred_check_branch
          %304 = sbr.rel (%p302) target = $region28
        $region27: #{tpu_custom_call.1} parent=11 // pred_region
          %s306 = ssub.s32 2048, 2048
          %307 = vsyncadd [#allocation12], %s306
          %s308 = sshll.u32 [#allocation11], 4
          %s309 = int_to_ptr.vmem [resolvable:$true] %s308
          %314 = dma.hbm_to_vmem [thread:$0]  %s3, 2048, %s309, [#allocation12], 128, 128, 8
        $region28: #{tpu_custom_call.1} parent=11 // pred_fallthru
          _
        // Predicated region
        $region29: #{tpu_custom_call.1} parent=11 // pred_check
          %p315 = pneg %p144
        $region30: #{tpu_custom_call.1} parent=11 // pred_check_branch
          %317 = sbr.rel (%p315) target = $region32
        $region31: #{tpu_custom_call.1} parent=11 // pred_region
          %s319 = ssub.s32 2048, 2048
          %320 = vsyncadd [#allocation12], %s319
          %s321 = sshll.u32 [#allocation13], 4
          %s322 = int_to_ptr.vmem [resolvable:$true] %s321
          %327 = dma.hbm_to_vmem [thread:$0]  %s4, 2048, %s322, [#allocation12], 128, 128, 8
        $region32: #{tpu_custom_call.1} parent=11 // pred_fallthru
          _
        // Predicated region
        $region33: #{tpu_custom_call.1} parent=11 // pred_check
          %p328 = pneg %p165
        $region34: #{tpu_custom_call.1} parent=11 // pred_check_branch
          %330 = sbr.rel (%p328) target = $region36
        $region35: #{tpu_custom_call.1} parent=11 // pred_region
          %s332 = ssub.s32 2048, 2048
          %333 = vsyncadd [#allocation15], %s332
          %s334 = sshll.u32 [#allocation14], 4
          %s335 = int_to_ptr.vmem [resolvable:$true] %s334
          %340 = dma.hbm_to_vmem [thread:$0]  %s5, 2048, %s335, [#allocation15], 128, 128, 8
        $region36: #{tpu_custom_call.1} parent=11 // pred_fallthru
          _
        // Predicated region
        $region37: #{tpu_custom_call.1} parent=11 // pred_check
          %p341 = pneg %p191
        $region38: #{tpu_custom_call.1} parent=11 // pred_check_branch
          %343 = sbr.rel (%p341) target = $region40
        $region39: #{tpu_custom_call.1} parent=11 // pred_region
          %s345 = ssub.s32 2048, 2048
          %346 = vsyncadd [#allocation15], %s345
          %s347 = smul.addr %s31, 16
          %s348 = smul.addr %s347, 128
          %s349 = scalar_lea.hbm %s6, %s348
          %s350 = sshll.u32 [#allocation16], 4
          %s351 = int_to_ptr.vmem [resolvable:$true] %s350
          %356 = dma.hbm_to_vmem [thread:$0]  %s349, 2048, %s351, [#allocation15], 128, 128, 8
        $region40: #{tpu_custom_call.1} parent=11 // pred_fallthru
          _
        // Predicated region
        $region41: #{tpu_custom_call.1} parent=11 // pred_check
          %p357 = pneg %p217
        $region42: #{tpu_custom_call.1} parent=11 // pred_check_branch
          %359 = sbr.rel (%p357) target = $region44
        $region43: #{tpu_custom_call.1} parent=11 // pred_region
          %s361 = ssub.s32 16, 16
          %362 = vsyncadd [#allocation18], %s361
          %s363 = smul.addr %s31, 16
          %s364 = scalar_lea.hbm %s7, %s363
          %s366 = sshll.u32 [#allocation17], 4
          %s367 = int_to_ptr.vmem [resolvable:$true] %s366
          %369 = dma.hbm_to_vmem [thread:$0]  %s364, 16, %s367, [#allocation18]
        $region44: #{tpu_custom_call.1} parent=11 // pred_fallthru
          _
      $region12: #{tpu_custom_call.1} parent=5 // pred_fallthru
        _
      %p370 = scmp.lt.s32.totalorder %s22, 2
      // Predicated region
      $region45: #{tpu_custom_call.1} parent=5 // pred_check
        %p371 = pneg %p370
      $region46: #{tpu_custom_call.1} parent=5 // pred_check_branch
        %373 = sbr.rel (%p371) target = $region48
      $region47: #{tpu_custom_call.1} parent=5 // pred_region
        _
      $region48: #{tpu_custom_call.1} parent=5 // pred_fallthru
        _
      %p374 = scmp.le.s32.totalorder 1, %s22
      %p375 = scmp.lt.s32.totalorder %s22, 3
      %p376 = pnand %p374, %p375
      %p377 = pneg %p376
      // Predicated region
      $region49: #{tpu_custom_call.1} parent=5 // pred_check
        _
      $region50: #{tpu_custom_call.1} parent=5 // pred_check_branch
        %379 = sbr.rel (%p376) target = $region52
      $region51: #{tpu_custom_call.1} parent=5 // pred_region
        %s380 = ssub.s32 %s22, 1
        // Predicated region
        $region53: #{tpu_custom_call.1} parent=51 // pred_check
          %p381 = pneg %p60
        $region54: #{tpu_custom_call.1} parent=51 // pred_check_branch
          %383 = sbr.rel (%p381) target = $region56
        $region55: #{tpu_custom_call.1} parent=51 // pred_region
          %384 = dma.done [#allocation6], 2048
        $region56: #{tpu_custom_call.1} parent=51 // pred_fallthru
          _
        // Predicated region
        $region57: #{tpu_custom_call.1} parent=51 // pred_check
          %p385 = pneg %p81
        $region58: #{tpu_custom_call.1} parent=51 // pred_check_branch
          %387 = sbr.rel (%p385) target = $region60
        $region59: #{tpu_custom_call.1} parent=51 // pred_region
          %388 = dma.done [#allocation9], 2048
        $region60: #{tpu_custom_call.1} parent=51 // pred_fallthru
          _
        // Predicated region
        $region61: #{tpu_custom_call.1} parent=51 // pred_check
          %p389 = pneg %p102
        $region62: #{tpu_custom_call.1} parent=51 // pred_check_branch
          %391 = sbr.rel (%p389) target = $region64
        $region63: #{tpu_custom_call.1} parent=51 // pred_region
          %392 = dma.done [#allocation9], 64
        $region64: #{tpu_custom_call.1} parent=51 // pred_fallthru
          _
        // Predicated region
        $region65: #{tpu_custom_call.1} parent=51 // pred_check
          %p393 = pneg %p123
        $region66: #{tpu_custom_call.1} parent=51 // pred_check_branch
          %395 = sbr.rel (%p393) target = $region68
        $region67: #{tpu_custom_call.1} parent=51 // pred_region
          %396 = dma.done [#allocation12], 2048
        $region68: #{tpu_custom_call.1} parent=51 // pred_fallthru
          _
        // Predicated region
        $region69: #{tpu_custom_call.1} parent=51 // pred_check
          %p397 = pneg %p144
        $region70: #{tpu_custom_call.1} parent=51 // pred_check_branch
          %399 = sbr.rel (%p397) target = $region72
        $region71: #{tpu_custom_call.1} parent=51 // pred_region
          %400 = dma.done [#allocation12], 2048
        $region72: #{tpu_custom_call.1} parent=51 // pred_fallthru
          _
        // Predicated region
        $region73: #{tpu_custom_call.1} parent=51 // pred_check
          %p401 = pneg %p165
        $region74: #{tpu_custom_call.1} parent=51 // pred_check_branch
          %403 = sbr.rel (%p401) target = $region76
        $region75: #{tpu_custom_call.1} parent=51 // pred_region
          %404 = dma.done [#allocation15], 2048
        $region76: #{tpu_custom_call.1} parent=51 // pred_fallthru
          _
        // Predicated region
        $region77: #{tpu_custom_call.1} parent=51 // pred_check
          %p405 = pneg %p191
        $region78: #{tpu_custom_call.1} parent=51 // pred_check_branch
          %407 = sbr.rel (%p405) target = $region80
        $region79: #{tpu_custom_call.1} parent=51 // pred_region
          %408 = dma.done [#allocation15], 2048
        $region80: #{tpu_custom_call.1} parent=51 // pred_fallthru
          _
        // Predicated region
        $region81: #{tpu_custom_call.1} parent=51 // pred_check
          %p409 = pneg %p217
        $region82: #{tpu_custom_call.1} parent=51 // pred_check_branch
          %411 = sbr.rel (%p409) target = $region84
        $region83: #{tpu_custom_call.1} parent=51 // pred_region
          %412 = dma.done [#allocation18], 16
        $region84: #{tpu_custom_call.1} parent=51 // pred_fallthru
          _
        %p413 = pneg %p60
        %p414 = pneg %p57
        %p415 = pneg %p81
        %p416 = pneg %p78
        %p417 = pneg %p102
        %p418 = pneg %p99
        %p419 = pneg %p123
        %p420 = pneg %p120
        %p421 = pneg %p144
        %p422 = pneg %p141
        %p423 = pneg %p165
        %p424 = pneg %p162
        %p425 = pneg %p191
        %p426 = pneg %p188
        %p427 = pneg %p217
        %p428 = pneg %p214
        %p429 = pneg %p245
        %p430 = pneg %p242
        %s431 = sand.u32 %s232, 1
        %s432 = scalar_lea.sflag [#allocation7], %s431
        %s433 = sand.u32 %s232, 1
        %s434 = smul.addr %s433, 512
        %s435 = scalar_lea.vmem [#allocation19], %s434
        %s436 = smul.u32 16, %s32
        %p437 = scmp.eq.s32.totalorder %s32, 0
        // Predicated region
        $region85: #{tpu_custom_call.1} parent=51 // pred_check
          %p438 = pneg %p437
        $region86: #{tpu_custom_call.1} parent=51 // pred_check_branch
          %440 = sbr.rel (%p438) target = $region88
        $region87: #{tpu_custom_call.1} parent=51 // pred_region
          %v441 = vld [vmem:[#allocation5] sm:$0xff]
          %v442 = vld [vmem:[#allocation5 + $0x8] sm:$0xff]
          %v443 = vld [vmem:[#allocation5 + $0x10] sm:$0xff]
          %v444 = vld [vmem:[#allocation5 + $0x18] sm:$0xff]
          %v445 = vld [vmem:[#allocation5 + $0x20] sm:$0xff]
          %v446 = vld [vmem:[#allocation5 + $0x28] sm:$0xff]
          %v447 = vld [vmem:[#allocation5 + $0x30] sm:$0xff]
          %v448 = vld [vmem:[#allocation5 + $0x38] sm:$0xff]
          %v449 = vld [vmem:[#allocation5 + $0x40] sm:$0xff]
          %v450 = vld [vmem:[#allocation5 + $0x48] sm:$0xff]
          %v451 = vld [vmem:[#allocation5 + $0x50] sm:$0xff]
          %v452 = vld [vmem:[#allocation5 + $0x58] sm:$0xff]
          %v453 = vld [vmem:[#allocation5 + $0x60] sm:$0xff]
          %v454 = vld [vmem:[#allocation5 + $0x68] sm:$0xff]
          %v455 = vld [vmem:[#allocation5 + $0x70] sm:$0xff]
          %v456 = vld [vmem:[#allocation5 + $0x78] sm:$0xff]
          %v457 = vld [vmem:[#allocation16] sm:$0xff]
          %v458 = vld [vmem:[#allocation16 + $0x8] sm:$0xff]
          %v459 = vld [vmem:[#allocation16 + $0x10] sm:$0xff]
          %v460 = vld [vmem:[#allocation16 + $0x18] sm:$0xff]
          %v461 = vld [vmem:[#allocation16 + $0x20] sm:$0xff]
          %v462 = vld [vmem:[#allocation16 + $0x28] sm:$0xff]
          %v463 = vld [vmem:[#allocation16 + $0x30] sm:$0xff]
          %v464 = vld [vmem:[#allocation16 + $0x38] sm:$0xff]
          %v465 = vld [vmem:[#allocation16 + $0x40] sm:$0xff]
          %v466 = vld [vmem:[#allocation16 + $0x48] sm:$0xff]
          %v467 = vld [vmem:[#allocation16 + $0x50] sm:$0xff]
          %v468 = vld [vmem:[#allocation16 + $0x58] sm:$0xff]
          %v469 = vld [vmem:[#allocation16 + $0x60] sm:$0xff]
          %v470 = vld [vmem:[#allocation16 + $0x68] sm:$0xff]
          %v471 = vld [vmem:[#allocation16 + $0x70] sm:$0xff]
          %v472 = vld [vmem:[#allocation16 + $0x78] sm:$0xff]
          %v473 = vld [vmem:[#allocation11] sm:$0xff]
          %v474 = vld [vmem:[#allocation11 + $0x8] sm:$0xff]
          %v475 = vld [vmem:[#allocation11 + $0x10] sm:$0xff]
          %v476 = vld [vmem:[#allocation11 + $0x18] sm:$0xff]
          %v477 = vld [vmem:[#allocation11 + $0x20] sm:$0xff]
          %v478 = vld [vmem:[#allocation11 + $0x28] sm:$0xff]
          %v479 = vld [vmem:[#allocation11 + $0x30] sm:$0xff]
          %v480 = vld [vmem:[#allocation11 + $0x38] sm:$0xff]
          %v481 = vld [vmem:[#allocation11 + $0x40] sm:$0xff]
          %v482 = vld [vmem:[#allocation11 + $0x48] sm:$0xff]
          %v483 = vld [vmem:[#allocation11 + $0x50] sm:$0xff]
          %v484 = vld [vmem:[#allocation11 + $0x58] sm:$0xff]
          %v485 = vld [vmem:[#allocation11 + $0x60] sm:$0xff]
          %v486 = vld [vmem:[#allocation11 + $0x68] sm:$0xff]
          %v487 = vld [vmem:[#allocation11 + $0x70] sm:$0xff]
          %v488 = vld [vmem:[#allocation11 + $0x78] sm:$0xff]
          %v489 = vld [vmem:[#allocation13] sm:$0xff]
          %v490 = vld [vmem:[#allocation13 + $0x8] sm:$0xff]
          %v491 = vld [vmem:[#allocation13 + $0x10] sm:$0xff]
          %v492 = vld [vmem:[#allocation13 + $0x18] sm:$0xff]
          %v493 = vld [vmem:[#allocation13 + $0x20] sm:$0xff]
          %v494 = vld [vmem:[#allocation13 + $0x28] sm:$0xff]
          %v495 = vld [vmem:[#allocation13 + $0x30] sm:$0xff]
          %v496 = vld [vmem:[#allocation13 + $0x38] sm:$0xff]
          %v497 = vld [vmem:[#allocation13 + $0x40] sm:$0xff]
          %v498 = vld [vmem:[#allocation13 + $0x48] sm:$0xff]
          %v499 = vld [vmem:[#allocation13 + $0x50] sm:$0xff]
          %v500 = vld [vmem:[#allocation13 + $0x58] sm:$0xff]
          %v501 = vld [vmem:[#allocation13 + $0x60] sm:$0xff]
          %v502 = vld [vmem:[#allocation13 + $0x68] sm:$0xff]
          %v503 = vld [vmem:[#allocation13 + $0x70] sm:$0xff]
          %v504 = vld [vmem:[#allocation13 + $0x78] sm:$0xff]
          %v505 = vld [vmem:[#allocation14] sm:$0xff]
          %v506 = vld [vmem:[#allocation14 + $0x8] sm:$0xff]
          %v507 = vld [vmem:[#allocation14 + $0x10] sm:$0xff]
          %v508 = vld [vmem:[#allocation14 + $0x18] sm:$0xff]
          %v509 = vld [vmem:[#allocation14 + $0x20] sm:$0xff]
          %v510 = vld [vmem:[#allocation14 + $0x28] sm:$0xff]
          %v511 = vld [vmem:[#allocation14 + $0x30] sm:$0xff]
          %v512 = vld [vmem:[#allocation14 + $0x38] sm:$0xff]
          %v513 = vld [vmem:[#allocation14 + $0x40] sm:$0xff]
          %v514 = vld [vmem:[#allocation14 + $0x48] sm:$0xff]
          %v515 = vld [vmem:[#allocation14 + $0x50] sm:$0xff]
          %v516 = vld [vmem:[#allocation14 + $0x58] sm:$0xff]
          %v517 = vld [vmem:[#allocation14 + $0x60] sm:$0xff]
          %v518 = vld [vmem:[#allocation14 + $0x68] sm:$0xff]
          %v519 = vld [vmem:[#allocation14 + $0x70] sm:$0xff]
          %v520 = vld [vmem:[#allocation14 + $0x78] sm:$0xff]
          %v521 = vld [vmem:[#allocation8] sm:$0xff]
          %v522 = vld [vmem:[#allocation8 + $0x8] sm:$0xff]
          %v523 = vld [vmem:[#allocation8 + $0x10] sm:$0xff]
          %v524 = vld [vmem:[#allocation8 + $0x18] sm:$0xff]
          %v525 = vld [vmem:[#allocation10] sm:$0x1]
          %v527 = vlaneseq
          %v528 = vshrl.u32 %v527, 7
          %v529 = vsub.s32 0, %v528
          %v530 = vrot.slane %v525, %v529
          %vm532 = vcmask 261120
          %v534 = vsel %vm532, %v441, 0
          %v537 = vsel %vm532, %v442, 0
          %v540 = vsel %vm532, %v443, 0
          %v543 = vsel %vm532, %v444, 0
          %v546 = vsel %vm532, %v445, 0
          %v549 = vsel %vm532, %v446, 0
          %v552 = vsel %vm532, %v447, 0
          %v555 = vsel %vm532, %v448, 0
          %v558 = vsel %vm532, %v449, 0
          %v561 = vsel %vm532, %v450, 0
          %v564 = vsel %vm532, %v451, 0
          %v567 = vsel %vm532, %v452, 0
          %v570 = vsel %vm532, %v453, 0
          %v573 = vsel %vm532, %v454, 0
          %v576 = vsel %vm532, %v455, 0
          %v579 = vsel %vm532, %v456, 0
          %581 = vmatprep.subr.mxu0 0.0
          %582 = vmatpush1.msra.mxu0 %v521
          %583 = vmatprep.subr.mxu0 0.0
          %584 = vmatpush1.msra.mxu0 %v522
          %585 = vmatprep.subr.mxu0 0.0
          %586 = vmatpush1.msra.mxu0 %v523
          %587 = vmatprep.subr.mxu0 0.0
          %588 = vmatpush1.msra.mxu0 %v524
          %589 = vmatprep.subr.mxu0 0.0
          %590 = vmatpush1.msra.mxu0 0.0
          %591 = vmatprep.subr.mxu0 0.0
          %592 = vmatpush1.msra.mxu0 0.0
          %593 = vmatprep.subr.mxu0 0.0
          %594 = vmatpush1.msra.mxu0 0.0
          %595 = vmatprep.subr.mxu0 0.0
          %596 = vmatpush1.msra.mxu0 0.0
          %597 = vmatprep.subr.mxu0 0.0
          %598 = vmatpush1.msra.mxu0 0.0
          %599 = vmatprep.subr.mxu0 0.0
          %600 = vmatpush1.msra.mxu0 0.0
          %601 = vmatprep.subr.mxu0 0.0
          %602 = vmatpush1.msra.mxu0 0.0
          %603 = vmatprep.subr.mxu0 0.0
          %604 = vmatpush1.msra.mxu0 0.0
          %605 = vmatprep.subr.mxu0 0.0
          %606 = vmatpush1.msra.mxu0 0.0
          %607 = vmatprep.subr.mxu0 0.0
          %608 = vmatpush1.msra.mxu0 0.0
          %609 = vmatprep.subr.mxu0 0.0
          %610 = vmatpush1.msra.mxu0 0.0
          %611 = vmatprep.subr.mxu0 0.0
          %612 = vmatpush1.msra.mxu0 0.0
          %613 = vmatprep.subr.mxu0 0.0
          %614 = vmatpush1.msra.mxu0 0.0
          %615 = vmatprep.subr.mxu0 0.0
          %616 = vmatpush1.msra.mxu0 0.0
          %617 = vmatprep.subr.mxu0 0.0
          %618 = vmatpush1.msra.mxu0 0.0
          %619 = vmatprep.subr.mxu0 0.0
          %620 = vmatpush1.msra.mxu0 0.0
          %621 = vmatprep.subr.mxu0 0.0
          %622 = vmatpush1.msra.mxu0 0.0
          %623 = vmatprep.subr.mxu0 0.0
          %624 = vmatpush1.msra.mxu0 0.0
          %625 = vmatprep.subr.mxu0 0.0
          %626 = vmatpush1.msra.mxu0 0.0
          %627 = vmatprep.subr.mxu0 0.0
          %628 = vmatpush1.msra.mxu0 0.0
          %629 = vmatprep.subr.mxu0 0.0
          %630 = vmatpush1.msra.mxu0 0.0
          %631 = vmatprep.subr.mxu0 0.0
          %632 = vmatpush1.msra.mxu0 0.0
          %633 = vmatprep.subr.mxu0 0.0
          %634 = vmatpush1.msra.mxu0 0.0
          %635 = vmatprep.subr.mxu0 0.0
          %636 = vmatpush1.msra.mxu0 0.0
          %637 = vmatprep.subr.mxu0 0.0
          %638 = vmatpush1.msra.mxu0 0.0
          %639 = vmatprep.subr.mxu0 0.0
          %640 = vmatpush1.msra.mxu0 0.0
          %641 = vmatprep.subr.mxu0 0.0
          %642 = vmatpush1.msra.mxu0 0.0
          %643 = vmatprep.subr.mxu0 0.0
          %644 = vmatpush1.msra.mxu0 0.0
          %645 = vmatprep.mubr.f32.mxu0 0.0
          %646 = vmatmul.mubr.f32.gmra.mrb[0].mxu0 %v534
          %v647 = vpop.f32.mrb[0].mxu0
          %v648 = vadd.f32 %v530, %v647
          %v649 = vpop.f32.mrb[0].mxu0
          %650 = vmatprep.mubr.f32.mxu0 0.0
          %651 = vmatmul.mubr.f32.gmra.mrb[0].mxu0 %v537
          %v652 = vpop.f32.mrb[0].mxu0
          %v653 = vadd.f32 %v530, %v652
          %v654 = vpop.f32.mrb[0].mxu0
          %655 = vmatprep.mubr.f32.mxu0 0.0
          %656 = vmatmul.mubr.f32.gmra.mrb[0].mxu0 %v540
          %v657 = vpop.f32.mrb[0].mxu0
          %v658 = vadd.f32 %v530, %v657
          %v659 = vpop.f32.mrb[0].mxu0
          %660 = vmatprep.mubr.f32.mxu0 0.0
          %661 = vmatmul.mubr.f32.gmra.mrb[0].mxu0 %v543
          %v662 = vpop.f32.mrb[0].mxu0
          %v663 = vadd.f32 %v530, %v662
          %v664 = vpop.f32.mrb[0].mxu0
          %665 = vmatprep.mubr.f32.mxu0 0.0
          %666 = vmatmul.mubr.f32.gmra.mrb[0].mxu0 %v546
          %v667 = vpop.f32.mrb[0].mxu0
          %v668 = vadd.f32 %v530, %v667
          %v669 = vpop.f32.mrb[0].mxu0
          %670 = vmatprep.mubr.f32.mxu0 0.0
          %671 = vmatmul.mubr.f32.gmra.mrb[0].mxu0 %v549
          %v672 = vpop.f32.mrb[0].mxu0
          %v673 = vadd.f32 %v530, %v672
          %v674 = vpop.f32.mrb[0].mxu0
          %675 = vmatprep.mubr.f32.mxu0 0.0
          %676 = vmatmul.mubr.f32.gmra.mrb[0].mxu0 %v552
          %v677 = vpop.f32.mrb[0].mxu0
          %v678 = vadd.f32 %v530, %v677
          %v679 = vpop.f32.mrb[0].mxu0
          %680 = vmatprep.mubr.f32.mxu0 0.0
          %681 = vmatmul.mubr.f32.gmra.mrb[0].mxu0 %v555
          %v682 = vpop.f32.mrb[0].mxu0
          %v683 = vadd.f32 %v530, %v682
          %v684 = vpop.f32.mrb[0].mxu0
          %685 = vmatprep.mubr.f32.mxu0 0.0
          %686 = vmatmul.mubr.f32.gmra.mrb[0].mxu0 %v558
          %v687 = vpop.f32.mrb[0].mxu0
          %v688 = vadd.f32 %v530, %v687
          %v689 = vpop.f32.mrb[0].mxu0
          %690 = vmatprep.mubr.f32.mxu0 0.0
          %691 = vmatmul.mubr.f32.gmra.mrb[0].mxu0 %v561
          %v692 = vpop.f32.mrb[0].mxu0
          %v693 = vadd.f32 %v530, %v692
          %v694 = vpop.f32.mrb[0].mxu0
          %695 = vmatprep.mubr.f32.mxu0 0.0
          %696 = vmatmul.mubr.f32.gmra.mrb[0].mxu0 %v564
          %v697 = vpop.f32.mrb[0].mxu0
          %v698 = vadd.f32 %v530, %v697
          %v699 = vpop.f32.mrb[0].mxu0
          %700 = vmatprep.mubr.f32.mxu0 0.0
          %701 = vmatmul.mubr.f32.gmra.mrb[0].mxu0 %v567
          %v702 = vpop.f32.mrb[0].mxu0
          %v703 = vadd.f32 %v530, %v702
          %v704 = vpop.f32.mrb[0].mxu0
          %705 = vmatprep.mubr.f32.mxu0 0.0
          %706 = vmatmul.mubr.f32.gmra.mrb[0].mxu0 %v570
          %v707 = vpop.f32.mrb[0].mxu0
          %v708 = vadd.f32 %v530, %v707
          %v709 = vpop.f32.mrb[0].mxu0
          %710 = vmatprep.mubr.f32.mxu0 0.0
          %711 = vmatmul.mubr.f32.gmra.mrb[0].mxu0 %v573
          %v712 = vpop.f32.mrb[0].mxu0
          %v713 = vadd.f32 %v530, %v712
          %v714 = vpop.f32.mrb[0].mxu0
          %715 = vmatprep.mubr.f32.mxu0 0.0
          %716 = vmatmul.mubr.f32.gmra.mrb[0].mxu0 %v576
          %v717 = vpop.f32.mrb[0].mxu0
          %v718 = vadd.f32 %v530, %v717
          %v719 = vpop.f32.mrb[0].mxu0
          %720 = vmatprep.mubr.f32.mxu0 0.0
          %721 = vmatmul.mubr.f32.gmra.mrb[0].mxu0 %v579
          %v722 = vpop.f32.mrb[0].mxu0
          %v723 = vadd.f32 %v530, %v722
          %v724 = vpop.f32.mrb[0].mxu0
          %725 = vdwg.mxu0
          %726 = vrot.lane.b32.xlu0 %v648, 127
          %v727 = vpop.permute.xlu0 %726
          %728 = vrot.lane.b32.xlu0 %v653, 127
          %v729 = vpop.permute.xlu0 %728
          %730 = vrot.lane.b32.xlu0 %v658, 127
          %v731 = vpop.permute.xlu0 %730
          %732 = vrot.lane.b32.xlu0 %v663, 127
          %v733 = vpop.permute.xlu0 %732
          %734 = vrot.lane.b32.xlu0 %v668, 127
          %v735 = vpop.permute.xlu0 %734
          %736 = vrot.lane.b32.xlu0 %v673, 127
          %v737 = vpop.permute.xlu0 %736
          %738 = vrot.lane.b32.xlu0 %v678, 127
          %v739 = vpop.permute.xlu0 %738
          %740 = vrot.lane.b32.xlu0 %v683, 127
          %v741 = vpop.permute.xlu0 %740
          %742 = vrot.lane.b32.xlu0 %v688, 127
          %v743 = vpop.permute.xlu0 %742
          %744 = vrot.lane.b32.xlu0 %v693, 127
          %v745 = vpop.permute.xlu0 %744
          %746 = vrot.lane.b32.xlu0 %v698, 127
          %v747 = vpop.permute.xlu0 %746
          %748 = vrot.lane.b32.xlu0 %v703, 127
          %v749 = vpop.permute.xlu0 %748
          %750 = vrot.lane.b32.xlu0 %v708, 127
          %v751 = vpop.permute.xlu0 %750
          %752 = vrot.lane.b32.xlu0 %v713, 127
          %v753 = vpop.permute.xlu0 %752
          %754 = vrot.lane.b32.xlu0 %v718, 127
          %v755 = vpop.permute.xlu0 %754
          %756 = vrot.lane.b32.xlu0 %v723, 127
          %v757 = vpop.permute.xlu0 %756
          %758 = vrot.lane.b32.xlu0 %v648, 1
          %v759 = vpop.permute.xlu0 %758
          %760 = vrot.lane.b32.xlu0 %v653, 1
          %v761 = vpop.permute.xlu0 %760
          %762 = vrot.lane.b32.xlu0 %v658, 1
          %v763 = vpop.permute.xlu0 %762
          %764 = vrot.lane.b32.xlu0 %v663, 1
          %v765 = vpop.permute.xlu0 %764
          %766 = vrot.lane.b32.xlu0 %v668, 1
          %v767 = vpop.permute.xlu0 %766
          %768 = vrot.lane.b32.xlu0 %v673, 1
          %v769 = vpop.permute.xlu0 %768
          %770 = vrot.lane.b32.xlu0 %v678, 1
          %v771 = vpop.permute.xlu0 %770
          %772 = vrot.lane.b32.xlu0 %v683, 1
          %v773 = vpop.permute.xlu0 %772
          %774 = vrot.lane.b32.xlu0 %v688, 1
          %v775 = vpop.permute.xlu0 %774
          %776 = vrot.lane.b32.xlu0 %v693, 1
          %v777 = vpop.permute.xlu0 %776
          %778 = vrot.lane.b32.xlu0 %v698, 1
          %v779 = vpop.permute.xlu0 %778
          %780 = vrot.lane.b32.xlu0 %v703, 1
          %v781 = vpop.permute.xlu0 %780
          %782 = vrot.lane.b32.xlu0 %v708, 1
          %v783 = vpop.permute.xlu0 %782
          %784 = vrot.lane.b32.xlu0 %v713, 1
          %v785 = vpop.permute.xlu0 %784
          %786 = vrot.lane.b32.xlu0 %v718, 1
          %v787 = vpop.permute.xlu0 %786
          %788 = vrot.lane.b32.xlu0 %v723, 1
          %v789 = vpop.permute.xlu0 %788
          %v790 = vmul.f32 %v648, %v473
          %v791 = vmul.f32 %v653, %v474
          %v792 = vmul.f32 %v658, %v475
          %v793 = vmul.f32 %v663, %v476
          %v794 = vmul.f32 %v668, %v477
          %v795 = vmul.f32 %v673, %v478
          %v796 = vmul.f32 %v678, %v479
          %v797 = vmul.f32 %v683, %v480
          %v798 = vmul.f32 %v688, %v481
          %v799 = vmul.f32 %v693, %v482
          %v800 = vmul.f32 %v698, %v483
          %v801 = vmul.f32 %v703, %v484
          %v802 = vmul.f32 %v708, %v485
          %v803 = vmul.f32 %v713, %v486
          %v804 = vmul.f32 %v718, %v487
          %v805 = vmul.f32 %v723, %v488
          %v806 = vmul.f32 %v727, %v489
          %v807 = vmul.f32 %v729, %v490
          %v808 = vmul.f32 %v731, %v491
          %v809 = vmul.f32 %v733, %v492
          %v810 = vmul.f32 %v735, %v493
          %v811 = vmul.f32 %v737, %v494
          %v812 = vmul.f32 %v739, %v495
          %v813 = vmul.f32 %v741, %v496
          %v814 = vmul.f32 %v743, %v497
          %v815 = vmul.f32 %v745, %v498
          %v816 = vmul.f32 %v747, %v499
          %v817 = vmul.f32 %v749, %v500
          %v818 = vmul.f32 %v751, %v501
          %v819 = vmul.f32 %v753, %v502
          %v820 = vmul.f32 %v755, %v503
          %v821 = vmul.f32 %v757, %v504
          %v822 = vadd.f32 %v790, %v806
          %v823 = vadd.f32 %v791, %v807
          %v824 = vadd.f32 %v792, %v808
          %v825 = vadd.f32 %v793, %v809
          %v826 = vadd.f32 %v794, %v810
          %v827 = vadd.f32 %v795, %v811
          %v828 = vadd.f32 %v796, %v812
          %v829 = vadd.f32 %v797, %v813
          %v830 = vadd.f32 %v798, %v814
          %v831 = vadd.f32 %v799, %v815
          %v832 = vadd.f32 %v800, %v816
          %v833 = vadd.f32 %v801, %v817
          %v834 = vadd.f32 %v802, %v818
          %v835 = vadd.f32 %v803, %v819
          %v836 = vadd.f32 %v804, %v820
          %v837 = vadd.f32 %v805, %v821
          %v838 = vmul.f32 %v759, %v505
          %v839 = vmul.f32 %v761, %v506
          %v840 = vmul.f32 %v763, %v507
          %v841 = vmul.f32 %v765, %v508
          %v842 = vmul.f32 %v767, %v509
          %v843 = vmul.f32 %v769, %v510
          %v844 = vmul.f32 %v771, %v511
          %v845 = vmul.f32 %v773, %v512
          %v846 = vmul.f32 %v775, %v513
          %v847 = vmul.f32 %v777, %v514
          %v848 = vmul.f32 %v779, %v515
          %v849 = vmul.f32 %v781, %v516
          %v850 = vmul.f32 %v783, %v517
          %v851 = vmul.f32 %v785, %v518
          %v852 = vmul.f32 %v787, %v519
          %v853 = vmul.f32 %v789, %v520
          %v854 = vadd.f32 %v822, %v838
          %v855 = vadd.f32 %v823, %v839
          %v856 = vadd.f32 %v824, %v840
          %v857 = vadd.f32 %v825, %v841
          %v858 = vadd.f32 %v826, %v842
          %v859 = vadd.f32 %v827, %v843
          %v860 = vadd.f32 %v828, %v844
          %v861 = vadd.f32 %v829, %v845
          %v862 = vadd.f32 %v830, %v846
          %v863 = vadd.f32 %v831, %v847
          %v864 = vadd.f32 %v832, %v848
          %v865 = vadd.f32 %v833, %v849
          %v866 = vadd.f32 %v834, %v850
          %v867 = vadd.f32 %v835, %v851
          %v868 = vadd.f32 %v836, %v852
          %v869 = vadd.f32 %v837, %v853
          %vm870 = vcmask 523264
          %871 = vst.msk [vmem:[#allocation2] sm:$0xff] %vm870, %v854
          %872 = vst.msk [vmem:[#allocation2 + $0x8] sm:$0xff] %vm870, %v855
          %873 = vst.msk [vmem:[#allocation2 + $0x10] sm:$0xff] %vm870, %v856
          %874 = vst.msk [vmem:[#allocation2 + $0x18] sm:$0xff] %vm870, %v857
          %875 = vst.msk [vmem:[#allocation2 + $0x20] sm:$0xff] %vm870, %v858
          %876 = vst.msk [vmem:[#allocation2 + $0x28] sm:$0xff] %vm870, %v859
          %877 = vst.msk [vmem:[#allocation2 + $0x30] sm:$0xff] %vm870, %v860
          %878 = vst.msk [vmem:[#allocation2 + $0x38] sm:$0xff] %vm870, %v861
          %879 = vst.msk [vmem:[#allocation2 + $0x40] sm:$0xff] %vm870, %v862
          %880 = vst.msk [vmem:[#allocation2 + $0x48] sm:$0xff] %vm870, %v863
          %881 = vst.msk [vmem:[#allocation2 + $0x50] sm:$0xff] %vm870, %v864
          %882 = vst.msk [vmem:[#allocation2 + $0x58] sm:$0xff] %vm870, %v865
          %883 = vst.msk [vmem:[#allocation2 + $0x60] sm:$0xff] %vm870, %v866
          %884 = vst.msk [vmem:[#allocation2 + $0x68] sm:$0xff] %vm870, %v867
          %885 = vst.msk [vmem:[#allocation2 + $0x70] sm:$0xff] %vm870, %v868
          %886 = vst.msk [vmem:[#allocation2 + $0x78] sm:$0xff] %vm870, %v869
          %888 = vset.pattern.permute.xlu0 0
          %889 = vperm.xlu0 %888, %v457
          %v890 = vpop.permute.xlu0 %889
          %893 = vset.pattern.permute.xlu0 0
          %894 = vperm.xlu0 %893, %v458
          %v895 = vpop.permute.xlu0 %894
          %898 = vset.pattern.permute.xlu0 0
          %899 = vperm.xlu0 %898, %v459
          %v900 = vpop.permute.xlu0 %899
          %903 = vset.pattern.permute.xlu0 0
          %904 = vperm.xlu0 %903, %v460
          %v905 = vpop.permute.xlu0 %904
          %908 = vset.pattern.permute.xlu0 0
          %909 = vperm.xlu0 %908, %v461
          %v910 = vpop.permute.xlu0 %909
          %913 = vset.pattern.permute.xlu0 0
          %914 = vperm.xlu0 %913, %v462
          %v915 = vpop.permute.xlu0 %914
          %918 = vset.pattern.permute.xlu0 0
          %919 = vperm.xlu0 %918, %v463
          %v920 = vpop.permute.xlu0 %919
          %923 = vset.pattern.permute.xlu0 0
          %924 = vperm.xlu0 %923, %v464
          %v925 = vpop.permute.xlu0 %924
          %928 = vset.pattern.permute.xlu0 0
          %929 = vperm.xlu0 %928, %v465
          %v930 = vpop.permute.xlu0 %929
          %933 = vset.pattern.permute.xlu0 0
          %934 = vperm.xlu0 %933, %v466
          %v935 = vpop.permute.xlu0 %934
          %938 = vset.pattern.permute.xlu0 0
          %939 = vperm.xlu0 %938, %v467
          %v940 = vpop.permute.xlu0 %939
          %943 = vset.pattern.permute.xlu0 0
          %944 = vperm.xlu0 %943, %v468
          %v945 = vpop.permute.xlu0 %944
          %948 = vset.pattern.permute.xlu0 0
          %949 = vperm.xlu0 %948, %v469
          %v950 = vpop.permute.xlu0 %949
          %953 = vset.pattern.permute.xlu0 0
          %954 = vperm.xlu0 %953, %v470
          %v955 = vpop.permute.xlu0 %954
          %958 = vset.pattern.permute.xlu0 0
          %959 = vperm.xlu0 %958, %v471
          %v960 = vpop.permute.xlu0 %959
          %963 = vset.pattern.permute.xlu0 0
          %964 = vperm.xlu0 %963, %v472
          %v965 = vpop.permute.xlu0 %964
          %v967 = vmul.f32 %v854, %v890
          %v968 = vmul.f32 %v855, %v895
          %v969 = vmul.f32 %v856, %v900
          %v970 = vmul.f32 %v857, %v905
          %v971 = vmul.f32 %v858, %v910
          %v972 = vmul.f32 %v859, %v915
          %v973 = vmul.f32 %v860, %v920
          %v974 = vmul.f32 %v861, %v925
          %v975 = vmul.f32 %v862, %v930
          %v976 = vmul.f32 %v863, %v935
          %v977 = vmul.f32 %v864, %v940
          %v978 = vmul.f32 %v865, %v945
          %v979 = vmul.f32 %v866, %v950
          %v980 = vmul.f32 %v867, %v955
          %v981 = vmul.f32 %v868, %v960
          %v982 = vmul.f32 %v869, %v965
          %999 = vrot.lane.b32.xlu0 %v967, 64
          %v1000 = vpop.permute.xlu0 %999
          %1001 = vrot.lane.b32.xlu0 %v968, 64
          %v1002 = vpop.permute.xlu0 %1001
          %1003 = vrot.lane.b32.xlu0 %v969, 64
          %v1004 = vpop.permute.xlu0 %1003
          %1005 = vrot.lane.b32.xlu0 %v970, 64
          %v1006 = vpop.permute.xlu0 %1005
          %1007 = vrot.lane.b32.xlu0 %v971, 64
          %v1008 = vpop.permute.xlu0 %1007
          %1009 = vrot.lane.b32.xlu0 %v972, 64
          %v1010 = vpop.permute.xlu0 %1009
          %1011 = vrot.lane.b32.xlu0 %v973, 64
          %v1012 = vpop.permute.xlu0 %1011
          %1013 = vrot.lane.b32.xlu0 %v974, 64
          %v1014 = vpop.permute.xlu0 %1013
          %1015 = vrot.lane.b32.xlu0 %v975, 64
          %v1016 = vpop.permute.xlu0 %1015
          %1017 = vrot.lane.b32.xlu0 %v976, 64
          %v1018 = vpop.permute.xlu0 %1017
          %1019 = vrot.lane.b32.xlu0 %v977, 64
          %v1020 = vpop.permute.xlu0 %1019
          %1021 = vrot.lane.b32.xlu0 %v978, 64
          %v1022 = vpop.permute.xlu0 %1021
          %1023 = vrot.lane.b32.xlu0 %v979, 64
          %v1024 = vpop.permute.xlu0 %1023
          %1025 = vrot.lane.b32.xlu0 %v980, 64
          %v1026 = vpop.permute.xlu0 %1025
          %1027 = vrot.lane.b32.xlu0 %v981, 64
          %v1028 = vpop.permute.xlu0 %1027
          %1029 = vrot.lane.b32.xlu0 %v982, 64
          %v1030 = vpop.permute.xlu0 %1029
          %1047 = vst.msk [vmem:[#allocation3] sm:$0xff] %vm870, %v1000
          %1048 = vst.msk [vmem:[#allocation3 + $0x8] sm:$0xff] %vm870, %v1002
          %1049 = vst.msk [vmem:[#allocation3 + $0x10] sm:$0xff] %vm870, %v1004
          %1050 = vst.msk [vmem:[#allocation3 + $0x18] sm:$0xff] %vm870, %v1006
          %1051 = vst.msk [vmem:[#allocation3 + $0x20] sm:$0xff] %vm870, %v1008
          %1052 = vst.msk [vmem:[#allocation3 + $0x28] sm:$0xff] %vm870, %v1010
          %1053 = vst.msk [vmem:[#allocation3 + $0x30] sm:$0xff] %vm870, %v1012
          %1054 = vst.msk [vmem:[#allocation3 + $0x38] sm:$0xff] %vm870, %v1014
          %1055 = vst.msk [vmem:[#allocation3 + $0x40] sm:$0xff] %vm870, %v1016
          %1056 = vst.msk [vmem:[#allocation3 + $0x48] sm:$0xff] %vm870, %v1018
          %1057 = vst.msk [vmem:[#allocation3 + $0x50] sm:$0xff] %vm870, %v1020
          %1058 = vst.msk [vmem:[#allocation3 + $0x58] sm:$0xff] %vm870, %v1022
          %1059 = vst.msk [vmem:[#allocation3 + $0x60] sm:$0xff] %vm870, %v1024
          %1060 = vst.msk [vmem:[#allocation3 + $0x68] sm:$0xff] %vm870, %v1026
          %1061 = vst.msk [vmem:[#allocation3 + $0x70] sm:$0xff] %vm870, %v1028
          %1062 = vst.msk [vmem:[#allocation3 + $0x78] sm:$0xff] %vm870, %v1030
          %s1063 = scalar_lea.vmem [#allocation8], 32
          %v1064 = vld [vmem:[%s1063] sm:$0xff]
          %v1065 = vld [vmem:[%s1063 + $0x8] sm:$0xff]
          %v1066 = vld [vmem:[%s1063 + $0x10] sm:$0xff]
          %v1067 = vld [vmem:[%s1063 + $0x18] sm:$0xff]
          %s1068 = scalar_lea.vmem [#allocation10], 1
          %v1069 = vld [vmem:[%s1068] sm:$0x1]
          %v1071 = vlaneseq
          %v1072 = vshrl.u32 %v1071, 7
          %v1073 = vsub.s32 0, %v1072
          %v1074 = vrot.slane %v1069, %v1073
          %1076 = vmatprep.subr.mxu0 0.0
          %1077 = vmatpush1.msra.mxu0 %v1064
          %1078 = vmatprep.subr.mxu0 0.0
          %1079 = vmatpush1.msra.mxu0 %v1065
          %1080 = vmatprep.subr.mxu0 0.0
          %1081 = vmatpush1.msra.mxu0 %v1066
          %1082 = vmatprep.subr.mxu0 0.0
          %1083 = vmatpush1.msra.mxu0 %v1067
          %1084 = vmatprep.subr.mxu0 0.0
          %1085 = vmatpush1.msra.mxu0 0.0
          %1086 = vmatprep.subr.mxu0 0.0
          %1087 = vmatpush1.msra.mxu0 0.0
          %1088 = vmatprep.subr.mxu0 0.0
          %1089 = vmatpush1.msra.mxu0 0.0
          %1090 = vmatprep.subr.mxu0 0.0
          %1091 = vmatpush1.msra.mxu0 0.0
          %1092 = vmatprep.subr.mxu0 0.0
          %1093 = vmatpush1.msra.mxu0 0.0
          %1094 = vmatprep.subr.mxu0 0.0
          %1095 = vmatpush1.msra.mxu0 0.0
          %1096 = vmatprep.subr.mxu0 0.0
          %1097 = vmatpush1.msra.mxu0 0.0
          %1098 = vmatprep.subr.mxu0 0.0
          %1099 = vmatpush1.msra.mxu0 0.0
          %1100 = vmatprep.subr.mxu0 0.0
          %1101 = vmatpush1.msra.mxu0 0.0
          %1102 = vmatprep.subr.mxu0 0.0
          %1103 = vmatpush1.msra.mxu0 0.0
          %1104 = vmatprep.subr.mxu0 0.0
          %1105 = vmatpush1.msra.mxu0 0.0
          %1106 = vmatprep.subr.mxu0 0.0
          %1107 = vmatpush1.msra.mxu0 0.0
          %1108 = vmatprep.subr.mxu0 0.0
          %1109 = vmatpush1.msra.mxu0 0.0
          %1110 = vmatprep.subr.mxu0 0.0
          %1111 = vmatpush1.msra.mxu0 0.0
          %1112 = vmatprep.subr.mxu0 0.0
          %1113 = vmatpush1.msra.mxu0 0.0
          %1114 = vmatprep.subr.mxu0 0.0
          %1115 = vmatpush1.msra.mxu0 0.0
          %1116 = vmatprep.subr.mxu0 0.0
          %1117 = vmatpush1.msra.mxu0 0.0
          %1118 = vmatprep.subr.mxu0 0.0
          %1119 = vmatpush1.msra.mxu0 0.0
          %1120 = vmatprep.subr.mxu0 0.0
          %1121 = vmatpush1.msra.mxu0 0.0
          %1122 = vmatprep.subr.mxu0 0.0
          %1123 = vmatpush1.msra.mxu0 0.0
          %1124 = vmatprep.subr.mxu0 0.0
          %1125 = vmatpush1.msra.mxu0 0.0
          %1126 = vmatprep.subr.mxu0 0.0
          %1127 = vmatpush1.msra.mxu0 0.0
          %1128 = vmatprep.subr.mxu0 0.0
          %1129 = vmatpush1.msra.mxu0 0.0
          %1130 = vmatprep.subr.mxu0 0.0
          %1131 = vmatpush1.msra.mxu0 0.0
          %1132 = vmatprep.subr.mxu0 0.0
          %1133 = vmatpush1.msra.mxu0 0.0
          %1134 = vmatprep.subr.mxu0 0.0
          %1135 = vmatpush1.msra.mxu0 0.0
          %1136 = vmatprep.subr.mxu0 0.0
          %1137 = vmatpush1.msra.mxu0 0.0
          %1138 = vmatprep.subr.mxu0 0.0
          %1139 = vmatpush1.msra.mxu0 0.0
          %1140 = vmatprep.mubr.f32.mxu0 0.0
          %1141 = vmatmul.mubr.f32.gmra.mrb[0].mxu0 %v534
          %v1142 = vpop.f32.mrb[0].mxu0
          %v1143 = vadd.f32 %v1074, %v1142
          %v1144 = vpop.f32.mrb[0].mxu0
          %1145 = vmatprep.mubr.f32.mxu0 0.0
          %1146 = vmatmul.mubr.f32.gmra.mrb[0].mxu0 %v537
          %v1147 = vpop.f32.mrb[0].mxu0
          %v1148 = vadd.f32 %v1074, %v1147
          %v1149 = vpop.f32.mrb[0].mxu0
          %1150 = vmatprep.mubr.f32.mxu0 0.0
          %1151 = vmatmul.mubr.f32.gmra.mrb[0].mxu0 %v540
          %v1152 = vpop.f32.mrb[0].mxu0
          %v1153 = vadd.f32 %v1074, %v1152
          %v1154 = vpop.f32.mrb[0].mxu0
          %1155 = vmatprep.mubr.f32.mxu0 0.0
          %1156 = vmatmul.mubr.f32.gmra.mrb[0].mxu0 %v543
          %v1157 = vpop.f32.mrb[0].mxu0
          %v1158 = vadd.f32 %v1074, %v1157
          %v1159 = vpop.f32.mrb[0].mxu0
          %1160 = vmatprep.mubr.f32.mxu0 0.0
          %1161 = vmatmul.mubr.f32.gmra.mrb[0].mxu0 %v546
          %v1162 = vpop.f32.mrb[0].mxu0
          %v1163 = vadd.f32 %v1074, %v1162
          %v1164 = vpop.f32.mrb[0].mxu0
          %1165 = vmatprep.mubr.f32.mxu0 0.0
          %1166 = vmatmul.mubr.f32.gmra.mrb[0].mxu0 %v549
          %v1167 = vpop.f32.mrb[0].mxu0
          %v1168 = vadd.f32 %v1074, %v1167
          %v1169 = vpop.f32.mrb[0].mxu0
          %1170 = vmatprep.mubr.f32.mxu0 0.0
          %1171 = vmatmul.mubr.f32.gmra.mrb[0].mxu0 %v552
          %v1172 = vpop.f32.mrb[0].mxu0
          %v1173 = vadd.f32 %v1074, %v1172
          %v1174 = vpop.f32.mrb[0].mxu0
          %1175 = vmatprep.mubr.f32.mxu0 0.0
          %1176 = vmatmul.mubr.f32.gmra.mrb[0].mxu0 %v555
          %v1177 = vpop.f32.mrb[0].mxu0
          %v1178 = vadd.f32 %v1074, %v1177
          %v1179 = vpop.f32.mrb[0].mxu0
          %1180 = vmatprep.mubr.f32.mxu0 0.0
          %1181 = vmatmul.mubr.f32.gmra.mrb[0].mxu0 %v558
          %v1182 = vpop.f32.mrb[0].mxu0
          %v1183 = vadd.f32 %v1074, %v1182
          %v1184 = vpop.f32.mrb[0].mxu0
          %1185 = vmatprep.mubr.f32.mxu0 0.0
          %1186 = vmatmul.mubr.f32.gmra.mrb[0].mxu0 %v561
          %v1187 = vpop.f32.mrb[0].mxu0
          %v1188 = vadd.f32 %v1074, %v1187
          %v1189 = vpop.f32.mrb[0].mxu0
          %1190 = vmatprep.mubr.f32.mxu0 0.0
          %1191 = vmatmul.mubr.f32.gmra.mrb[0].mxu0 %v564
          %v1192 = vpop.f32.mrb[0].mxu0
          %v1193 = vadd.f32 %v1074, %v1192
          %v1194 = vpop.f32.mrb[0].mxu0
          %1195 = vmatprep.mubr.f32.mxu0 0.0
          %1196 = vmatmul.mubr.f32.gmra.mrb[0].mxu0 %v567
          %v1197 = vpop.f32.mrb[0].mxu0
          %v1198 = vadd.f32 %v1074, %v1197
          %v1199 = vpop.f32.mrb[0].mxu0
          %1200 = vmatprep.mubr.f32.mxu0 0.0
          %1201 = vmatmul.mubr.f32.gmra.mrb[0].mxu0 %v570
          %v1202 = vpop.f32.mrb[0].mxu0
          %v1203 = vadd.f32 %v1074, %v1202
          %v1204 = vpop.f32.mrb[0].mxu0
          %1205 = vmatprep.mubr.f32.mxu0 0.0
          %1206 = vmatmul.mubr.f32.gmra.mrb[0].mxu0 %v573
          %v1207 = vpop.f32.mrb[0].mxu0
          %v1208 = vadd.f32 %v1074, %v1207
          %v1209 = vpop.f32.mrb[0].mxu0
          %1210 = vmatprep.mubr.f32.mxu0 0.0
          %1211 = vmatmul.mubr.f32.gmra.mrb[0].mxu0 %v576
          %v1212 = vpop.f32.mrb[0].mxu0
          %v1213 = vadd.f32 %v1074, %v1212
          %v1214 = vpop.f32.mrb[0].mxu0
          %1215 = vmatprep.mubr.f32.mxu0 0.0
          %1216 = vmatmul.mubr.f32.gmra.mrb[0].mxu0 %v579
          %v1217 = vpop.f32.mrb[0].mxu0
          %v1218 = vadd.f32 %v1074, %v1217
          %v1219 = vpop.f32.mrb[0].mxu0
          %1220 = vdwg.mxu0
          %1221 = vrot.lane.b32.xlu0 %v1143, 127
          %v1222 = vpop.permute.xlu0 %1221
          %1223 = vrot.lane.b32.xlu0 %v1148, 127
          %v1224 = vpop.permute.xlu0 %1223
          %1225 = vrot.lane.b32.xlu0 %v1153, 127
          %v1226 = vpop.permute.xlu0 %1225
          %1227 = vrot.lane.b32.xlu0 %v1158, 127
          %v1228 = vpop.permute.xlu0 %1227
          %1229 = vrot.lane.b32.xlu0 %v1163, 127
          %v1230 = vpop.permute.xlu0 %1229
          %1231 = vrot.lane.b32.xlu0 %v1168, 127
          %v1232 = vpop.permute.xlu0 %1231
          %1233 = vrot.lane.b32.xlu0 %v1173, 127
          %v1234 = vpop.permute.xlu0 %1233
          %1235 = vrot.lane.b32.xlu0 %v1178, 127
          %v1236 = vpop.permute.xlu0 %1235
          %1237 = vrot.lane.b32.xlu0 %v1183, 127
          %v1238 = vpop.permute.xlu0 %1237
          %1239 = vrot.lane.b32.xlu0 %v1188, 127
          %v1240 = vpop.permute.xlu0 %1239
          %1241 = vrot.lane.b32.xlu0 %v1193, 127
          %v1242 = vpop.permute.xlu0 %1241
          %1243 = vrot.lane.b32.xlu0 %v1198, 127
          %v1244 = vpop.permute.xlu0 %1243
          %1245 = vrot.lane.b32.xlu0 %v1203, 127
          %v1246 = vpop.permute.xlu0 %1245
          %1247 = vrot.lane.b32.xlu0 %v1208, 127
          %v1248 = vpop.permute.xlu0 %1247
          %1249 = vrot.lane.b32.xlu0 %v1213, 127
          %v1250 = vpop.permute.xlu0 %1249
          %1251 = vrot.lane.b32.xlu0 %v1218, 127
          %v1252 = vpop.permute.xlu0 %1251
          %1253 = vrot.lane.b32.xlu0 %v1143, 1
          %v1254 = vpop.permute.xlu0 %1253
          %1255 = vrot.lane.b32.xlu0 %v1148, 1
          %v1256 = vpop.permute.xlu0 %1255
          %1257 = vrot.lane.b32.xlu0 %v1153, 1
          %v1258 = vpop.permute.xlu0 %1257
          %1259 = vrot.lane.b32.xlu0 %v1158, 1
          %v1260 = vpop.permute.xlu0 %1259
          %1261 = vrot.lane.b32.xlu0 %v1163, 1
          %v1262 = vpop.permute.xlu0 %1261
          %1263 = vrot.lane.b32.xlu0 %v1168, 1
          %v1264 = vpop.permute.xlu0 %1263
          %1265 = vrot.lane.b32.xlu0 %v1173, 1
          %v1266 = vpop.permute.xlu0 %1265
          %1267 = vrot.lane.b32.xlu0 %v1178, 1
          %v1268 = vpop.permute.xlu0 %1267
          %1269 = vrot.lane.b32.xlu0 %v1183, 1
          %v1270 = vpop.permute.xlu0 %1269
          %1271 = vrot.lane.b32.xlu0 %v1188, 1
          %v1272 = vpop.permute.xlu0 %1271
          %1273 = vrot.lane.b32.xlu0 %v1193, 1
          %v1274 = vpop.permute.xlu0 %1273
          %1275 = vrot.lane.b32.xlu0 %v1198, 1
          %v1276 = vpop.permute.xlu0 %1275
          %1277 = vrot.lane.b32.xlu0 %v1203, 1
          %v1278 = vpop.permute.xlu0 %1277
          %1279 = vrot.lane.b32.xlu0 %v1208, 1
          %v1280 = vpop.permute.xlu0 %1279
          %1281 = vrot.lane.b32.xlu0 %v1213, 1
          %v1282 = vpop.permute.xlu0 %1281
          %1283 = vrot.lane.b32.xlu0 %v1218, 1
          %v1284 = vpop.permute.xlu0 %1283
          %v1285 = vmul.f32 %v1143, %v473
          %v1286 = vmul.f32 %v1148, %v474
          %v1287 = vmul.f32 %v1153, %v475
          %v1288 = vmul.f32 %v1158, %v476
          %v1289 = vmul.f32 %v1163, %v477
          %v1290 = vmul.f32 %v1168, %v478
          %v1291 = vmul.f32 %v1173, %v479
          %v1292 = vmul.f32 %v1178, %v480
          %v1293 = vmul.f32 %v1183, %v481
          %v1294 = vmul.f32 %v1188, %v482
          %v1295 = vmul.f32 %v1193, %v483
          %v1296 = vmul.f32 %v1198, %v484
          %v1297 = vmul.f32 %v1203, %v485
          %v1298 = vmul.f32 %v1208, %v486
          %v1299 = vmul.f32 %v1213, %v487
          %v1300 = vmul.f32 %v1218, %v488
          %v1301 = vmul.f32 %v1222, %v489
          %v1302 = vmul.f32 %v1224, %v490
          %v1303 = vmul.f32 %v1226, %v491
          %v1304 = vmul.f32 %v1228, %v492
          %v1305 = vmul.f32 %v1230, %v493
          %v1306 = vmul.f32 %v1232, %v494
          %v1307 = vmul.f32 %v1234, %v495
          %v1308 = vmul.f32 %v1236, %v496
          %v1309 = vmul.f32 %v1238, %v497
          %v1310 = vmul.f32 %v1240, %v498
          %v1311 = vmul.f32 %v1242, %v499
          %v1312 = vmul.f32 %v1244, %v500
          %v1313 = vmul.f32 %v1246, %v501
          %v1314 = vmul.f32 %v1248, %v502
          %v1315 = vmul.f32 %v1250, %v503
          %v1316 = vmul.f32 %v1252, %v504
          %v1317 = vadd.f32 %v1285, %v1301
          %v1318 = vadd.f32 %v1286, %v1302
          %v1319 = vadd.f32 %v1287, %v1303
          %v1320 = vadd.f32 %v1288, %v1304
          %v1321 = vadd.f32 %v1289, %v1305
          %v1322 = vadd.f32 %v1290, %v1306
          %v1323 = vadd.f32 %v1291, %v1307
          %v1324 = vadd.f32 %v1292, %v1308
          %v1325 = vadd.f32 %v1293, %v1309
          %v1326 = vadd.f32 %v1294, %v1310
          %v1327 = vadd.f32 %v1295, %v1311
          %v1328 = vadd.f32 %v1296, %v1312
          %v1329 = vadd.f32 %v1297, %v1313
          %v1330 = vadd.f32 %v1298, %v1314
          %v1331 = vadd.f32 %v1299, %v1315
          %v1332 = vadd.f32 %v1300, %v1316
          %v1333 = vmul.f32 %v1254, %v505
          %v1334 = vmul.f32 %v1256, %v506
          %v1335 = vmul.f32 %v1258, %v507
          %v1336 = vmul.f32 %v1260, %v508
          %v1337 = vmul.f32 %v1262, %v509
          %v1338 = vmul.f32 %v1264, %v510
          %v1339 = vmul.f32 %v1266, %v511
          %v1340 = vmul.f32 %v1268, %v512
          %v1341 = vmul.f32 %v1270, %v513
          %v1342 = vmul.f32 %v1272, %v514
          %v1343 = vmul.f32 %v1274, %v515
          %v1344 = vmul.f32 %v1276, %v516
          %v1345 = vmul.f32 %v1278, %v517
          %v1346 = vmul.f32 %v1280, %v518
          %v1347 = vmul.f32 %v1282, %v519
          %v1348 = vmul.f32 %v1284, %v520
          %v1349 = vadd.f32 %v1317, %v1333
          %v1350 = vadd.f32 %v1318, %v1334
          %v1351 = vadd.f32 %v1319, %v1335
          %v1352 = vadd.f32 %v1320, %v1336
          %v1353 = vadd.f32 %v1321, %v1337
          %v1354 = vadd.f32 %v1322, %v1338
          %v1355 = vadd.f32 %v1323, %v1339
          %v1356 = vadd.f32 %v1324, %v1340
          %v1357 = vadd.f32 %v1325, %v1341
          %v1358 = vadd.f32 %v1326, %v1342
          %v1359 = vadd.f32 %v1327, %v1343
          %v1360 = vadd.f32 %v1328, %v1344
          %v1361 = vadd.f32 %v1329, %v1345
          %v1362 = vadd.f32 %v1330, %v1346
          %v1363 = vadd.f32 %v1331, %v1347
          %v1364 = vadd.f32 %v1332, %v1348
          %s1365 = scalar_lea.vmem [#allocation2], 128
          %1366 = vst.msk [vmem:[%s1365] sm:$0xff] %vm870, %v1349
          %1367 = vst.msk [vmem:[%s1365 + $0x8] sm:$0xff] %vm870, %v1350
          %1368 = vst.msk [vmem:[%s1365 + $0x10] sm:$0xff] %vm870, %v1351
          %1369 = vst.msk [vmem:[%s1365 + $0x18] sm:$0xff] %vm870, %v1352
          %1370 = vst.msk [vmem:[%s1365 + $0x20] sm:$0xff] %vm870, %v1353
          %1371 = vst.msk [vmem:[%s1365 + $0x28] sm:$0xff] %vm870, %v1354
          %1372 = vst.msk [vmem:[%s1365 + $0x30] sm:$0xff] %vm870, %v1355
          %1373 = vst.msk [vmem:[%s1365 + $0x38] sm:$0xff] %vm870, %v1356
          %1374 = vst.msk [vmem:[%s1365 + $0x40] sm:$0xff] %vm870, %v1357
          %1375 = vst.msk [vmem:[%s1365 + $0x48] sm:$0xff] %vm870, %v1358
          %1376 = vst.msk [vmem:[%s1365 + $0x50] sm:$0xff] %vm870, %v1359
          %1377 = vst.msk [vmem:[%s1365 + $0x58] sm:$0xff] %vm870, %v1360
          %1378 = vst.msk [vmem:[%s1365 + $0x60] sm:$0xff] %vm870, %v1361
          %1379 = vst.msk [vmem:[%s1365 + $0x68] sm:$0xff] %vm870, %v1362
          %1380 = vst.msk [vmem:[%s1365 + $0x70] sm:$0xff] %vm870, %v1363
          %1381 = vst.msk [vmem:[%s1365 + $0x78] sm:$0xff] %vm870, %v1364
          %v1382 = vmul.f32 %v1349, %v890
          %v1383 = vmul.f32 %v1350, %v895
          %v1384 = vmul.f32 %v1351, %v900
          %v1385 = vmul.f32 %v1352, %v905
          %v1386 = vmul.f32 %v1353, %v910
          %v1387 = vmul.f32 %v1354, %v915
          %v1388 = vmul.f32 %v1355, %v920
          %v1389 = vmul.f32 %v1356, %v925
          %v1390 = vmul.f32 %v1357, %v930
          %v1391 = vmul.f32 %v1358, %v935
          %v1392 = vmul.f32 %v1359, %v940
          %v1393 = vmul.f32 %v1360, %v945
          %v1394 = vmul.f32 %v1361, %v950
          %v1395 = vmul.f32 %v1362, %v955
          %v1396 = vmul.f32 %v1363, %v960
          %v1397 = vmul.f32 %v1364, %v965
          %1414 = vrot.lane.b32.xlu0 %v1382, 64
          %v1415 = vpop.permute.xlu0 %1414
          %1416 = vrot.lane.b32.xlu0 %v1383, 64
          %v1417 = vpop.permute.xlu0 %1416
          %1418 = vrot.lane.b32.xlu0 %v1384, 64
          %v1419 = vpop.permute.xlu0 %1418
          %1420 = vrot.lane.b32.xlu0 %v1385, 64
          %v1421 = vpop.permute.xlu0 %1420
          %1422 = vrot.lane.b32.xlu0 %v1386, 64
          %v1423 = vpop.permute.xlu0 %1422
          %1424 = vrot.lane.b32.xlu0 %v1387, 64
          %v1425 = vpop.permute.xlu0 %1424
          %1426 = vrot.lane.b32.xlu0 %v1388, 64
          %v1427 = vpop.permute.xlu0 %1426
          %1428 = vrot.lane.b32.xlu0 %v1389, 64
          %v1429 = vpop.permute.xlu0 %1428
          %1430 = vrot.lane.b32.xlu0 %v1390, 64
          %v1431 = vpop.permute.xlu0 %1430
          %1432 = vrot.lane.b32.xlu0 %v1391, 64
          %v1433 = vpop.permute.xlu0 %1432
          %1434 = vrot.lane.b32.xlu0 %v1392, 64
          %v1435 = vpop.permute.xlu0 %1434
          %1436 = vrot.lane.b32.xlu0 %v1393, 64
          %v1437 = vpop.permute.xlu0 %1436
          %1438 = vrot.lane.b32.xlu0 %v1394, 64
          %v1439 = vpop.permute.xlu0 %1438
          %1440 = vrot.lane.b32.xlu0 %v1395, 64
          %v1441 = vpop.permute.xlu0 %1440
          %1442 = vrot.lane.b32.xlu0 %v1396, 64
          %v1443 = vpop.permute.xlu0 %1442
          %1444 = vrot.lane.b32.xlu0 %v1397, 64
          %v1445 = vpop.permute.xlu0 %1444
          %s1462 = scalar_lea.vmem [#allocation3], 128
          %1463 = vst.msk [vmem:[%s1462] sm:$0xff] %vm870, %v1415
          %1464 = vst.msk [vmem:[%s1462 + $0x8] sm:$0xff] %vm870, %v1417
          %1465 = vst.msk [vmem:[%s1462 + $0x10] sm:$0xff] %vm870, %v1419
          %1466 = vst.msk [vmem:[%s1462 + $0x18] sm:$0xff] %vm870, %v1421
          %1467 = vst.msk [vmem:[%s1462 + $0x20] sm:$0xff] %vm870, %v1423
          %1468 = vst.msk [vmem:[%s1462 + $0x28] sm:$0xff] %vm870, %v1425
          %1469 = vst.msk [vmem:[%s1462 + $0x30] sm:$0xff] %vm870, %v1427
          %1470 = vst.msk [vmem:[%s1462 + $0x38] sm:$0xff] %vm870, %v1429
          %1471 = vst.msk [vmem:[%s1462 + $0x40] sm:$0xff] %vm870, %v1431
          %1472 = vst.msk [vmem:[%s1462 + $0x48] sm:$0xff] %vm870, %v1433
          %1473 = vst.msk [vmem:[%s1462 + $0x50] sm:$0xff] %vm870, %v1435
          %1474 = vst.msk [vmem:[%s1462 + $0x58] sm:$0xff] %vm870, %v1437
          %1475 = vst.msk [vmem:[%s1462 + $0x60] sm:$0xff] %vm870, %v1439
          %1476 = vst.msk [vmem:[%s1462 + $0x68] sm:$0xff] %vm870, %v1441
          %1477 = vst.msk [vmem:[%s1462 + $0x70] sm:$0xff] %vm870, %v1443
          %1478 = vst.msk [vmem:[%s1462 + $0x78] sm:$0xff] %vm870, %v1445
          %s1479 = scalar_lea.vmem [#allocation8], 64
          %v1480 = vld [vmem:[%s1479] sm:$0xff]
          %v1481 = vld [vmem:[%s1479 + $0x8] sm:$0xff]
          %v1482 = vld [vmem:[%s1479 + $0x10] sm:$0xff]
          %v1483 = vld [vmem:[%s1479 + $0x18] sm:$0xff]
          %s1484 = scalar_lea.vmem [#allocation10], 2
          %v1485 = vld [vmem:[%s1484] sm:$0x1]
          %v1487 = vlaneseq
          %v1488 = vshrl.u32 %v1487, 7
          %v1489 = vsub.s32 0, %v1488
          %v1490 = vrot.slane %v1485, %v1489
          %1492 = vmatprep.subr.mxu0 0.0
          %1493 = vmatpush1.msra.mxu0 %v1480
          %1494 = vmatprep.subr.mxu0 0.0
          %1495 = vmatpush1.msra.mxu0 %v1481
          %1496 = vmatprep.subr.mxu0 0.0
          %1497 = vmatpush1.msra.mxu0 %v1482
          %1498 = vmatprep.subr.mxu0 0.0
          %1499 = vmatpush1.msra.mxu0 %v1483
          %1500 = vmatprep.subr.mxu0 0.0
          %1501 = vmatpush1.msra.mxu0 0.0
          %1502 = vmatprep.subr.mxu0 0.0
          %1503 = vmatpush1.msra.mxu0 0.0
          %1504 = vmatprep.subr.mxu0 0.0
          %1505 = vmatpush1.msra.mxu0 0.0
          %1506 = vmatprep.subr.mxu0 0.0
          %1507 = vmatpush1.msra.mxu0 0.0
          %1508 = vmatprep.subr.mxu0 0.0
          %1509 = vmatpush1.msra.mxu0 0.0
          %1510 = vmatprep.subr.mxu0 0.0
          %1511 = vmatpush1.msra.mxu0 0.0
          %1512 = vmatprep.subr.mxu0 0.0
          %1513 = vmatpush1.msra.mxu0 0.0
          %1514 = vmatprep.subr.mxu0 0.0
          %1515 = vmatpush1.msra.mxu0 0.0
          %1516 = vmatprep.subr.mxu0 0.0
          %1517 = vmatpush1.msra.mxu0 0.0
          %1518 = vmatprep.subr.mxu0 0.0
          %1519 = vmatpush1.msra.mxu0 0.0
          %1520 = vmatprep.subr.mxu0 0.0
          %1521 = vmatpush1.msra.mxu0 0.0
          %1522 = vmatprep.subr.mxu0 0.0
          %1523 = vmatpush1.msra.mxu0 0.0
          %1524 = vmatprep.subr.mxu0 0.0
          %1525 = vmatpush1.msra.mxu0 0.0
          %1526 = vmatprep.subr.mxu0 0.0
          %1527 = vmatpush1.msra.mxu0 0.0
          %1528 = vmatprep.subr.mxu0 0.0
          %1529 = vmatpush1.msra.mxu0 0.0
          %1530 = vmatprep.subr.mxu0 0.0
          %1531 = vmatpush1.msra.mxu0 0.0
          %1532 = vmatprep.subr.mxu0 0.0
          %1533 = vmatpush1.msra.mxu0 0.0
          %1534 = vmatprep.subr.mxu0 0.0
          %1535 = vmatpush1.msra.mxu0 0.0
          %1536 = vmatprep.subr.mxu0 0.0
          %1537 = vmatpush1.msra.mxu0 0.0
          %1538 = vmatprep.subr.mxu0 0.0
          %1539 = vmatpush1.msra.mxu0 0.0
          %1540 = vmatprep.subr.mxu0 0.0
          %1541 = vmatpush1.msra.mxu0 0.0
          %1542 = vmatprep.subr.mxu0 0.0
          %1543 = vmatpush1.msra.mxu0 0.0
          %1544 = vmatprep.subr.mxu0 0.0
          %1545 = vmatpush1.msra.mxu0 0.0
          %1546 = vmatprep.subr.mxu0 0.0
          %1547 = vmatpush1.msra.mxu0 0.0
          %1548 = vmatprep.subr.mxu0 0.0
          %1549 = vmatpush1.msra.mxu0 0.0
          %1550 = vmatprep.subr.mxu0 0.0
          %1551 = vmatpush1.msra.mxu0 0.0
          %1552 = vmatprep.subr.mxu0 0.0
          %1553 = vmatpush1.msra.mxu0 0.0
          %1554 = vmatprep.subr.mxu0 0.0
          %1555 = vmatpush1.msra.mxu0 0.0
          %1556 = vmatprep.mubr.f32.mxu0 0.0
          %1557 = vmatmul.mubr.f32.gmra.mrb[0].mxu0 %v534
          %v1558 = vpop.f32.mrb[0].mxu0
          %v1559 = vadd.f32 %v1490, %v1558
          %v1560 = vpop.f32.mrb[0].mxu0
          %1561 = vmatprep.mubr.f32.mxu0 0.0
          %1562 = vmatmul.mubr.f32.gmra.mrb[0].mxu0 %v537
          %v1563 = vpop.f32.mrb[0].mxu0
          %v1564 = vadd.f32 %v1490, %v1563
          %v1565 = vpop.f32.mrb[0].mxu0
          %1566 = vmatprep.mubr.f32.mxu0 0.0
          %1567 = vmatmul.mubr.f32.gmra.mrb[0].mxu0 %v540
          %v1568 = vpop.f32.mrb[0].mxu0
          %v1569 = vadd.f32 %v1490, %v1568
          %v1570 = vpop.f32.mrb[0].mxu0
          %1571 = vmatprep.mubr.f32.mxu0 0.0
          %1572 = vmatmul.mubr.f32.gmra.mrb[0].mxu0 %v543
          %v1573 = vpop.f32.mrb[0].mxu0
          %v1574 = vadd.f32 %v1490, %v1573
          %v1575 = vpop.f32.mrb[0].mxu0
          %1576 = vmatprep.mubr.f32.mxu0 0.0
          %1577 = vmatmul.mubr.f32.gmra.mrb[0].mxu0 %v546
          %v1578 = vpop.f32.mrb[0].mxu0
          %v1579 = vadd.f32 %v1490, %v1578
          %v1580 = vpop.f32.mrb[0].mxu0
          %1581 = vmatprep.mubr.f32.mxu0 0.0
          %1582 = vmatmul.mubr.f32.gmra.mrb[0].mxu0 %v549
          %v1583 = vpop.f32.mrb[0].mxu0
          %v1584 = vadd.f32 %v1490, %v1583
          %v1585 = vpop.f32.mrb[0].mxu0
          %1586 = vmatprep.mubr.f32.mxu0 0.0
          %1587 = vmatmul.mubr.f32.gmra.mrb[0].mxu0 %v552
          %v1588 = vpop.f32.mrb[0].mxu0
          %v1589 = vadd.f32 %v1490, %v1588
          %v1590 = vpop.f32.mrb[0].mxu0
          %1591 = vmatprep.mubr.f32.mxu0 0.0
          %1592 = vmatmul.mubr.f32.gmra.mrb[0].mxu0 %v555
          %v1593 = vpop.f32.mrb[0].mxu0
          %v1594 = vadd.f32 %v1490, %v1593
          %v1595 = vpop.f32.mrb[0].mxu0
          %1596 = vmatprep.mubr.f32.mxu0 0.0
          %1597 = vmatmul.mubr.f32.gmra.mrb[0].mxu0 %v558
          %v1598 = vpop.f32.mrb[0].mxu0
          %v1599 = vadd.f32 %v1490, %v1598
          %v1600 = vpop.f32.mrb[0].mxu0
          %1601 = vmatprep.mubr.f32.mxu0 0.0
          %1602 = vmatmul.mubr.f32.gmra.mrb[0].mxu0 %v561
          %v1603 = vpop.f32.mrb[0].mxu0
          %v1604 = vadd.f32 %v1490, %v1603
          %v1605 = vpop.f32.mrb[0].mxu0
          %1606 = vmatprep.mubr.f32.mxu0 0.0
          %1607 = vmatmul.mubr.f32.gmra.mrb[0].mxu0 %v564
          %v1608 = vpop.f32.mrb[0].mxu0
          %v1609 = vadd.f32 %v1490, %v1608
          %v1610 = vpop.f32.mrb[0].mxu0
          %1611 = vmatprep.mubr.f32.mxu0 0.0
          %1612 = vmatmul.mubr.f32.gmra.mrb[0].mxu0 %v567
          %v1613 = vpop.f32.mrb[0].mxu0
          %v1614 = vadd.f32 %v1490, %v1613
          %v1615 = vpop.f32.mrb[0].mxu0
          %1616 = vmatprep.mubr.f32.mxu0 0.0
          %1617 = vmatmul.mubr.f32.gmra.mrb[0].mxu0 %v570
          %v1618 = vpop.f32.mrb[0].mxu0
          %v1619 = vadd.f32 %v1490, %v1618
          %v1620 = vpop.f32.mrb[0].mxu0
          %1621 = vmatprep.mubr.f32.mxu0 0.0
          %1622 = vmatmul.mubr.f32.gmra.mrb[0].mxu0 %v573
          %v1623 = vpop.f32.mrb[0].mxu0
          %v1624 = vadd.f32 %v1490, %v1623
          %v1625 = vpop.f32.mrb[0].mxu0
          %1626 = vmatprep.mubr.f32.mxu0 0.0
          %1627 = vmatmul.mubr.f32.gmra.mrb[0].mxu0 %v576
          %v1628 = vpop.f32.mrb[0].mxu0
          %v1629 = vadd.f32 %v1490, %v1628
          %v1630 = vpop.f32.mrb[0].mxu0
          %1631 = vmatprep.mubr.f32.mxu0 0.0
          %1632 = vmatmul.mubr.f32.gmra.mrb[0].mxu0 %v579
          %v1633 = vpop.f32.mrb[0].mxu0
          %v1634 = vadd.f32 %v1490, %v1633
          %v1635 = vpop.f32.mrb[0].mxu0
          %1636 = vdwg.mxu0
          %1637 = vrot.lane.b32.xlu0 %v1559, 127
          %v1638 = vpop.permute.xlu0 %1637
          %1639 = vrot.lane.b32.xlu0 %v1564, 127
          %v1640 = vpop.permute.xlu0 %1639
          %1641 = vrot.lane.b32.xlu0 %v1569, 127
          %v1642 = vpop.permute.xlu0 %1641
          %1643 = vrot.lane.b32.xlu0 %v1574, 127
          %v1644 = vpop.permute.xlu0 %1643
          %1645 = vrot.lane.b32.xlu0 %v1579, 127
          %v1646 = vpop.permute.xlu0 %1645
          %1647 = vrot.lane.b32.xlu0 %v1584, 127
          %v1648 = vpop.permute.xlu0 %1647
          %1649 = vrot.lane.b32.xlu0 %v1589, 127
          %v1650 = vpop.permute.xlu0 %1649
          %1651 = vrot.lane.b32.xlu0 %v1594, 127
          %v1652 = vpop.permute.xlu0 %1651
          %1653 = vrot.lane.b32.xlu0 %v1599, 127
          %v1654 = vpop.permute.xlu0 %1653
          %1655 = vrot.lane.b32.xlu0 %v1604, 127
          %v1656 = vpop.permute.xlu0 %1655
          %1657 = vrot.lane.b32.xlu0 %v1609, 127
          %v1658 = vpop.permute.xlu0 %1657
          %1659 = vrot.lane.b32.xlu0 %v1614, 127
          %v1660 = vpop.permute.xlu0 %1659
          %1661 = vrot.lane.b32.xlu0 %v1619, 127
          %v1662 = vpop.permute.xlu0 %1661
          %1663 = vrot.lane.b32.xlu0 %v1624, 127
          %v1664 = vpop.permute.xlu0 %1663
          %1665 = vrot.lane.b32.xlu0 %v1629, 127
          %v1666 = vpop.permute.xlu0 %1665
          %1667 = vrot.lane.b32.xlu0 %v1634, 127
          %v1668 = vpop.permute.xlu0 %1667
          %1669 = vrot.lane.b32.xlu0 %v1559, 1
          %v1670 = vpop.permute.xlu0 %1669
          %1671 = vrot.lane.b32.xlu0 %v1564, 1
          %v1672 = vpop.permute.xlu0 %1671
          %1673 = vrot.lane.b32.xlu0 %v1569, 1
          %v1674 = vpop.permute.xlu0 %1673
          %1675 = vrot.lane.b32.xlu0 %v1574, 1
          %v1676 = vpop.permute.xlu0 %1675
          %1677 = vrot.lane.b32.xlu0 %v1579, 1
          %v1678 = vpop.permute.xlu0 %1677
          %1679 = vrot.lane.b32.xlu0 %v1584, 1
          %v1680 = vpop.permute.xlu0 %1679
          %1681 = vrot.lane.b32.xlu0 %v1589, 1
          %v1682 = vpop.permute.xlu0 %1681
          %1683 = vrot.lane.b32.xlu0 %v1594, 1
          %v1684 = vpop.permute.xlu0 %1683
          %1685 = vrot.lane.b32.xlu0 %v1599, 1
          %v1686 = vpop.permute.xlu0 %1685
          %1687 = vrot.lane.b32.xlu0 %v1604, 1
          %v1688 = vpop.permute.xlu0 %1687
          %1689 = vrot.lane.b32.xlu0 %v1609, 1
          %v1690 = vpop.permute.xlu0 %1689
          %1691 = vrot.lane.b32.xlu0 %v1614, 1
          %v1692 = vpop.permute.xlu0 %1691
          %1693 = vrot.lane.b32.xlu0 %v1619, 1
          %v1694 = vpop.permute.xlu0 %1693
          %1695 = vrot.lane.b32.xlu0 %v1624, 1
          %v1696 = vpop.permute.xlu0 %1695
          %1697 = vrot.lane.b32.xlu0 %v1629, 1
          %v1698 = vpop.permute.xlu0 %1697
          %1699 = vrot.lane.b32.xlu0 %v1634, 1
          %v1700 = vpop.permute.xlu0 %1699
          %v1701 = vmul.f32 %v1559, %v473
          %v1702 = vmul.f32 %v1564, %v474
          %v1703 = vmul.f32 %v1569, %v475
          %v1704 = vmul.f32 %v1574, %v476
          %v1705 = vmul.f32 %v1579, %v477
          %v1706 = vmul.f32 %v1584, %v478
          %v1707 = vmul.f32 %v1589, %v479
          %v1708 = vmul.f32 %v1594, %v480
          %v1709 = vmul.f32 %v1599, %v481
          %v1710 = vmul.f32 %v1604, %v482
          %v1711 = vmul.f32 %v1609, %v483
          %v1712 = vmul.f32 %v1614, %v484
          %v1713 = vmul.f32 %v1619, %v485
          %v1714 = vmul.f32 %v1624, %v486
          %v1715 = vmul.f32 %v1629, %v487
          %v1716 = vmul.f32 %v1634, %v488
          %v1717 = vmul.f32 %v1638, %v489
          %v1718 = vmul.f32 %v1640, %v490
          %v1719 = vmul.f32 %v1642, %v491
          %v1720 = vmul.f32 %v1644, %v492
          %v1721 = vmul.f32 %v1646, %v493
          %v1722 = vmul.f32 %v1648, %v494
          %v1723 = vmul.f32 %v1650, %v495
          %v1724 = vmul.f32 %v1652, %v496
          %v1725 = vmul.f32 %v1654, %v497
          %v1726 = vmul.f32 %v1656, %v498
          %v1727 = vmul.f32 %v1658, %v499
          %v1728 = vmul.f32 %v1660, %v500
          %v1729 = vmul.f32 %v1662, %v501
          %v1730 = vmul.f32 %v1664, %v502
          %v1731 = vmul.f32 %v1666, %v503
          %v1732 = vmul.f32 %v1668, %v504
          %v1733 = vadd.f32 %v1701, %v1717
          %v1734 = vadd.f32 %v1702, %v1718
          %v1735 = vadd.f32 %v1703, %v1719
          %v1736 = vadd.f32 %v1704, %v1720
          %v1737 = vadd.f32 %v1705, %v1721
          %v1738 = vadd.f32 %v1706, %v1722
          %v1739 = vadd.f32 %v1707, %v1723
          %v1740 = vadd.f32 %v1708, %v1724
          %v1741 = vadd.f32 %v1709, %v1725
          %v1742 = vadd.f32 %v1710, %v1726
          %v1743 = vadd.f32 %v1711, %v1727
          %v1744 = vadd.f32 %v1712, %v1728
          %v1745 = vadd.f32 %v1713, %v1729
          %v1746 = vadd.f32 %v1714, %v1730
          %v1747 = vadd.f32 %v1715, %v1731
          %v1748 = vadd.f32 %v1716, %v1732
          %v1749 = vmul.f32 %v1670, %v505
          %v1750 = vmul.f32 %v1672, %v506
          %v1751 = vmul.f32 %v1674, %v507
          %v1752 = vmul.f32 %v1676, %v508
          %v1753 = vmul.f32 %v1678, %v509
          %v1754 = vmul.f32 %v1680, %v510
          %v1755 = vmul.f32 %v1682, %v511
          %v1756 = vmul.f32 %v1684, %v512
          %v1757 = vmul.f32 %v1686, %v513
          %v1758 = vmul.f32 %v1688, %v514
          %v1759 = vmul.f32 %v1690, %v515
          %v1760 = vmul.f32 %v1692, %v516
          %v1761 = vmul.f32 %v1694, %v517
          %v1762 = vmul.f32 %v1696, %v518
          %v1763 = vmul.f32 %v1698, %v519
          %v1764 = vmul.f32 %v1700, %v520
          %v1765 = vadd.f32 %v1733, %v1749
          %v1766 = vadd.f32 %v1734, %v1750
          %v1767 = vadd.f32 %v1735, %v1751
          %v1768 = vadd.f32 %v1736, %v1752
          %v1769 = vadd.f32 %v1737, %v1753
          %v1770 = vadd.f32 %v1738, %v1754
          %v1771 = vadd.f32 %v1739, %v1755
          %v1772 = vadd.f32 %v1740, %v1756
          %v1773 = vadd.f32 %v1741, %v1757
          %v1774 = vadd.f32 %v1742, %v1758
          %v1775 = vadd.f32 %v1743, %v1759
          %v1776 = vadd.f32 %v1744, %v1760
          %v1777 = vadd.f32 %v1745, %v1761
          %v1778 = vadd.f32 %v1746, %v1762
          %v1779 = vadd.f32 %v1747, %v1763
          %v1780 = vadd.f32 %v1748, %v1764
          %s1781 = scalar_lea.vmem [#allocation2], 256
          %1782 = vst.msk [vmem:[%s1781] sm:$0xff] %vm870, %v1765
          %1783 = vst.msk [vmem:[%s1781 + $0x8] sm:$0xff] %vm870, %v1766
          %1784 = vst.msk [vmem:[%s1781 + $0x10] sm:$0xff] %vm870, %v1767
          %1785 = vst.msk [vmem:[%s1781 + $0x18] sm:$0xff] %vm870, %v1768
          %1786 = vst.msk [vmem:[%s1781 + $0x20] sm:$0xff] %vm870, %v1769
          %1787 = vst.msk [vmem:[%s1781 + $0x28] sm:$0xff] %vm870, %v1770
          %1788 = vst.msk [vmem:[%s1781 + $0x30] sm:$0xff] %vm870, %v1771
          %1789 = vst.msk [vmem:[%s1781 + $0x38] sm:$0xff] %vm870, %v1772
          %1790 = vst.msk [vmem:[%s1781 + $0x40] sm:$0xff] %vm870, %v1773
          %1791 = vst.msk [vmem:[%s1781 + $0x48] sm:$0xff] %vm870, %v1774
          %1792 = vst.msk [vmem:[%s1781 + $0x50] sm:$0xff] %vm870, %v1775
          %1793 = vst.msk [vmem:[%s1781 + $0x58] sm:$0xff] %vm870, %v1776
          %1794 = vst.msk [vmem:[%s1781 + $0x60] sm:$0xff] %vm870, %v1777
          %1795 = vst.msk [vmem:[%s1781 + $0x68] sm:$0xff] %vm870, %v1778
          %1796 = vst.msk [vmem:[%s1781 + $0x70] sm:$0xff] %vm870, %v1779
          %1797 = vst.msk [vmem:[%s1781 + $0x78] sm:$0xff] %vm870, %v1780
          %v1798 = vmul.f32 %v1765, %v890
          %v1799 = vmul.f32 %v1766, %v895
          %v1800 = vmul.f32 %v1767, %v900
          %v1801 = vmul.f32 %v1768, %v905
          %v1802 = vmul.f32 %v1769, %v910
          %v1803 = vmul.f32 %v1770, %v915
          %v1804 = vmul.f32 %v1771, %v920
          %v1805 = vmul.f32 %v1772, %v925
          %v1806 = vmul.f32 %v1773, %v930
          %v1807 = vmul.f32 %v1774, %v935
          %v1808 = vmul.f32 %v1775, %v940
          %v1809 = vmul.f32 %v1776, %v945
          %v1810 = vmul.f32 %v1777, %v950
          %v1811 = vmul.f32 %v1778, %v955
          %v1812 = vmul.f32 %v1779, %v960
          %v1813 = vmul.f32 %v1780, %v965
          %1830 = vrot.lane.b32.xlu0 %v1798, 64
          %v1831 = vpop.permute.xlu0 %1830
          %1832 = vrot.lane.b32.xlu0 %v1799, 64
          %v1833 = vpop.permute.xlu0 %1832
          %1834 = vrot.lane.b32.xlu0 %v1800, 64
          %v1835 = vpop.permute.xlu0 %1834
          %1836 = vrot.lane.b32.xlu0 %v1801, 64
          %v1837 = vpop.permute.xlu0 %1836
          %1838 = vrot.lane.b32.xlu0 %v1802, 64
          %v1839 = vpop.permute.xlu0 %1838
          %1840 = vrot.lane.b32.xlu0 %v1803, 64
          %v1841 = vpop.permute.xlu0 %1840
          %1842 = vrot.lane.b32.xlu0 %v1804, 64
          %v1843 = vpop.permute.xlu0 %1842
          %1844 = vrot.lane.b32.xlu0 %v1805, 64
          %v1845 = vpop.permute.xlu0 %1844
          %1846 = vrot.lane.b32.xlu0 %v1806, 64
          %v1847 = vpop.permute.xlu0 %1846
          %1848 = vrot.lane.b32.xlu0 %v1807, 64
          %v1849 = vpop.permute.xlu0 %1848
          %1850 = vrot.lane.b32.xlu0 %v1808, 64
          %v1851 = vpop.permute.xlu0 %1850
          %1852 = vrot.lane.b32.xlu0 %v1809, 64
          %v1853 = vpop.permute.xlu0 %1852
          %1854 = vrot.lane.b32.xlu0 %v1810, 64
          %v1855 = vpop.permute.xlu0 %1854
          %1856 = vrot.lane.b32.xlu0 %v1811, 64
          %v1857 = vpop.permute.xlu0 %1856
          %1858 = vrot.lane.b32.xlu0 %v1812, 64
          %v1859 = vpop.permute.xlu0 %1858
          %1860 = vrot.lane.b32.xlu0 %v1813, 64
          %v1861 = vpop.permute.xlu0 %1860
          %s1878 = scalar_lea.vmem [#allocation3], 256
          %1879 = vst.msk [vmem:[%s1878] sm:$0xff] %vm870, %v1831
          %1880 = vst.msk [vmem:[%s1878 + $0x8] sm:$0xff] %vm870, %v1833
          %1881 = vst.msk [vmem:[%s1878 + $0x10] sm:$0xff] %vm870, %v1835
          %1882 = vst.msk [vmem:[%s1878 + $0x18] sm:$0xff] %vm870, %v1837
          %1883 = vst.msk [vmem:[%s1878 + $0x20] sm:$0xff] %vm870, %v1839
          %1884 = vst.msk [vmem:[%s1878 + $0x28] sm:$0xff] %vm870, %v1841
          %1885 = vst.msk [vmem:[%s1878 + $0x30] sm:$0xff] %vm870, %v1843
          %1886 = vst.msk [vmem:[%s1878 + $0x38] sm:$0xff] %vm870, %v1845
          %1887 = vst.msk [vmem:[%s1878 + $0x40] sm:$0xff] %vm870, %v1847
          %1888 = vst.msk [vmem:[%s1878 + $0x48] sm:$0xff] %vm870, %v1849
          %1889 = vst.msk [vmem:[%s1878 + $0x50] sm:$0xff] %vm870, %v1851
          %1890 = vst.msk [vmem:[%s1878 + $0x58] sm:$0xff] %vm870, %v1853
          %1891 = vst.msk [vmem:[%s1878 + $0x60] sm:$0xff] %vm870, %v1855
          %1892 = vst.msk [vmem:[%s1878 + $0x68] sm:$0xff] %vm870, %v1857
          %1893 = vst.msk [vmem:[%s1878 + $0x70] sm:$0xff] %vm870, %v1859
          %1894 = vst.msk [vmem:[%s1878 + $0x78] sm:$0xff] %vm870, %v1861
          %s1895 = scalar_lea.vmem [#allocation8], 96
          %v1896 = vld [vmem:[%s1895] sm:$0xff]
          %v1897 = vld [vmem:[%s1895 + $0x8] sm:$0xff]
          %v1898 = vld [vmem:[%s1895 + $0x10] sm:$0xff]
          %v1899 = vld [vmem:[%s1895 + $0x18] sm:$0xff]
          %s1900 = scalar_lea.vmem [#allocation10], 3
          %v1901 = vld [vmem:[%s1900] sm:$0x1]
          %v1903 = vlaneseq
          %v1904 = vshrl.u32 %v1903, 7
          %v1905 = vsub.s32 0, %v1904
          %v1906 = vrot.slane %v1901, %v1905
          %1908 = vmatprep.subr.mxu0 0.0
          %1909 = vmatpush1.msra.mxu0 %v1896
          %1910 = vmatprep.subr.mxu0 0.0
          %1911 = vmatpush1.msra.mxu0 %v1897
          %1912 = vmatprep.subr.mxu0 0.0
          %1913 = vmatpush1.msra.mxu0 %v1898
          %1914 = vmatprep.subr.mxu0 0.0
          %1915 = vmatpush1.msra.mxu0 %v1899
          %1916 = vmatprep.subr.mxu0 0.0
          %1917 = vmatpush1.msra.mxu0 0.0
          %1918 = vmatprep.subr.mxu0 0.0
          %1919 = vmatpush1.msra.mxu0 0.0
          %1920 = vmatprep.subr.mxu0 0.0
          %1921 = vmatpush1.msra.mxu0 0.0
          %1922 = vmatprep.subr.mxu0 0.0
          %1923 = vmatpush1.msra.mxu0 0.0
          %1924 = vmatprep.subr.mxu0 0.0
          %1925 = vmatpush1.msra.mxu0 0.0
          %1926 = vmatprep.subr.mxu0 0.0
          %1927 = vmatpush1.msra.mxu0 0.0
          %1928 = vmatprep.subr.mxu0 0.0
          %1929 = vmatpush1.msra.mxu0 0.0
          %1930 = vmatprep.subr.mxu0 0.0
          %1931 = vmatpush1.msra.mxu0 0.0
          %1932 = vmatprep.subr.mxu0 0.0
          %1933 = vmatpush1.msra.mxu0 0.0
          %1934 = vmatprep.subr.mxu0 0.0
          %1935 = vmatpush1.msra.mxu0 0.0
          %1936 = vmatprep.subr.mxu0 0.0
          %1937 = vmatpush1.msra.mxu0 0.0
          %1938 = vmatprep.subr.mxu0 0.0
          %1939 = vmatpush1.msra.mxu0 0.0
          %1940 = vmatprep.subr.mxu0 0.0
          %1941 = vmatpush1.msra.mxu0 0.0
          %1942 = vmatprep.subr.mxu0 0.0
          %1943 = vmatpush1.msra.mxu0 0.0
          %1944 = vmatprep.subr.mxu0 0.0
          %1945 = vmatpush1.msra.mxu0 0.0
          %1946 = vmatprep.subr.mxu0 0.0
          %1947 = vmatpush1.msra.mxu0 0.0
          %1948 = vmatprep.subr.mxu0 0.0
          %1949 = vmatpush1.msra.mxu0 0.0
          %1950 = vmatprep.subr.mxu0 0.0
          %1951 = vmatpush1.msra.mxu0 0.0
          %1952 = vmatprep.subr.mxu0 0.0
          %1953 = vmatpush1.msra.mxu0 0.0
          %1954 = vmatprep.subr.mxu0 0.0
          %1955 = vmatpush1.msra.mxu0 0.0
          %1956 = vmatprep.subr.mxu0 0.0
          %1957 = vmatpush1.msra.mxu0 0.0
          %1958 = vmatprep.subr.mxu0 0.0
          %1959 = vmatpush1.msra.mxu0 0.0
          %1960 = vmatprep.subr.mxu0 0.0
          %1961 = vmatpush1.msra.mxu0 0.0
          %1962 = vmatprep.subr.mxu0 0.0
          %1963 = vmatpush1.msra.mxu0 0.0
          %1964 = vmatprep.subr.mxu0 0.0
          %1965 = vmatpush1.msra.mxu0 0.0
          %1966 = vmatprep.subr.mxu0 0.0
          %1967 = vmatpush1.msra.mxu0 0.0
          %1968 = vmatprep.subr.mxu0 0.0
          %1969 = vmatpush1.msra.mxu0 0.0
          %1970 = vmatprep.subr.mxu0 0.0
          %1971 = vmatpush1.msra.mxu0 0.0
          %1972 = vmatprep.mubr.f32.mxu0 0.0
          %1973 = vmatmul.mubr.f32.gmra.mrb[0].mxu0 %v534
          %v1974 = vpop.f32.mrb[0].mxu0
          %v1975 = vadd.f32 %v1906, %v1974
          %v1976 = vpop.f32.mrb[0].mxu0
          %1977 = vmatprep.mubr.f32.mxu0 0.0
          %1978 = vmatmul.mubr.f32.gmra.mrb[0].mxu0 %v537
          %v1979 = vpop.f32.mrb[0].mxu0
          %v1980 = vadd.f32 %v1906, %v1979
          %v1981 = vpop.f32.mrb[0].mxu0
          %1982 = vmatprep.mubr.f32.mxu0 0.0
          %1983 = vmatmul.mubr.f32.gmra.mrb[0].mxu0 %v540
          %v1984 = vpop.f32.mrb[0].mxu0
          %v1985 = vadd.f32 %v1906, %v1984
          %v1986 = vpop.f32.mrb[0].mxu0
          %1987 = vmatprep.mubr.f32.mxu0 0.0
          %1988 = vmatmul.mubr.f32.gmra.mrb[0].mxu0 %v543
          %v1989 = vpop.f32.mrb[0].mxu0
          %v1990 = vadd.f32 %v1906, %v1989
          %v1991 = vpop.f32.mrb[0].mxu0
          %1992 = vmatprep.mubr.f32.mxu0 0.0
          %1993 = vmatmul.mubr.f32.gmra.mrb[0].mxu0 %v546
          %v1994 = vpop.f32.mrb[0].mxu0
          %v1995 = vadd.f32 %v1906, %v1994
          %v1996 = vpop.f32.mrb[0].mxu0
          %1997 = vmatprep.mubr.f32.mxu0 0.0
          %1998 = vmatmul.mubr.f32.gmra.mrb[0].mxu0 %v549
          %v1999 = vpop.f32.mrb[0].mxu0
          %v2000 = vadd.f32 %v1906, %v1999
          %v2001 = vpop.f32.mrb[0].mxu0
          %2002 = vmatprep.mubr.f32.mxu0 0.0
          %2003 = vmatmul.mubr.f32.gmra.mrb[0].mxu0 %v552
          %v2004 = vpop.f32.mrb[0].mxu0
          %v2005 = vadd.f32 %v1906, %v2004
          %v2006 = vpop.f32.mrb[0].mxu0
          %2007 = vmatprep.mubr.f32.mxu0 0.0
          %2008 = vmatmul.mubr.f32.gmra.mrb[0].mxu0 %v555
          %v2009 = vpop.f32.mrb[0].mxu0
          %v2010 = vadd.f32 %v1906, %v2009
          %v2011 = vpop.f32.mrb[0].mxu0
          %2012 = vmatprep.mubr.f32.mxu0 0.0
          %2013 = vmatmul.mubr.f32.gmra.mrb[0].mxu0 %v558
          %v2014 = vpop.f32.mrb[0].mxu0
          %v2015 = vadd.f32 %v1906, %v2014
          %v2016 = vpop.f32.mrb[0].mxu0
          %2017 = vmatprep.mubr.f32.mxu0 0.0
          %2018 = vmatmul.mubr.f32.gmra.mrb[0].mxu0 %v561
          %v2019 = vpop.f32.mrb[0].mxu0
          %v2020 = vadd.f32 %v1906, %v2019
          %v2021 = vpop.f32.mrb[0].mxu0
          %2022 = vmatprep.mubr.f32.mxu0 0.0
          %2023 = vmatmul.mubr.f32.gmra.mrb[0].mxu0 %v564
          %v2024 = vpop.f32.mrb[0].mxu0
          %v2025 = vadd.f32 %v1906, %v2024
          %v2026 = vpop.f32.mrb[0].mxu0
          %2027 = vmatprep.mubr.f32.mxu0 0.0
          %2028 = vmatmul.mubr.f32.gmra.mrb[0].mxu0 %v567
          %v2029 = vpop.f32.mrb[0].mxu0
          %v2030 = vadd.f32 %v1906, %v2029
          %v2031 = vpop.f32.mrb[0].mxu0
          %2032 = vmatprep.mubr.f32.mxu0 0.0
          %2033 = vmatmul.mubr.f32.gmra.mrb[0].mxu0 %v570
          %v2034 = vpop.f32.mrb[0].mxu0
          %v2035 = vadd.f32 %v1906, %v2034
          %v2036 = vpop.f32.mrb[0].mxu0
          %2037 = vmatprep.mubr.f32.mxu0 0.0
          %2038 = vmatmul.mubr.f32.gmra.mrb[0].mxu0 %v573
          %v2039 = vpop.f32.mrb[0].mxu0
          %v2040 = vadd.f32 %v1906, %v2039
          %v2041 = vpop.f32.mrb[0].mxu0
          %2042 = vmatprep.mubr.f32.mxu0 0.0
          %2043 = vmatmul.mubr.f32.gmra.mrb[0].mxu0 %v576
          %v2044 = vpop.f32.mrb[0].mxu0
          %v2045 = vadd.f32 %v1906, %v2044
          %v2046 = vpop.f32.mrb[0].mxu0
          %2047 = vmatprep.mubr.f32.mxu0 0.0
          %2048 = vmatmul.mubr.f32.gmra.mrb[0].mxu0 %v579
          %v2049 = vpop.f32.mrb[0].mxu0
          %v2050 = vadd.f32 %v1906, %v2049
          %v2051 = vpop.f32.mrb[0].mxu0
          %2052 = vdwg.mxu0
          %2053 = vrot.lane.b32.xlu0 %v1975, 127
          %v2054 = vpop.permute.xlu0 %2053
          %2055 = vrot.lane.b32.xlu0 %v1980, 127
          %v2056 = vpop.permute.xlu0 %2055
          %2057 = vrot.lane.b32.xlu0 %v1985, 127
          %v2058 = vpop.permute.xlu0 %2057
          %2059 = vrot.lane.b32.xlu0 %v1990, 127
          %v2060 = vpop.permute.xlu0 %2059
          %2061 = vrot.lane.b32.xlu0 %v1995, 127
          %v2062 = vpop.permute.xlu0 %2061
          %2063 = vrot.lane.b32.xlu0 %v2000, 127
          %v2064 = vpop.permute.xlu0 %2063
          %2065 = vrot.lane.b32.xlu0 %v2005, 127
          %v2066 = vpop.permute.xlu0 %2065
          %2067 = vrot.lane.b32.xlu0 %v2010, 127
          %v2068 = vpop.permute.xlu0 %2067
          %2069 = vrot.lane.b32.xlu0 %v2015, 127
          %v2070 = vpop.permute.xlu0 %2069
          %2071 = vrot.lane.b32.xlu0 %v2020, 127
          %v2072 = vpop.permute.xlu0 %2071
          %2073 = vrot.lane.b32.xlu0 %v2025, 127
          %v2074 = vpop.permute.xlu0 %2073
          %2075 = vrot.lane.b32.xlu0 %v2030, 127
          %v2076 = vpop.permute.xlu0 %2075
          %2077 = vrot.lane.b32.xlu0 %v2035, 127
          %v2078 = vpop.permute.xlu0 %2077
          %2079 = vrot.lane.b32.xlu0 %v2040, 127
          %v2080 = vpop.permute.xlu0 %2079
          %2081 = vrot.lane.b32.xlu0 %v2045, 127
          %v2082 = vpop.permute.xlu0 %2081
          %2083 = vrot.lane.b32.xlu0 %v2050, 127
          %v2084 = vpop.permute.xlu0 %2083
          %2085 = vrot.lane.b32.xlu0 %v1975, 1
          %v2086 = vpop.permute.xlu0 %2085
          %2087 = vrot.lane.b32.xlu0 %v1980, 1
          %v2088 = vpop.permute.xlu0 %2087
          %2089 = vrot.lane.b32.xlu0 %v1985, 1
          %v2090 = vpop.permute.xlu0 %2089
          %2091 = vrot.lane.b32.xlu0 %v1990, 1
          %v2092 = vpop.permute.xlu0 %2091
          %2093 = vrot.lane.b32.xlu0 %v1995, 1
          %v2094 = vpop.permute.xlu0 %2093
          %2095 = vrot.lane.b32.xlu0 %v2000, 1
          %v2096 = vpop.permute.xlu0 %2095
          %2097 = vrot.lane.b32.xlu0 %v2005, 1
          %v2098 = vpop.permute.xlu0 %2097
          %2099 = vrot.lane.b32.xlu0 %v2010, 1
          %v2100 = vpop.permute.xlu0 %2099
          %2101 = vrot.lane.b32.xlu0 %v2015, 1
          %v2102 = vpop.permute.xlu0 %2101
          %2103 = vrot.lane.b32.xlu0 %v2020, 1
          %v2104 = vpop.permute.xlu0 %2103
          %2105 = vrot.lane.b32.xlu0 %v2025, 1
          %v2106 = vpop.permute.xlu0 %2105
          %2107 = vrot.lane.b32.xlu0 %v2030, 1
          %v2108 = vpop.permute.xlu0 %2107
          %2109 = vrot.lane.b32.xlu0 %v2035, 1
          %v2110 = vpop.permute.xlu0 %2109
          %2111 = vrot.lane.b32.xlu0 %v2040, 1
          %v2112 = vpop.permute.xlu0 %2111
          %2113 = vrot.lane.b32.xlu0 %v2045, 1
          %v2114 = vpop.permute.xlu0 %2113
          %2115 = vrot.lane.b32.xlu0 %v2050, 1
          %v2116 = vpop.permute.xlu0 %2115
          %v2117 = vmul.f32 %v1975, %v473
          %v2118 = vmul.f32 %v1980, %v474
          %v2119 = vmul.f32 %v1985, %v475
          %v2120 = vmul.f32 %v1990, %v476
          %v2121 = vmul.f32 %v1995, %v477
          %v2122 = vmul.f32 %v2000, %v478
          %v2123 = vmul.f32 %v2005, %v479
          %v2124 = vmul.f32 %v2010, %v480
          %v2125 = vmul.f32 %v2015, %v481
          %v2126 = vmul.f32 %v2020, %v482
          %v2127 = vmul.f32 %v2025, %v483
          %v2128 = vmul.f32 %v2030, %v484
          %v2129 = vmul.f32 %v2035, %v485
          %v2130 = vmul.f32 %v2040, %v486
          %v2131 = vmul.f32 %v2045, %v487
          %v2132 = vmul.f32 %v2050, %v488
          %v2133 = vmul.f32 %v2054, %v489
          %v2134 = vmul.f32 %v2056, %v490
          %v2135 = vmul.f32 %v2058, %v491
          %v2136 = vmul.f32 %v2060, %v492
          %v2137 = vmul.f32 %v2062, %v493
          %v2138 = vmul.f32 %v2064, %v494
          %v2139 = vmul.f32 %v2066, %v495
          %v2140 = vmul.f32 %v2068, %v496
          %v2141 = vmul.f32 %v2070, %v497
          %v2142 = vmul.f32 %v2072, %v498
          %v2143 = vmul.f32 %v2074, %v499
          %v2144 = vmul.f32 %v2076, %v500
          %v2145 = vmul.f32 %v2078, %v501
          %v2146 = vmul.f32 %v2080, %v502
          %v2147 = vmul.f32 %v2082, %v503
          %v2148 = vmul.f32 %v2084, %v504
          %v2149 = vadd.f32 %v2117, %v2133
          %v2150 = vadd.f32 %v2118, %v2134
          %v2151 = vadd.f32 %v2119, %v2135
          %v2152 = vadd.f32 %v2120, %v2136
          %v2153 = vadd.f32 %v2121, %v2137
          %v2154 = vadd.f32 %v2122, %v2138
          %v2155 = vadd.f32 %v2123, %v2139
          %v2156 = vadd.f32 %v2124, %v2140
          %v2157 = vadd.f32 %v2125, %v2141
          %v2158 = vadd.f32 %v2126, %v2142
          %v2159 = vadd.f32 %v2127, %v2143
          %v2160 = vadd.f32 %v2128, %v2144
          %v2161 = vadd.f32 %v2129, %v2145
          %v2162 = vadd.f32 %v2130, %v2146
          %v2163 = vadd.f32 %v2131, %v2147
          %v2164 = vadd.f32 %v2132, %v2148
          %v2165 = vmul.f32 %v2086, %v505
          %v2166 = vmul.f32 %v2088, %v506
          %v2167 = vmul.f32 %v2090, %v507
          %v2168 = vmul.f32 %v2092, %v508
          %v2169 = vmul.f32 %v2094, %v509
          %v2170 = vmul.f32 %v2096, %v510
          %v2171 = vmul.f32 %v2098, %v511
          %v2172 = vmul.f32 %v2100, %v512
          %v2173 = vmul.f32 %v2102, %v513
          %v2174 = vmul.f32 %v2104, %v514
          %v2175 = vmul.f32 %v2106, %v515
          %v2176 = vmul.f32 %v2108, %v516
          %v2177 = vmul.f32 %v2110, %v517
          %v2178 = vmul.f32 %v2112, %v518
          %v2179 = vmul.f32 %v2114, %v519
          %v2180 = vmul.f32 %v2116, %v520
          %v2181 = vadd.f32 %v2149, %v2165
          %v2182 = vadd.f32 %v2150, %v2166
          %v2183 = vadd.f32 %v2151, %v2167
          %v2184 = vadd.f32 %v2152, %v2168
          %v2185 = vadd.f32 %v2153, %v2169
          %v2186 = vadd.f32 %v2154, %v2170
          %v2187 = vadd.f32 %v2155, %v2171
          %v2188 = vadd.f32 %v2156, %v2172
          %v2189 = vadd.f32 %v2157, %v2173
          %v2190 = vadd.f32 %v2158, %v2174
          %v2191 = vadd.f32 %v2159, %v2175
          %v2192 = vadd.f32 %v2160, %v2176
          %v2193 = vadd.f32 %v2161, %v2177
          %v2194 = vadd.f32 %v2162, %v2178
          %v2195 = vadd.f32 %v2163, %v2179
          %v2196 = vadd.f32 %v2164, %v2180
          %s2197 = scalar_lea.vmem [#allocation2], 384
          %2198 = vst.msk [vmem:[%s2197] sm:$0xff] %vm870, %v2181
          %2199 = vst.msk [vmem:[%s2197 + $0x8] sm:$0xff] %vm870, %v2182
          %2200 = vst.msk [vmem:[%s2197 + $0x10] sm:$0xff] %vm870, %v2183
          %2201 = vst.msk [vmem:[%s2197 + $0x18] sm:$0xff] %vm870, %v2184
          %2202 = vst.msk [vmem:[%s2197 + $0x20] sm:$0xff] %vm870, %v2185
          %2203 = vst.msk [vmem:[%s2197 + $0x28] sm:$0xff] %vm870, %v2186
          %2204 = vst.msk [vmem:[%s2197 + $0x30] sm:$0xff] %vm870, %v2187
          %2205 = vst.msk [vmem:[%s2197 + $0x38] sm:$0xff] %vm870, %v2188
          %2206 = vst.msk [vmem:[%s2197 + $0x40] sm:$0xff] %vm870, %v2189
          %2207 = vst.msk [vmem:[%s2197 + $0x48] sm:$0xff] %vm870, %v2190
          %2208 = vst.msk [vmem:[%s2197 + $0x50] sm:$0xff] %vm870, %v2191
          %2209 = vst.msk [vmem:[%s2197 + $0x58] sm:$0xff] %vm870, %v2192
          %2210 = vst.msk [vmem:[%s2197 + $0x60] sm:$0xff] %vm870, %v2193
          %2211 = vst.msk [vmem:[%s2197 + $0x68] sm:$0xff] %vm870, %v2194
          %2212 = vst.msk [vmem:[%s2197 + $0x70] sm:$0xff] %vm870, %v2195
          %2213 = vst.msk [vmem:[%s2197 + $0x78] sm:$0xff] %vm870, %v2196
          %v2214 = vmul.f32 %v2181, %v890
          %v2215 = vmul.f32 %v2182, %v895
          %v2216 = vmul.f32 %v2183, %v900
          %v2217 = vmul.f32 %v2184, %v905
          %v2218 = vmul.f32 %v2185, %v910
          %v2219 = vmul.f32 %v2186, %v915
          %v2220 = vmul.f32 %v2187, %v920
          %v2221 = vmul.f32 %v2188, %v925
          %v2222 = vmul.f32 %v2189, %v930
          %v2223 = vmul.f32 %v2190, %v935
          %v2224 = vmul.f32 %v2191, %v940
          %v2225 = vmul.f32 %v2192, %v945
          %v2226 = vmul.f32 %v2193, %v950
          %v2227 = vmul.f32 %v2194, %v955
          %v2228 = vmul.f32 %v2195, %v960
          %v2229 = vmul.f32 %v2196, %v965
          %2246 = vrot.lane.b32.xlu0 %v2214, 64
          %v2247 = vpop.permute.xlu0 %2246
          %2248 = vrot.lane.b32.xlu0 %v2215, 64
          %v2249 = vpop.permute.xlu0 %2248
          %2250 = vrot.lane.b32.xlu0 %v2216, 64
          %v2251 = vpop.permute.xlu0 %2250
          %2252 = vrot.lane.b32.xlu0 %v2217, 64
          %v2253 = vpop.permute.xlu0 %2252
          %2254 = vrot.lane.b32.xlu0 %v2218, 64
          %v2255 = vpop.permute.xlu0 %2254
          %2256 = vrot.lane.b32.xlu0 %v2219, 64
          %v2257 = vpop.permute.xlu0 %2256
          %2258 = vrot.lane.b32.xlu0 %v2220, 64
          %v2259 = vpop.permute.xlu0 %2258
          %2260 = vrot.lane.b32.xlu0 %v2221, 64
          %v2261 = vpop.permute.xlu0 %2260
          %2262 = vrot.lane.b32.xlu0 %v2222, 64
          %v2263 = vpop.permute.xlu0 %2262
          %2264 = vrot.lane.b32.xlu0 %v2223, 64
          %v2265 = vpop.permute.xlu0 %2264
          %2266 = vrot.lane.b32.xlu0 %v2224, 64
          %v2267 = vpop.permute.xlu0 %2266
          %2268 = vrot.lane.b32.xlu0 %v2225, 64
          %v2269 = vpop.permute.xlu0 %2268
          %2270 = vrot.lane.b32.xlu0 %v2226, 64
          %v2271 = vpop.permute.xlu0 %2270
          %2272 = vrot.lane.b32.xlu0 %v2227, 64
          %v2273 = vpop.permute.xlu0 %2272
          %2274 = vrot.lane.b32.xlu0 %v2228, 64
          %v2275 = vpop.permute.xlu0 %2274
          %2276 = vrot.lane.b32.xlu0 %v2229, 64
          %v2277 = vpop.permute.xlu0 %2276
          %s2294 = scalar_lea.vmem [#allocation3], 384
          %2295 = vst.msk [vmem:[%s2294] sm:$0xff] %vm870, %v2247
          %2296 = vst.msk [vmem:[%s2294 + $0x8] sm:$0xff] %vm870, %v2249
          %2297 = vst.msk [vmem:[%s2294 + $0x10] sm:$0xff] %vm870, %v2251
          %2298 = vst.msk [vmem:[%s2294 + $0x18] sm:$0xff] %vm870, %v2253
          %2299 = vst.msk [vmem:[%s2294 + $0x20] sm:$0xff] %vm870, %v2255
          %2300 = vst.msk [vmem:[%s2294 + $0x28] sm:$0xff] %vm870, %v2257
          %2301 = vst.msk [vmem:[%s2294 + $0x30] sm:$0xff] %vm870, %v2259
          %2302 = vst.msk [vmem:[%s2294 + $0x38] sm:$0xff] %vm870, %v2261
          %2303 = vst.msk [vmem:[%s2294 + $0x40] sm:$0xff] %vm870, %v2263
          %2304 = vst.msk [vmem:[%s2294 + $0x48] sm:$0xff] %vm870, %v2265
          %2305 = vst.msk [vmem:[%s2294 + $0x50] sm:$0xff] %vm870, %v2267
          %2306 = vst.msk [vmem:[%s2294 + $0x58] sm:$0xff] %vm870, %v2269
          %2307 = vst.msk [vmem:[%s2294 + $0x60] sm:$0xff] %vm870, %v2271
          %2308 = vst.msk [vmem:[%s2294 + $0x68] sm:$0xff] %vm870, %v2273
          %2309 = vst.msk [vmem:[%s2294 + $0x70] sm:$0xff] %vm870, %v2275
          %2310 = vst.msk [vmem:[%s2294 + $0x78] sm:$0xff] %vm870, %v2277
          %v2311 = vld [vmem:[#allocation17] sm:$0x1]
          %v2312 = vsub.f32 1.0, %v2311
          %v2313 = vmul.f32 %v2312, 1.25e+11
          %2314 = vst [vmem:[#allocation4] sm:$0x1] %v2313
        $region88: #{tpu_custom_call.1} parent=51 // pred_fallthru
          _
        %s2315 = smul.u32 %s32, 128
        %v2316 = vlaneseq
        %v2317 = vshrl.u32 %v2316, 7
        %v2318 = vadd.s32 %v2317, 8
        %v2319 = vadd.s32 %v2317, 16
        %v2320 = vadd.s32 %v2317, 24
        %v2321 = vadd.s32 %v2317, 32
        %v2322 = vadd.s32 %v2317, 40
        %v2323 = vadd.s32 %v2317, 48
        %v2324 = vadd.s32 %v2317, 56
        %v2325 = vadd.s32 %v2317, 64
        %v2326 = vadd.s32 %v2317, 72
        %v2327 = vadd.s32 %v2317, 80
        %v2328 = vadd.s32 %v2317, 88
        %v2329 = vadd.s32 %v2317, 96
        %v2330 = vadd.s32 %v2317, 104
        %v2331 = vadd.s32 %v2317, 112
        %v2332 = vadd.s32 %v2317, 120
        %v2333 = vstv %s2315
        %v2334 = vadd.s32 %v2333, %v2317
        %v2335 = vadd.s32 %v2333, %v2318
        %v2336 = vadd.s32 %v2333, %v2319
        %v2337 = vadd.s32 %v2333, %v2320
        %v2338 = vadd.s32 %v2333, %v2321
        %v2339 = vadd.s32 %v2333, %v2322
        %v2340 = vadd.s32 %v2333, %v2323
        %v2341 = vadd.s32 %v2333, %v2324
        %v2342 = vadd.s32 %v2333, %v2325
        %v2343 = vadd.s32 %v2333, %v2326
        %v2344 = vadd.s32 %v2333, %v2327
        %v2345 = vadd.s32 %v2333, %v2328
        %v2346 = vadd.s32 %v2333, %v2329
        %v2347 = vadd.s32 %v2333, %v2330
        %v2348 = vadd.s32 %v2333, %v2331
        %v2349 = vadd.s32 %v2333, %v2332
        %v2350 = vlaneseq
        %v2351 = vand.u32 %v2350, 127
        %v2352 = vld [vmem:[#allocation4] sm:$0x1]
        %vm2353 = vcmp.gt.s32.totalorder %v2334, %v2351
        %vm2354 = vcmp.gt.s32.totalorder %v2335, %v2351
        %vm2355 = vcmp.gt.s32.totalorder %v2336, %v2351
        %vm2356 = vcmp.gt.s32.totalorder %v2337, %v2351
        %vm2357 = vcmp.gt.s32.totalorder %v2338, %v2351
        %vm2358 = vcmp.gt.s32.totalorder %v2339, %v2351
        %vm2359 = vcmp.gt.s32.totalorder %v2340, %v2351
        %vm2360 = vcmp.gt.s32.totalorder %v2341, %v2351
        %vm2361 = vcmp.gt.s32.totalorder %v2342, %v2351
        %vm2362 = vcmp.gt.s32.totalorder %v2343, %v2351
        %vm2363 = vcmp.gt.s32.totalorder %v2344, %v2351
        %vm2364 = vcmp.gt.s32.totalorder %v2345, %v2351
        %vm2365 = vcmp.gt.s32.totalorder %v2346, %v2351
        %vm2366 = vcmp.gt.s32.totalorder %v2347, %v2351
        %vm2367 = vcmp.gt.s32.totalorder %v2348, %v2351
        %vm2368 = vcmp.gt.s32.totalorder %v2349, %v2351
        %v2369 = vsel %vm2353, 1, 0
        %v2370 = vsel %vm2354, 1, 0
        %v2371 = vsel %vm2355, 1, 0
        %v2372 = vsel %vm2356, 1, 0
        %v2373 = vsel %vm2357, 1, 0
        %v2374 = vsel %vm2358, 1, 0
        %v2375 = vsel %vm2359, 1, 0
        %v2376 = vsel %vm2360, 1, 0
        %v2377 = vsel %vm2361, 1, 0
        %v2378 = vsel %vm2362, 1, 0
        %v2379 = vsel %vm2363, 1, 0
        %v2380 = vsel %vm2364, 1, 0
        %v2381 = vsel %vm2365, 1, 0
        %v2382 = vsel %vm2366, 1, 0
        %v2383 = vsel %vm2367, 1, 0
        %v2384 = vsel %vm2368, 1, 0
        %v2385 = vcvt.s32.f32 %v2369
        %v2386 = vcvt.s32.f32 %v2370
        %v2387 = vcvt.s32.f32 %v2371
        %v2388 = vcvt.s32.f32 %v2372
        %v2389 = vcvt.s32.f32 %v2373
        %v2390 = vcvt.s32.f32 %v2374
        %v2391 = vcvt.s32.f32 %v2375
        %v2392 = vcvt.s32.f32 %v2376
        %v2393 = vcvt.s32.f32 %v2377
        %v2394 = vcvt.s32.f32 %v2378
        %v2395 = vcvt.s32.f32 %v2379
        %v2396 = vcvt.s32.f32 %v2380
        %v2397 = vcvt.s32.f32 %v2381
        %v2398 = vcvt.s32.f32 %v2382
        %v2399 = vcvt.s32.f32 %v2383
        %v2400 = vcvt.s32.f32 %v2384
        %v2401 = vmul.f32 %v2385, 1.25e+11
        %v2402 = vmul.f32 %v2386, 1.25e+11
        %v2403 = vmul.f32 %v2387, 1.25e+11
        %v2404 = vmul.f32 %v2388, 1.25e+11
        %v2405 = vmul.f32 %v2389, 1.25e+11
        %v2406 = vmul.f32 %v2390, 1.25e+11
        %v2407 = vmul.f32 %v2391, 1.25e+11
        %v2408 = vmul.f32 %v2392, 1.25e+11
        %v2409 = vmul.f32 %v2393, 1.25e+11
        %v2410 = vmul.f32 %v2394, 1.25e+11
        %v2411 = vmul.f32 %v2395, 1.25e+11
        %v2412 = vmul.f32 %v2396, 1.25e+11
        %v2413 = vmul.f32 %v2397, 1.25e+11
        %v2414 = vmul.f32 %v2398, 1.25e+11
        %v2415 = vmul.f32 %v2399, 1.25e+11
        %v2416 = vmul.f32 %v2400, 1.25e+11
        %v2418 = vlaneseq
        %v2419 = vshrl.u32 %v2418, 7
        %v2420 = vsub.s32 0, %v2419
        %v2421 = vrot.slane %v2352, %v2420
        %v2423 = vadd.f32 %v2421, %v2401
        %v2424 = vadd.f32 %v2421, %v2402
        %v2425 = vadd.f32 %v2421, %v2403
        %v2426 = vadd.f32 %v2421, %v2404
        %v2427 = vadd.f32 %v2421, %v2405
        %v2428 = vadd.f32 %v2421, %v2406
        %v2429 = vadd.f32 %v2421, %v2407
        %v2430 = vadd.f32 %v2421, %v2408
        %v2431 = vadd.f32 %v2421, %v2409
        %v2432 = vadd.f32 %v2421, %v2410
        %v2433 = vadd.f32 %v2421, %v2411
        %v2434 = vadd.f32 %v2421, %v2412
        %v2435 = vadd.f32 %v2421, %v2413
        %v2436 = vadd.f32 %v2421, %v2414
        %v2437 = vadd.f32 %v2421, %v2415
        %v2438 = vadd.f32 %v2421, %v2416
        %s2439 = scalar_lea.vmem [#allocation2], %s2315
        %v2440 = vld [vmem:[%s2439] sm:$0xff]
        %v2441 = vld [vmem:[%s2439 + $0x8] sm:$0xff]
        %v2442 = vld [vmem:[%s2439 + $0x10] sm:$0xff]
        %v2443 = vld [vmem:[%s2439 + $0x18] sm:$0xff]
        %v2444 = vld [vmem:[%s2439 + $0x20] sm:$0xff]
        %v2445 = vld [vmem:[%s2439 + $0x28] sm:$0xff]
        %v2446 = vld [vmem:[%s2439 + $0x30] sm:$0xff]
        %v2447 = vld [vmem:[%s2439 + $0x38] sm:$0xff]
        %v2448 = vld [vmem:[%s2439 + $0x40] sm:$0xff]
        %v2449 = vld [vmem:[%s2439 + $0x48] sm:$0xff]
        %v2450 = vld [vmem:[%s2439 + $0x50] sm:$0xff]
        %v2451 = vld [vmem:[%s2439 + $0x58] sm:$0xff]
        %v2452 = vld [vmem:[%s2439 + $0x60] sm:$0xff]
        %v2453 = vld [vmem:[%s2439 + $0x68] sm:$0xff]
        %v2454 = vld [vmem:[%s2439 + $0x70] sm:$0xff]
        %v2455 = vld [vmem:[%s2439 + $0x78] sm:$0xff]
        %v2456 = vld [vmem:[%s2439 + $0x80] sm:$0xff]
        %v2457 = vld [vmem:[%s2439 + $0x88] sm:$0xff]
        %v2458 = vld [vmem:[%s2439 + $0x90] sm:$0xff]
        %v2459 = vld [vmem:[%s2439 + $0x98] sm:$0xff]
        %v2460 = vld [vmem:[%s2439 + $0xa0] sm:$0xff]
        %v2461 = vld [vmem:[%s2439 + $0xa8] sm:$0xff]
        %v2462 = vld [vmem:[%s2439 + $0xb0] sm:$0xff]
        %v2463 = vld [vmem:[%s2439 + $0xb8] sm:$0xff]
        %v2464 = vld [vmem:[%s2439 + $0xc0] sm:$0xff]
        %v2465 = vld [vmem:[%s2439 + $0xc8] sm:$0xff]
        %v2466 = vld [vmem:[%s2439 + $0xd0] sm:$0xff]
        %v2467 = vld [vmem:[%s2439 + $0xd8] sm:$0xff]
        %v2468 = vld [vmem:[%s2439 + $0xe0] sm:$0xff]
        %v2469 = vld [vmem:[%s2439 + $0xe8] sm:$0xff]
        %v2470 = vld [vmem:[%s2439 + $0xf0] sm:$0xff]
        %v2471 = vld [vmem:[%s2439 + $0xf8] sm:$0xff]
        %v2472 = vld [vmem:[%s2439 + $0x100] sm:$0xff]
        %v2473 = vld [vmem:[%s2439 + $0x108] sm:$0xff]
        %v2474 = vld [vmem:[%s2439 + $0x110] sm:$0xff]
        %v2475 = vld [vmem:[%s2439 + $0x118] sm:$0xff]
        %v2476 = vld [vmem:[%s2439 + $0x120] sm:$0xff]
        %v2477 = vld [vmem:[%s2439 + $0x128] sm:$0xff]
        %v2478 = vld [vmem:[%s2439 + $0x130] sm:$0xff]
        %v2479 = vld [vmem:[%s2439 + $0x138] sm:$0xff]
        %v2480 = vld [vmem:[%s2439 + $0x140] sm:$0xff]
        %v2481 = vld [vmem:[%s2439 + $0x148] sm:$0xff]
        %v2482 = vld [vmem:[%s2439 + $0x150] sm:$0xff]
        %v2483 = vld [vmem:[%s2439 + $0x158] sm:$0xff]
        %v2484 = vld [vmem:[%s2439 + $0x160] sm:$0xff]
        %v2485 = vld [vmem:[%s2439 + $0x168] sm:$0xff]
        %v2486 = vld [vmem:[%s2439 + $0x170] sm:$0xff]
        %v2487 = vld [vmem:[%s2439 + $0x178] sm:$0xff]
        %v2488 = vld [vmem:[%s2439 + $0x180] sm:$0xff]
        %v2489 = vld [vmem:[%s2439 + $0x188] sm:$0xff]
        %v2490 = vld [vmem:[%s2439 + $0x190] sm:$0xff]
        %v2491 = vld [vmem:[%s2439 + $0x198] sm:$0xff]
        %v2492 = vld [vmem:[%s2439 + $0x1a0] sm:$0xff]
        %v2493 = vld [vmem:[%s2439 + $0x1a8] sm:$0xff]
        %v2494 = vld [vmem:[%s2439 + $0x1b0] sm:$0xff]
        %v2495 = vld [vmem:[%s2439 + $0x1b8] sm:$0xff]
        %v2496 = vld [vmem:[%s2439 + $0x1c0] sm:$0xff]
        %v2497 = vld [vmem:[%s2439 + $0x1c8] sm:$0xff]
        %v2498 = vld [vmem:[%s2439 + $0x1d0] sm:$0xff]
        %v2499 = vld [vmem:[%s2439 + $0x1d8] sm:$0xff]
        %v2500 = vld [vmem:[%s2439 + $0x1e0] sm:$0xff]
        %v2501 = vld [vmem:[%s2439 + $0x1e8] sm:$0xff]
        %v2502 = vld [vmem:[%s2439 + $0x1f0] sm:$0xff]
        %v2503 = vld [vmem:[%s2439 + $0x1f8] sm:$0xff]
        %v2504 = vld [vmem:[#allocation3] sm:$0xff]
        %v2505 = vld [vmem:[#allocation3 + $0x8] sm:$0xff]
        %v2506 = vld [vmem:[#allocation3 + $0x10] sm:$0xff]
        %v2507 = vld [vmem:[#allocation3 + $0x18] sm:$0xff]
        %v2508 = vld [vmem:[#allocation3 + $0x20] sm:$0xff]
        %v2509 = vld [vmem:[#allocation3 + $0x28] sm:$0xff]
        %v2510 = vld [vmem:[#allocation3 + $0x30] sm:$0xff]
        %v2511 = vld [vmem:[#allocation3 + $0x38] sm:$0xff]
        %v2512 = vld [vmem:[#allocation3 + $0x40] sm:$0xff]
        %v2513 = vld [vmem:[#allocation3 + $0x48] sm:$0xff]
        %v2514 = vld [vmem:[#allocation3 + $0x50] sm:$0xff]
        %v2515 = vld [vmem:[#allocation3 + $0x58] sm:$0xff]
        %v2516 = vld [vmem:[#allocation3 + $0x60] sm:$0xff]
        %v2517 = vld [vmem:[#allocation3 + $0x68] sm:$0xff]
        %v2518 = vld [vmem:[#allocation3 + $0x70] sm:$0xff]
        %v2519 = vld [vmem:[#allocation3 + $0x78] sm:$0xff]
        %v2520 = vld [vmem:[#allocation3 + $0x80] sm:$0xff]
        %v2521 = vld [vmem:[#allocation3 + $0x88] sm:$0xff]
        %v2522 = vld [vmem:[#allocation3 + $0x90] sm:$0xff]
        %v2523 = vld [vmem:[#allocation3 + $0x98] sm:$0xff]
        %v2524 = vld [vmem:[#allocation3 + $0xa0] sm:$0xff]
        %v2525 = vld [vmem:[#allocation3 + $0xa8] sm:$0xff]
        %v2526 = vld [vmem:[#allocation3 + $0xb0] sm:$0xff]
        %v2527 = vld [vmem:[#allocation3 + $0xb8] sm:$0xff]
        %v2528 = vld [vmem:[#allocation3 + $0xc0] sm:$0xff]
        %v2529 = vld [vmem:[#allocation3 + $0xc8] sm:$0xff]
        %v2530 = vld [vmem:[#allocation3 + $0xd0] sm:$0xff]
        %v2531 = vld [vmem:[#allocation3 + $0xd8] sm:$0xff]
        %v2532 = vld [vmem:[#allocation3 + $0xe0] sm:$0xff]
        %v2533 = vld [vmem:[#allocation3 + $0xe8] sm:$0xff]
        %v2534 = vld [vmem:[#allocation3 + $0xf0] sm:$0xff]
        %v2535 = vld [vmem:[#allocation3 + $0xf8] sm:$0xff]
        %v2536 = vld [vmem:[#allocation3 + $0x100] sm:$0xff]
        %v2537 = vld [vmem:[#allocation3 + $0x108] sm:$0xff]
        %v2538 = vld [vmem:[#allocation3 + $0x110] sm:$0xff]
        %v2539 = vld [vmem:[#allocation3 + $0x118] sm:$0xff]
        %v2540 = vld [vmem:[#allocation3 + $0x120] sm:$0xff]
        %v2541 = vld [vmem:[#allocation3 + $0x128] sm:$0xff]
        %v2542 = vld [vmem:[#allocation3 + $0x130] sm:$0xff]
        %v2543 = vld [vmem:[#allocation3 + $0x138] sm:$0xff]
        %v2544 = vld [vmem:[#allocation3 + $0x140] sm:$0xff]
        %v2545 = vld [vmem:[#allocation3 + $0x148] sm:$0xff]
        %v2546 = vld [vmem:[#allocation3 + $0x150] sm:$0xff]
        %v2547 = vld [vmem:[#allocation3 + $0x158] sm:$0xff]
        %v2548 = vld [vmem:[#allocation3 + $0x160] sm:$0xff]
        %v2549 = vld [vmem:[#allocation3 + $0x168] sm:$0xff]
        %v2550 = vld [vmem:[#allocation3 + $0x170] sm:$0xff]
        %v2551 = vld [vmem:[#allocation3 + $0x178] sm:$0xff]
        %v2552 = vld [vmem:[#allocation3 + $0x180] sm:$0xff]
        %v2553 = vld [vmem:[#allocation3 + $0x188] sm:$0xff]
        %v2554 = vld [vmem:[#allocation3 + $0x190] sm:$0xff]
        %v2555 = vld [vmem:[#allocation3 + $0x198] sm:$0xff]
        %v2556 = vld [vmem:[#allocation3 + $0x1a0] sm:$0xff]
        %v2557 = vld [vmem:[#allocation3 + $0x1a8] sm:$0xff]
        %v2558 = vld [vmem:[#allocation3 + $0x1b0] sm:$0xff]
        %v2559 = vld [vmem:[#allocation3 + $0x1b8] sm:$0xff]
        %v2560 = vld [vmem:[#allocation3 + $0x1c0] sm:$0xff]
        %v2561 = vld [vmem:[#allocation3 + $0x1c8] sm:$0xff]
        %v2562 = vld [vmem:[#allocation3 + $0x1d0] sm:$0xff]
        %v2563 = vld [vmem:[#allocation3 + $0x1d8] sm:$0xff]
        %v2564 = vld [vmem:[#allocation3 + $0x1e0] sm:$0xff]
        %v2565 = vld [vmem:[#allocation3 + $0x1e8] sm:$0xff]
        %v2566 = vld [vmem:[#allocation3 + $0x1f0] sm:$0xff]
        %v2567 = vld [vmem:[#allocation3 + $0x1f8] sm:$0xff]
        %vm2568 = vcmask 523264
        %v2570 = vsel %vm2568, %v2440, 0
        %v2573 = vsel %vm2568, %v2441, 0
        %v2576 = vsel %vm2568, %v2442, 0
        %v2579 = vsel %vm2568, %v2443, 0
        %v2582 = vsel %vm2568, %v2444, 0
        %v2585 = vsel %vm2568, %v2445, 0
        %v2588 = vsel %vm2568, %v2446, 0
        %v2591 = vsel %vm2568, %v2447, 0
        %v2594 = vsel %vm2568, %v2448, 0
        %v2597 = vsel %vm2568, %v2449, 0
        %v2600 = vsel %vm2568, %v2450, 0
        %v2603 = vsel %vm2568, %v2451, 0
        %v2606 = vsel %vm2568, %v2452, 0
        %v2609 = vsel %vm2568, %v2453, 0
        %v2612 = vsel %vm2568, %v2454, 0
        %v2615 = vsel %vm2568, %v2455, 0
        %v2618 = vsel %vm2568, %v2504, 0
        %v2621 = vsel %vm2568, %v2505, 0
        %v2624 = vsel %vm2568, %v2506, 0
        %v2627 = vsel %vm2568, %v2507, 0
        %v2630 = vsel %vm2568, %v2508, 0
        %v2633 = vsel %vm2568, %v2509, 0
        %v2636 = vsel %vm2568, %v2510, 0
        %v2639 = vsel %vm2568, %v2511, 0
        %v2642 = vsel %vm2568, %v2512, 0
        %v2645 = vsel %vm2568, %v2513, 0
        %v2648 = vsel %vm2568, %v2514, 0
        %v2651 = vsel %vm2568, %v2515, 0
        %v2654 = vsel %vm2568, %v2516, 0
        %v2657 = vsel %vm2568, %v2517, 0
        %v2660 = vsel %vm2568, %v2518, 0
        %v2663 = vsel %vm2568, %v2519, 0
        %2665 = vmatprep.subr.mxu0 0.0
        %2666 = vmatpush1.xpose.msra.mxu0 %v2618
        %2667 = vmatprep.subr.mxu0 0.0
        %2668 = vmatpush1.xpose.msra.mxu0 %v2621
        %2669 = vmatprep.subr.mxu0 0.0
        %2670 = vmatpush1.xpose.msra.mxu0 %v2624
        %2671 = vmatprep.subr.mxu0 0.0
        %2672 = vmatpush1.xpose.msra.mxu0 %v2627
        %2673 = vmatprep.subr.mxu0 0.0
        %2674 = vmatpush1.xpose.msra.mxu0 %v2630
        %2675 = vmatprep.subr.mxu0 0.0
        %2676 = vmatpush1.xpose.msra.mxu0 %v2633
        %2677 = vmatprep.subr.mxu0 0.0
        %2678 = vmatpush1.xpose.msra.mxu0 %v2636
        %2679 = vmatprep.subr.mxu0 0.0
        %2680 = vmatpush1.xpose.msra.mxu0 %v2639
        %2681 = vmatprep.subr.mxu0 0.0
        %2682 = vmatpush1.xpose.msra.mxu0 %v2642
        %2683 = vmatprep.subr.mxu0 0.0
        %2684 = vmatpush1.xpose.msra.mxu0 %v2645
        %2685 = vmatprep.subr.mxu0 0.0
        %2686 = vmatpush1.xpose.msra.mxu0 %v2648
        %2687 = vmatprep.subr.mxu0 0.0
        %2688 = vmatpush1.xpose.msra.mxu0 %v2651
        %2689 = vmatprep.subr.mxu0 0.0
        %2690 = vmatpush1.xpose.msra.mxu0 %v2654
        %2691 = vmatprep.subr.mxu0 0.0
        %2692 = vmatpush1.xpose.msra.mxu0 %v2657
        %2693 = vmatprep.subr.mxu0 0.0
        %2694 = vmatpush1.xpose.msra.mxu0 %v2660
        %2695 = vmatprep.subr.mxu0 0.0
        %2696 = vmatpush1.xpose.msra.mxu0 %v2663
        %2697 = vmatprep.subr.mxu0 0.0
        %2698 = vmatpush1.xpose.msra.mxu0 0.0
        %2699 = vmatprep.subr.mxu0 0.0
        %2700 = vmatpush1.xpose.msra.mxu0 0.0
        %2701 = vmatprep.subr.mxu0 0.0
        %2702 = vmatpush1.xpose.msra.mxu0 0.0
        %2703 = vmatprep.subr.mxu0 0.0
        %2704 = vmatpush1.xpose.msra.mxu0 0.0
        %2705 = vmatprep.subr.mxu0 0.0
        %2706 = vmatpush1.xpose.msra.mxu0 0.0
        %2707 = vmatprep.subr.mxu0 0.0
        %2708 = vmatpush1.xpose.msra.mxu0 0.0
        %2709 = vmatprep.subr.mxu0 0.0
        %2710 = vmatpush1.xpose.msra.mxu0 0.0
        %2711 = vmatprep.subr.mxu0 0.0
        %2712 = vmatpush1.xpose.msra.mxu0 0.0
        %2713 = vmatprep.subr.mxu0 0.0
        %2714 = vmatpush1.xpose.msra.mxu0 0.0
        %2715 = vmatprep.subr.mxu0 0.0
        %2716 = vmatpush1.xpose.msra.mxu0 0.0
        %2717 = vmatprep.subr.mxu0 0.0
        %2718 = vmatpush1.xpose.msra.mxu0 0.0
        %2719 = vmatprep.subr.mxu0 0.0
        %2720 = vmatpush1.xpose.msra.mxu0 0.0
        %2721 = vmatprep.subr.mxu0 0.0
        %2722 = vmatpush1.xpose.msra.mxu0 0.0
        %2723 = vmatprep.subr.mxu0 0.0
        %2724 = vmatpush1.xpose.msra.mxu0 0.0
        %2725 = vmatprep.subr.mxu0 0.0
        %2726 = vmatpush1.xpose.msra.mxu0 0.0
        %2727 = vmatprep.subr.mxu0 0.0
        %2728 = vmatpush1.xpose.msra.mxu0 0.0
        %2729 = vmatprep.mubr.f32.mxu0 0.0
        %2730 = vmatmul.mubr.f32.gmra.mrb[0].mxu0 %v2570
        %v2731 = vpop.f32.mrb[0].mxu0
        %v2732 = vadd.f32 0.0, %v2731
        %v2733 = vpop.f32.mrb[0].mxu0
        %2734 = vmatprep.mubr.f32.mxu0 0.0
        %2735 = vmatmul.mubr.f32.gmra.mrb[0].mxu0 %v2573
        %v2736 = vpop.f32.mrb[0].mxu0
        %v2737 = vadd.f32 0.0, %v2736
        %v2738 = vpop.f32.mrb[0].mxu0
        %2739 = vmatprep.mubr.f32.mxu0 0.0
        %2740 = vmatmul.mubr.f32.gmra.mrb[0].mxu0 %v2576
        %v2741 = vpop.f32.mrb[0].mxu0
        %v2742 = vadd.f32 0.0, %v2741
        %v2743 = vpop.f32.mrb[0].mxu0
        %2744 = vmatprep.mubr.f32.mxu0 0.0
        %2745 = vmatmul.mubr.f32.gmra.mrb[0].mxu0 %v2579
        %v2746 = vpop.f32.mrb[0].mxu0
        %v2747 = vadd.f32 0.0, %v2746
        %v2748 = vpop.f32.mrb[0].mxu0
        %2749 = vmatprep.mubr.f32.mxu0 0.0
        %2750 = vmatmul.mubr.f32.gmra.mrb[0].mxu0 %v2582
        %v2751 = vpop.f32.mrb[0].mxu0
        %v2752 = vadd.f32 0.0, %v2751
        %v2753 = vpop.f32.mrb[0].mxu0
        %2754 = vmatprep.mubr.f32.mxu0 0.0
        %2755 = vmatmul.mubr.f32.gmra.mrb[0].mxu0 %v2585
        %v2756 = vpop.f32.mrb[0].mxu0
        %v2757 = vadd.f32 0.0, %v2756
        %v2758 = vpop.f32.mrb[0].mxu0
        %2759 = vmatprep.mubr.f32.mxu0 0.0
        %2760 = vmatmul.mubr.f32.gmra.mrb[0].mxu0 %v2588
        %v2761 = vpop.f32.mrb[0].mxu0
        %v2762 = vadd.f32 0.0, %v2761
        %v2763 = vpop.f32.mrb[0].mxu0
        %2764 = vmatprep.mubr.f32.mxu0 0.0
        %2765 = vmatmul.mubr.f32.gmra.mrb[0].mxu0 %v2591
        %v2766 = vpop.f32.mrb[0].mxu0
        %v2767 = vadd.f32 0.0, %v2766
        %v2768 = vpop.f32.mrb[0].mxu0
        %2769 = vmatprep.mubr.f32.mxu0 0.0
        %2770 = vmatmul.mubr.f32.gmra.mrb[0].mxu0 %v2594
        %v2771 = vpop.f32.mrb[0].mxu0
        %v2772 = vadd.f32 0.0, %v2771
        %v2773 = vpop.f32.mrb[0].mxu0
        %2774 = vmatprep.mubr.f32.mxu0 0.0
        %2775 = vmatmul.mubr.f32.gmra.mrb[0].mxu0 %v2597
        %v2776 = vpop.f32.mrb[0].mxu0
        %v2777 = vadd.f32 0.0, %v2776
        %v2778 = vpop.f32.mrb[0].mxu0
        %2779 = vmatprep.mubr.f32.mxu0 0.0
        %2780 = vmatmul.mubr.f32.gmra.mrb[0].mxu0 %v2600
        %v2781 = vpop.f32.mrb[0].mxu0
        %v2782 = vadd.f32 0.0, %v2781
        %v2783 = vpop.f32.mrb[0].mxu0
        %2784 = vmatprep.mubr.f32.mxu0 0.0
        %2785 = vmatmul.mubr.f32.gmra.mrb[0].mxu0 %v2603
        %v2786 = vpop.f32.mrb[0].mxu0
        %v2787 = vadd.f32 0.0, %v2786
        %v2788 = vpop.f32.mrb[0].mxu0
        %2789 = vmatprep.mubr.f32.mxu0 0.0
        %2790 = vmatmul.mubr.f32.gmra.mrb[0].mxu0 %v2606
        %v2791 = vpop.f32.mrb[0].mxu0
        %v2792 = vadd.f32 0.0, %v2791
        %v2793 = vpop.f32.mrb[0].mxu0
        %2794 = vmatprep.mubr.f32.mxu0 0.0
        %2795 = vmatmul.mubr.f32.gmra.mrb[0].mxu0 %v2609
        %v2796 = vpop.f32.mrb[0].mxu0
        %v2797 = vadd.f32 0.0, %v2796
        %v2798 = vpop.f32.mrb[0].mxu0
        %2799 = vmatprep.mubr.f32.mxu0 0.0
        %2800 = vmatmul.mubr.f32.gmra.mrb[0].mxu0 %v2612
        %v2801 = vpop.f32.mrb[0].mxu0
        %v2802 = vadd.f32 0.0, %v2801
        %v2803 = vpop.f32.mrb[0].mxu0
        %2804 = vmatprep.mubr.f32.mxu0 0.0
        %2805 = vmatmul.mubr.f32.gmra.mrb[0].mxu0 %v2615
        %v2806 = vpop.f32.mrb[0].mxu0
        %v2807 = vadd.f32 0.0, %v2806
        %v2808 = vpop.f32.mrb[0].mxu0
        %2809 = vdwg.mxu0
        %v2811 = vsel %vm2568, %v2456, 0
        %v2814 = vsel %vm2568, %v2457, 0
        %v2817 = vsel %vm2568, %v2458, 0
        %v2820 = vsel %vm2568, %v2459, 0
        %v2823 = vsel %vm2568, %v2460, 0
        %v2826 = vsel %vm2568, %v2461, 0
        %v2829 = vsel %vm2568, %v2462, 0
        %v2832 = vsel %vm2568, %v2463, 0
        %v2835 = vsel %vm2568, %v2464, 0
        %v2838 = vsel %vm2568, %v2465, 0
        %v2841 = vsel %vm2568, %v2466, 0
        %v2844 = vsel %vm2568, %v2467, 0
        %v2847 = vsel %vm2568, %v2468, 0
        %v2850 = vsel %vm2568, %v2469, 0
        %v2853 = vsel %vm2568, %v2470, 0
        %v2856 = vsel %vm2568, %v2471, 0
        %v2859 = vsel %vm2568, %v2520, 0
        %v2862 = vsel %vm2568, %v2521, 0
        %v2865 = vsel %vm2568, %v2522, 0
        %v2868 = vsel %vm2568, %v2523, 0
        %v2871 = vsel %vm2568, %v2524, 0
        %v2874 = vsel %vm2568, %v2525, 0
        %v2877 = vsel %vm2568, %v2526, 0
        %v2880 = vsel %vm2568, %v2527, 0
        %v2883 = vsel %vm2568, %v2528, 0
        %v2886 = vsel %vm2568, %v2529, 0
        %v2889 = vsel %vm2568, %v2530, 0
        %v2892 = vsel %vm2568, %v2531, 0
        %v2895 = vsel %vm2568, %v2532, 0
        %v2898 = vsel %vm2568, %v2533, 0
        %v2901 = vsel %vm2568, %v2534, 0
        %v2904 = vsel %vm2568, %v2535, 0
        %2906 = vmatprep.subr.mxu0 0.0
        %2907 = vmatpush1.xpose.msra.mxu0 %v2859
        %2908 = vmatprep.subr.mxu0 0.0
        %2909 = vmatpush1.xpose.msra.mxu0 %v2862
        %2910 = vmatprep.subr.mxu0 0.0
        %2911 = vmatpush1.xpose.msra.mxu0 %v2865
        %2912 = vmatprep.subr.mxu0 0.0
        %2913 = vmatpush1.xpose.msra.mxu0 %v2868
        %2914 = vmatprep.subr.mxu0 0.0
        %2915 = vmatpush1.xpose.msra.mxu0 %v2871
        %2916 = vmatprep.subr.mxu0 0.0
        %2917 = vmatpush1.xpose.msra.mxu0 %v2874
        %2918 = vmatprep.subr.mxu0 0.0
        %2919 = vmatpush1.xpose.msra.mxu0 %v2877
        %2920 = vmatprep.subr.mxu0 0.0
        %2921 = vmatpush1.xpose.msra.mxu0 %v2880
        %2922 = vmatprep.subr.mxu0 0.0
        %2923 = vmatpush1.xpose.msra.mxu0 %v2883
        %2924 = vmatprep.subr.mxu0 0.0
        %2925 = vmatpush1.xpose.msra.mxu0 %v2886
        %2926 = vmatprep.subr.mxu0 0.0
        %2927 = vmatpush1.xpose.msra.mxu0 %v2889
        %2928 = vmatprep.subr.mxu0 0.0
        %2929 = vmatpush1.xpose.msra.mxu0 %v2892
        %2930 = vmatprep.subr.mxu0 0.0
        %2931 = vmatpush1.xpose.msra.mxu0 %v2895
        %2932 = vmatprep.subr.mxu0 0.0
        %2933 = vmatpush1.xpose.msra.mxu0 %v2898
        %2934 = vmatprep.subr.mxu0 0.0
        %2935 = vmatpush1.xpose.msra.mxu0 %v2901
        %2936 = vmatprep.subr.mxu0 0.0
        %2937 = vmatpush1.xpose.msra.mxu0 %v2904
        %2938 = vmatprep.subr.mxu0 0.0
        %2939 = vmatpush1.xpose.msra.mxu0 0.0
        %2940 = vmatprep.subr.mxu0 0.0
        %2941 = vmatpush1.xpose.msra.mxu0 0.0
        %2942 = vmatprep.subr.mxu0 0.0
        %2943 = vmatpush1.xpose.msra.mxu0 0.0
        %2944 = vmatprep.subr.mxu0 0.0
        %2945 = vmatpush1.xpose.msra.mxu0 0.0
        %2946 = vmatprep.subr.mxu0 0.0
        %2947 = vmatpush1.xpose.msra.mxu0 0.0
        %2948 = vmatprep.subr.mxu0 0.0
        %2949 = vmatpush1.xpose.msra.mxu0 0.0
        %2950 = vmatprep.subr.mxu0 0.0
        %2951 = vmatpush1.xpose.msra.mxu0 0.0
        %2952 = vmatprep.subr.mxu0 0.0
        %2953 = vmatpush1.xpose.msra.mxu0 0.0
        %2954 = vmatprep.subr.mxu0 0.0
        %2955 = vmatpush1.xpose.msra.mxu0 0.0
        %2956 = vmatprep.subr.mxu0 0.0
        %2957 = vmatpush1.xpose.msra.mxu0 0.0
        %2958 = vmatprep.subr.mxu0 0.0
        %2959 = vmatpush1.xpose.msra.mxu0 0.0
        %2960 = vmatprep.subr.mxu0 0.0
        %2961 = vmatpush1.xpose.msra.mxu0 0.0
        %2962 = vmatprep.subr.mxu0 0.0
        %2963 = vmatpush1.xpose.msra.mxu0 0.0
        %2964 = vmatprep.subr.mxu0 0.0
        %2965 = vmatpush1.xpose.msra.mxu0 0.0
        %2966 = vmatprep.subr.mxu0 0.0
        %2967 = vmatpush1.xpose.msra.mxu0 0.0
        %2968 = vmatprep.subr.mxu0 0.0
        %2969 = vmatpush1.xpose.msra.mxu0 0.0
        %2970 = vmatprep.mubr.f32.mxu0 0.0
        %2971 = vmatmul.mubr.f32.gmra.mrb[0].mxu0 %v2811
        %v2972 = vpop.f32.mrb[0].mxu0
        %v2973 = vadd.f32 0.0, %v2972
        %v2974 = vpop.f32.mrb[0].mxu0
        %2975 = vmatprep.mubr.f32.mxu0 0.0
        %2976 = vmatmul.mubr.f32.gmra.mrb[0].mxu0 %v2814
        %v2977 = vpop.f32.mrb[0].mxu0
        %v2978 = vadd.f32 0.0, %v2977
        %v2979 = vpop.f32.mrb[0].mxu0
        %2980 = vmatprep.mubr.f32.mxu0 0.0
        %2981 = vmatmul.mubr.f32.gmra.mrb[0].mxu0 %v2817
        %v2982 = vpop.f32.mrb[0].mxu0
        %v2983 = vadd.f32 0.0, %v2982
        %v2984 = vpop.f32.mrb[0].mxu0
        %2985 = vmatprep.mubr.f32.mxu0 0.0
        %2986 = vmatmul.mubr.f32.gmra.mrb[0].mxu0 %v2820
        %v2987 = vpop.f32.mrb[0].mxu0
        %v2988 = vadd.f32 0.0, %v2987
        %v2989 = vpop.f32.mrb[0].mxu0
        %2990 = vmatprep.mubr.f32.mxu0 0.0
        %2991 = vmatmul.mubr.f32.gmra.mrb[0].mxu0 %v2823
        %v2992 = vpop.f32.mrb[0].mxu0
        %v2993 = vadd.f32 0.0, %v2992
        %v2994 = vpop.f32.mrb[0].mxu0
        %2995 = vmatprep.mubr.f32.mxu0 0.0
        %2996 = vmatmul.mubr.f32.gmra.mrb[0].mxu0 %v2826
        %v2997 = vpop.f32.mrb[0].mxu0
        %v2998 = vadd.f32 0.0, %v2997
        %v2999 = vpop.f32.mrb[0].mxu0
        %3000 = vmatprep.mubr.f32.mxu0 0.0
        %3001 = vmatmul.mubr.f32.gmra.mrb[0].mxu0 %v2829
        %v3002 = vpop.f32.mrb[0].mxu0
        %v3003 = vadd.f32 0.0, %v3002
        %v3004 = vpop.f32.mrb[0].mxu0
        %3005 = vmatprep.mubr.f32.mxu0 0.0
        %3006 = vmatmul.mubr.f32.gmra.mrb[0].mxu0 %v2832
        %v3007 = vpop.f32.mrb[0].mxu0
        %v3008 = vadd.f32 0.0, %v3007
        %v3009 = vpop.f32.mrb[0].mxu0
        %3010 = vmatprep.mubr.f32.mxu0 0.0
        %3011 = vmatmul.mubr.f32.gmra.mrb[0].mxu0 %v2835
        %v3012 = vpop.f32.mrb[0].mxu0
        %v3013 = vadd.f32 0.0, %v3012
        %v3014 = vpop.f32.mrb[0].mxu0
        %3015 = vmatprep.mubr.f32.mxu0 0.0
        %3016 = vmatmul.mubr.f32.gmra.mrb[0].mxu0 %v2838
        %v3017 = vpop.f32.mrb[0].mxu0
        %v3018 = vadd.f32 0.0, %v3017
        %v3019 = vpop.f32.mrb[0].mxu0
        %3020 = vmatprep.mubr.f32.mxu0 0.0
        %3021 = vmatmul.mubr.f32.gmra.mrb[0].mxu0 %v2841
        %v3022 = vpop.f32.mrb[0].mxu0
        %v3023 = vadd.f32 0.0, %v3022
        %v3024 = vpop.f32.mrb[0].mxu0
        %3025 = vmatprep.mubr.f32.mxu0 0.0
        %3026 = vmatmul.mubr.f32.gmra.mrb[0].mxu0 %v2844
        %v3027 = vpop.f32.mrb[0].mxu0
        %v3028 = vadd.f32 0.0, %v3027
        %v3029 = vpop.f32.mrb[0].mxu0
        %3030 = vmatprep.mubr.f32.mxu0 0.0
        %3031 = vmatmul.mubr.f32.gmra.mrb[0].mxu0 %v2847
        %v3032 = vpop.f32.mrb[0].mxu0
        %v3033 = vadd.f32 0.0, %v3032
        %v3034 = vpop.f32.mrb[0].mxu0
        %3035 = vmatprep.mubr.f32.mxu0 0.0
        %3036 = vmatmul.mubr.f32.gmra.mrb[0].mxu0 %v2850
        %v3037 = vpop.f32.mrb[0].mxu0
        %v3038 = vadd.f32 0.0, %v3037
        %v3039 = vpop.f32.mrb[0].mxu0
        %3040 = vmatprep.mubr.f32.mxu0 0.0
        %3041 = vmatmul.mubr.f32.gmra.mrb[0].mxu0 %v2853
        %v3042 = vpop.f32.mrb[0].mxu0
        %v3043 = vadd.f32 0.0, %v3042
        %v3044 = vpop.f32.mrb[0].mxu0
        %3045 = vmatprep.mubr.f32.mxu0 0.0
        %3046 = vmatmul.mubr.f32.gmra.mrb[0].mxu0 %v2856
        %v3047 = vpop.f32.mrb[0].mxu0
        %v3048 = vadd.f32 0.0, %v3047
        %v3049 = vpop.f32.mrb[0].mxu0
        %3050 = vdwg.mxu0
        %v3052 = vsel %vm2568, %v2472, 0
        %v3055 = vsel %vm2568, %v2473, 0
        %v3058 = vsel %vm2568, %v2474, 0
        %v3061 = vsel %vm2568, %v2475, 0
        %v3064 = vsel %vm2568, %v2476, 0
        %v3067 = vsel %vm2568, %v2477, 0
        %v3070 = vsel %vm2568, %v2478, 0
        %v3073 = vsel %vm2568, %v2479, 0
        %v3076 = vsel %vm2568, %v2480, 0
        %v3079 = vsel %vm2568, %v2481, 0
        %v3082 = vsel %vm2568, %v2482, 0
        %v3085 = vsel %vm2568, %v2483, 0
        %v3088 = vsel %vm2568, %v2484, 0
        %v3091 = vsel %vm2568, %v2485, 0
        %v3094 = vsel %vm2568, %v2486, 0
        %v3097 = vsel %vm2568, %v2487, 0
        %v3100 = vsel %vm2568, %v2536, 0
        %v3103 = vsel %vm2568, %v2537, 0
        %v3106 = vsel %vm2568, %v2538, 0
        %v3109 = vsel %vm2568, %v2539, 0
        %v3112 = vsel %vm2568, %v2540, 0
        %v3115 = vsel %vm2568, %v2541, 0
        %v3118 = vsel %vm2568, %v2542, 0
        %v3121 = vsel %vm2568, %v2543, 0
        %v3124 = vsel %vm2568, %v2544, 0
        %v3127 = vsel %vm2568, %v2545, 0
        %v3130 = vsel %vm2568, %v2546, 0
        %v3133 = vsel %vm2568, %v2547, 0
        %v3136 = vsel %vm2568, %v2548, 0
        %v3139 = vsel %vm2568, %v2549, 0
        %v3142 = vsel %vm2568, %v2550, 0
        %v3145 = vsel %vm2568, %v2551, 0
        %3147 = vmatprep.subr.mxu0 0.0
        %3148 = vmatpush1.xpose.msra.mxu0 %v3100
        %3149 = vmatprep.subr.mxu0 0.0
        %3150 = vmatpush1.xpose.msra.mxu0 %v3103
        %3151 = vmatprep.subr.mxu0 0.0
        %3152 = vmatpush1.xpose.msra.mxu0 %v3106
        %3153 = vmatprep.subr.mxu0 0.0
        %3154 = vmatpush1.xpose.msra.mxu0 %v3109
        %3155 = vmatprep.subr.mxu0 0.0
        %3156 = vmatpush1.xpose.msra.mxu0 %v3112
        %3157 = vmatprep.subr.mxu0 0.0
        %3158 = vmatpush1.xpose.msra.mxu0 %v3115
        %3159 = vmatprep.subr.mxu0 0.0
        %3160 = vmatpush1.xpose.msra.mxu0 %v3118
        %3161 = vmatprep.subr.mxu0 0.0
        %3162 = vmatpush1.xpose.msra.mxu0 %v3121
        %3163 = vmatprep.subr.mxu0 0.0
        %3164 = vmatpush1.xpose.msra.mxu0 %v3124
        %3165 = vmatprep.subr.mxu0 0.0
        %3166 = vmatpush1.xpose.msra.mxu0 %v3127
        %3167 = vmatprep.subr.mxu0 0.0
        %3168 = vmatpush1.xpose.msra.mxu0 %v3130
        %3169 = vmatprep.subr.mxu0 0.0
        %3170 = vmatpush1.xpose.msra.mxu0 %v3133
        %3171 = vmatprep.subr.mxu0 0.0
        %3172 = vmatpush1.xpose.msra.mxu0 %v3136
        %3173 = vmatprep.subr.mxu0 0.0
        %3174 = vmatpush1.xpose.msra.mxu0 %v3139
        %3175 = vmatprep.subr.mxu0 0.0
        %3176 = vmatpush1.xpose.msra.mxu0 %v3142
        %3177 = vmatprep.subr.mxu0 0.0
        %3178 = vmatpush1.xpose.msra.mxu0 %v3145
        %3179 = vmatprep.subr.mxu0 0.0
        %3180 = vmatpush1.xpose.msra.mxu0 0.0
        %3181 = vmatprep.subr.mxu0 0.0
        %3182 = vmatpush1.xpose.msra.mxu0 0.0
        %3183 = vmatprep.subr.mxu0 0.0
        %3184 = vmatpush1.xpose.msra.mxu0 0.0
        %3185 = vmatprep.subr.mxu0 0.0
        %3186 = vmatpush1.xpose.msra.mxu0 0.0
        %3187 = vmatprep.subr.mxu0 0.0
        %3188 = vmatpush1.xpose.msra.mxu0 0.0
        %3189 = vmatprep.subr.mxu0 0.0
        %3190 = vmatpush1.xpose.msra.mxu0 0.0
        %3191 = vmatprep.subr.mxu0 0.0
        %3192 = vmatpush1.xpose.msra.mxu0 0.0
        %3193 = vmatprep.subr.mxu0 0.0
        %3194 = vmatpush1.xpose.msra.mxu0 0.0
        %3195 = vmatprep.subr.mxu0 0.0
        %3196 = vmatpush1.xpose.msra.mxu0 0.0
        %3197 = vmatprep.subr.mxu0 0.0
        %3198 = vmatpush1.xpose.msra.mxu0 0.0
        %3199 = vmatprep.subr.mxu0 0.0
        %3200 = vmatpush1.xpose.msra.mxu0 0.0
        %3201 = vmatprep.subr.mxu0 0.0
        %3202 = vmatpush1.xpose.msra.mxu0 0.0
        %3203 = vmatprep.subr.mxu0 0.0
        %3204 = vmatpush1.xpose.msra.mxu0 0.0
        %3205 = vmatprep.subr.mxu0 0.0
        %3206 = vmatpush1.xpose.msra.mxu0 0.0
        %3207 = vmatprep.subr.mxu0 0.0
        %3208 = vmatpush1.xpose.msra.mxu0 0.0
        %3209 = vmatprep.subr.mxu0 0.0
        %3210 = vmatpush1.xpose.msra.mxu0 0.0
        %3211 = vmatprep.mubr.f32.mxu0 0.0
        %3212 = vmatmul.mubr.f32.gmra.mrb[0].mxu0 %v3052
        %v3213 = vpop.f32.mrb[0].mxu0
        %v3214 = vadd.f32 0.0, %v3213
        %v3215 = vpop.f32.mrb[0].mxu0
        %3216 = vmatprep.mubr.f32.mxu0 0.0
        %3217 = vmatmul.mubr.f32.gmra.mrb[0].mxu0 %v3055
        %v3218 = vpop.f32.mrb[0].mxu0
        %v3219 = vadd.f32 0.0, %v3218
        %v3220 = vpop.f32.mrb[0].mxu0
        %3221 = vmatprep.mubr.f32.mxu0 0.0
        %3222 = vmatmul.mubr.f32.gmra.mrb[0].mxu0 %v3058
        %v3223 = vpop.f32.mrb[0].mxu0
        %v3224 = vadd.f32 0.0, %v3223
        %v3225 = vpop.f32.mrb[0].mxu0
        %3226 = vmatprep.mubr.f32.mxu0 0.0
        %3227 = vmatmul.mubr.f32.gmra.mrb[0].mxu0 %v3061
        %v3228 = vpop.f32.mrb[0].mxu0
        %v3229 = vadd.f32 0.0, %v3228
        %v3230 = vpop.f32.mrb[0].mxu0
        %3231 = vmatprep.mubr.f32.mxu0 0.0
        %3232 = vmatmul.mubr.f32.gmra.mrb[0].mxu0 %v3064
        %v3233 = vpop.f32.mrb[0].mxu0
        %v3234 = vadd.f32 0.0, %v3233
        %v3235 = vpop.f32.mrb[0].mxu0
        %3236 = vmatprep.mubr.f32.mxu0 0.0
        %3237 = vmatmul.mubr.f32.gmra.mrb[0].mxu0 %v3067
        %v3238 = vpop.f32.mrb[0].mxu0
        %v3239 = vadd.f32 0.0, %v3238
        %v3240 = vpop.f32.mrb[0].mxu0
        %3241 = vmatprep.mubr.f32.mxu0 0.0
        %3242 = vmatmul.mubr.f32.gmra.mrb[0].mxu0 %v3070
        %v3243 = vpop.f32.mrb[0].mxu0
        %v3244 = vadd.f32 0.0, %v3243
        %v3245 = vpop.f32.mrb[0].mxu0
        %3246 = vmatprep.mubr.f32.mxu0 0.0
        %3247 = vmatmul.mubr.f32.gmra.mrb[0].mxu0 %v3073
        %v3248 = vpop.f32.mrb[0].mxu0
        %v3249 = vadd.f32 0.0, %v3248
        %v3250 = vpop.f32.mrb[0].mxu0
        %3251 = vmatprep.mubr.f32.mxu0 0.0
        %3252 = vmatmul.mubr.f32.gmra.mrb[0].mxu0 %v3076
        %v3253 = vpop.f32.mrb[0].mxu0
        %v3254 = vadd.f32 0.0, %v3253
        %v3255 = vpop.f32.mrb[0].mxu0
        %3256 = vmatprep.mubr.f32.mxu0 0.0
        %3257 = vmatmul.mubr.f32.gmra.mrb[0].mxu0 %v3079
        %v3258 = vpop.f32.mrb[0].mxu0
        %v3259 = vadd.f32 0.0, %v3258
        %v3260 = vpop.f32.mrb[0].mxu0
        %3261 = vmatprep.mubr.f32.mxu0 0.0
        %3262 = vmatmul.mubr.f32.gmra.mrb[0].mxu0 %v3082
        %v3263 = vpop.f32.mrb[0].mxu0
        %v3264 = vadd.f32 0.0, %v3263
        %v3265 = vpop.f32.mrb[0].mxu0
        %3266 = vmatprep.mubr.f32.mxu0 0.0
        %3267 = vmatmul.mubr.f32.gmra.mrb[0].mxu0 %v3085
        %v3268 = vpop.f32.mrb[0].mxu0
        %v3269 = vadd.f32 0.0, %v3268
        %v3270 = vpop.f32.mrb[0].mxu0
        %3271 = vmatprep.mubr.f32.mxu0 0.0
        %3272 = vmatmul.mubr.f32.gmra.mrb[0].mxu0 %v3088
        %v3273 = vpop.f32.mrb[0].mxu0
        %v3274 = vadd.f32 0.0, %v3273
        %v3275 = vpop.f32.mrb[0].mxu0
        %3276 = vmatprep.mubr.f32.mxu0 0.0
        %3277 = vmatmul.mubr.f32.gmra.mrb[0].mxu0 %v3091
        %v3278 = vpop.f32.mrb[0].mxu0
        %v3279 = vadd.f32 0.0, %v3278
        %v3280 = vpop.f32.mrb[0].mxu0
        %3281 = vmatprep.mubr.f32.mxu0 0.0
        %3282 = vmatmul.mubr.f32.gmra.mrb[0].mxu0 %v3094
        %v3283 = vpop.f32.mrb[0].mxu0
        %v3284 = vadd.f32 0.0, %v3283
        %v3285 = vpop.f32.mrb[0].mxu0
        %3286 = vmatprep.mubr.f32.mxu0 0.0
        %3287 = vmatmul.mubr.f32.gmra.mrb[0].mxu0 %v3097
        %v3288 = vpop.f32.mrb[0].mxu0
        %v3289 = vadd.f32 0.0, %v3288
        %v3290 = vpop.f32.mrb[0].mxu0
        %3291 = vdwg.mxu0
        %v3293 = vsel %vm2568, %v2488, 0
        %v3296 = vsel %vm2568, %v2489, 0
        %v3299 = vsel %vm2568, %v2490, 0
        %v3302 = vsel %vm2568, %v2491, 0
        %v3305 = vsel %vm2568, %v2492, 0
        %v3308 = vsel %vm2568, %v2493, 0
        %v3311 = vsel %vm2568, %v2494, 0
        %v3314 = vsel %vm2568, %v2495, 0
        %v3317 = vsel %vm2568, %v2496, 0
        %v3320 = vsel %vm2568, %v2497, 0
        %v3323 = vsel %vm2568, %v2498, 0
        %v3326 = vsel %vm2568, %v2499, 0
        %v3329 = vsel %vm2568, %v2500, 0
        %v3332 = vsel %vm2568, %v2501, 0
        %v3335 = vsel %vm2568, %v2502, 0
        %v3338 = vsel %vm2568, %v2503, 0
        %v3341 = vsel %vm2568, %v2552, 0
        %v3344 = vsel %vm2568, %v2553, 0
        %v3347 = vsel %vm2568, %v2554, 0
        %v3350 = vsel %vm2568, %v2555, 0
        %v3353 = vsel %vm2568, %v2556, 0
        %v3356 = vsel %vm2568, %v2557, 0
        %v3359 = vsel %vm2568, %v2558, 0
        %v3362 = vsel %vm2568, %v2559, 0
        %v3365 = vsel %vm2568, %v2560, 0
        %v3368 = vsel %vm2568, %v2561, 0
        %v3371 = vsel %vm2568, %v2562, 0
        %v3374 = vsel %vm2568, %v2563, 0
        %v3377 = vsel %vm2568, %v2564, 0
        %v3380 = vsel %vm2568, %v2565, 0
        %v3383 = vsel %vm2568, %v2566, 0
        %v3386 = vsel %vm2568, %v2567, 0
        %3388 = vmatprep.subr.mxu0 0.0
        %3389 = vmatpush1.xpose.msra.mxu0 %v3341
        %3390 = vmatprep.subr.mxu0 0.0
        %3391 = vmatpush1.xpose.msra.mxu0 %v3344
        %3392 = vmatprep.subr.mxu0 0.0
        %3393 = vmatpush1.xpose.msra.mxu0 %v3347
        %3394 = vmatprep.subr.mxu0 0.0
        %3395 = vmatpush1.xpose.msra.mxu0 %v3350
        %3396 = vmatprep.subr.mxu0 0.0
        %3397 = vmatpush1.xpose.msra.mxu0 %v3353
        %3398 = vmatprep.subr.mxu0 0.0
        %3399 = vmatpush1.xpose.msra.mxu0 %v3356
        %3400 = vmatprep.subr.mxu0 0.0
        %3401 = vmatpush1.xpose.msra.mxu0 %v3359
        %3402 = vmatprep.subr.mxu0 0.0
        %3403 = vmatpush1.xpose.msra.mxu0 %v3362
        %3404 = vmatprep.subr.mxu0 0.0
        %3405 = vmatpush1.xpose.msra.mxu0 %v3365
        %3406 = vmatprep.subr.mxu0 0.0
        %3407 = vmatpush1.xpose.msra.mxu0 %v3368
        %3408 = vmatprep.subr.mxu0 0.0
        %3409 = vmatpush1.xpose.msra.mxu0 %v3371
        %3410 = vmatprep.subr.mxu0 0.0
        %3411 = vmatpush1.xpose.msra.mxu0 %v3374
        %3412 = vmatprep.subr.mxu0 0.0
        %3413 = vmatpush1.xpose.msra.mxu0 %v3377
        %3414 = vmatprep.subr.mxu0 0.0
        %3415 = vmatpush1.xpose.msra.mxu0 %v3380
        %3416 = vmatprep.subr.mxu0 0.0
        %3417 = vmatpush1.xpose.msra.mxu0 %v3383
        %3418 = vmatprep.subr.mxu0 0.0
        %3419 = vmatpush1.xpose.msra.mxu0 %v3386
        %3420 = vmatprep.subr.mxu0 0.0
        %3421 = vmatpush1.xpose.msra.mxu0 0.0
        %3422 = vmatprep.subr.mxu0 0.0
        %3423 = vmatpush1.xpose.msra.mxu0 0.0
        %3424 = vmatprep.subr.mxu0 0.0
        %3425 = vmatpush1.xpose.msra.mxu0 0.0
        %3426 = vmatprep.subr.mxu0 0.0
        %3427 = vmatpush1.xpose.msra.mxu0 0.0
        %3428 = vmatprep.subr.mxu0 0.0
        %3429 = vmatpush1.xpose.msra.mxu0 0.0
        %3430 = vmatprep.subr.mxu0 0.0
        %3431 = vmatpush1.xpose.msra.mxu0 0.0
        %3432 = vmatprep.subr.mxu0 0.0
        %3433 = vmatpush1.xpose.msra.mxu0 0.0
        %3434 = vmatprep.subr.mxu0 0.0
        %3435 = vmatpush1.xpose.msra.mxu0 0.0
        %3436 = vmatprep.subr.mxu0 0.0
        %3437 = vmatpush1.xpose.msra.mxu0 0.0
        %3438 = vmatprep.subr.mxu0 0.0
        %3439 = vmatpush1.xpose.msra.mxu0 0.0
        %3440 = vmatprep.subr.mxu0 0.0
        %3441 = vmatpush1.xpose.msra.mxu0 0.0
        %3442 = vmatprep.subr.mxu0 0.0
        %3443 = vmatpush1.xpose.msra.mxu0 0.0
        %3444 = vmatprep.subr.mxu0 0.0
        %3445 = vmatpush1.xpose.msra.mxu0 0.0
        %3446 = vmatprep.subr.mxu0 0.0
        %3447 = vmatpush1.xpose.msra.mxu0 0.0
        %3448 = vmatprep.subr.mxu0 0.0
        %3449 = vmatpush1.xpose.msra.mxu0 0.0
        %3450 = vmatprep.subr.mxu0 0.0
        %3451 = vmatpush1.xpose.msra.mxu0 0.0
        %3452 = vmatprep.mubr.f32.mxu0 0.0
        %3453 = vmatmul.mubr.f32.gmra.mrb[0].mxu0 %v3293
        %v3454 = vpop.f32.mrb[0].mxu0
        %v3455 = vadd.f32 0.0, %v3454
        %v3456 = vpop.f32.mrb[0].mxu0
        %3457 = vmatprep.mubr.f32.mxu0 0.0
        %3458 = vmatmul.mubr.f32.gmra.mrb[0].mxu0 %v3296
        %v3459 = vpop.f32.mrb[0].mxu0
        %v3460 = vadd.f32 0.0, %v3459
        %v3461 = vpop.f32.mrb[0].mxu0
        %3462 = vmatprep.mubr.f32.mxu0 0.0
        %3463 = vmatmul.mubr.f32.gmra.mrb[0].mxu0 %v3299
        %v3464 = vpop.f32.mrb[0].mxu0
        %v3465 = vadd.f32 0.0, %v3464
        %v3466 = vpop.f32.mrb[0].mxu0
        %3467 = vmatprep.mubr.f32.mxu0 0.0
        %3468 = vmatmul.mubr.f32.gmra.mrb[0].mxu0 %v3302
        %v3469 = vpop.f32.mrb[0].mxu0
        %v3470 = vadd.f32 0.0, %v3469
        %v3471 = vpop.f32.mrb[0].mxu0
        %3472 = vmatprep.mubr.f32.mxu0 0.0
        %3473 = vmatmul.mubr.f32.gmra.mrb[0].mxu0 %v3305
        %v3474 = vpop.f32.mrb[0].mxu0
        %v3475 = vadd.f32 0.0, %v3474
        %v3476 = vpop.f32.mrb[0].mxu0
        %3477 = vmatprep.mubr.f32.mxu0 0.0
        %3478 = vmatmul.mubr.f32.gmra.mrb[0].mxu0 %v3308
        %v3479 = vpop.f32.mrb[0].mxu0
        %v3480 = vadd.f32 0.0, %v3479
        %v3481 = vpop.f32.mrb[0].mxu0
        %3482 = vmatprep.mubr.f32.mxu0 0.0
        %3483 = vmatmul.mubr.f32.gmra.mrb[0].mxu0 %v3311
        %v3484 = vpop.f32.mrb[0].mxu0
        %v3485 = vadd.f32 0.0, %v3484
        %v3486 = vpop.f32.mrb[0].mxu0
        %3487 = vmatprep.mubr.f32.mxu0 0.0
        %3488 = vmatmul.mubr.f32.gmra.mrb[0].mxu0 %v3314
        %v3489 = vpop.f32.mrb[0].mxu0
        %v3490 = vadd.f32 0.0, %v3489
        %v3491 = vpop.f32.mrb[0].mxu0
        %3492 = vmatprep.mubr.f32.mxu0 0.0
        %3493 = vmatmul.mubr.f32.gmra.mrb[0].mxu0 %v3317
        %v3494 = vpop.f32.mrb[0].mxu0
        %v3495 = vadd.f32 0.0, %v3494
        %v3496 = vpop.f32.mrb[0].mxu0
        %3497 = vmatprep.mubr.f32.mxu0 0.0
        %3498 = vmatmul.mubr.f32.gmra.mrb[0].mxu0 %v3320
        %v3499 = vpop.f32.mrb[0].mxu0
        %v3500 = vadd.f32 0.0, %v3499
        %v3501 = vpop.f32.mrb[0].mxu0
        %3502 = vmatprep.mubr.f32.mxu0 0.0
        %3503 = vmatmul.mubr.f32.gmra.mrb[0].mxu0 %v3323
        %v3504 = vpop.f32.mrb[0].mxu0
        %v3505 = vadd.f32 0.0, %v3504
        %v3506 = vpop.f32.mrb[0].mxu0
        %3507 = vmatprep.mubr.f32.mxu0 0.0
        %3508 = vmatmul.mubr.f32.gmra.mrb[0].mxu0 %v3326
        %v3509 = vpop.f32.mrb[0].mxu0
        %v3510 = vadd.f32 0.0, %v3509
        %v3511 = vpop.f32.mrb[0].mxu0
        %3512 = vmatprep.mubr.f32.mxu0 0.0
        %3513 = vmatmul.mubr.f32.gmra.mrb[0].mxu0 %v3329
        %v3514 = vpop.f32.mrb[0].mxu0
        %v3515 = vadd.f32 0.0, %v3514
        %v3516 = vpop.f32.mrb[0].mxu0
        %3517 = vmatprep.mubr.f32.mxu0 0.0
        %3518 = vmatmul.mubr.f32.gmra.mrb[0].mxu0 %v3332
        %v3519 = vpop.f32.mrb[0].mxu0
        %v3520 = vadd.f32 0.0, %v3519
        %v3521 = vpop.f32.mrb[0].mxu0
        %3522 = vmatprep.mubr.f32.mxu0 0.0
        %3523 = vmatmul.mubr.f32.gmra.mrb[0].mxu0 %v3335
        %v3524 = vpop.f32.mrb[0].mxu0
        %v3525 = vadd.f32 0.0, %v3524
        %v3526 = vpop.f32.mrb[0].mxu0
        %3527 = vmatprep.mubr.f32.mxu0 0.0
        %3528 = vmatmul.mubr.f32.gmra.mrb[0].mxu0 %v3338
        %v3529 = vpop.f32.mrb[0].mxu0
        %v3530 = vadd.f32 0.0, %v3529
        %v3531 = vpop.f32.mrb[0].mxu0
        %3532 = vdwg.mxu0
        %v3533 = vsub.f32 %v2732, %v2423
        %v3534 = vsub.f32 %v2737, %v2424
        %v3535 = vsub.f32 %v2742, %v2425
        %v3536 = vsub.f32 %v2747, %v2426
        %v3537 = vsub.f32 %v2752, %v2427
        %v3538 = vsub.f32 %v2757, %v2428
        %v3539 = vsub.f32 %v2762, %v2429
        %v3540 = vsub.f32 %v2767, %v2430
        %v3541 = vsub.f32 %v2772, %v2431
        %v3542 = vsub.f32 %v2777, %v2432
        %v3543 = vsub.f32 %v2782, %v2433
        %v3544 = vsub.f32 %v2787, %v2434
        %v3545 = vsub.f32 %v2792, %v2435
        %v3546 = vsub.f32 %v2797, %v2436
        %v3547 = vsub.f32 %v2802, %v2437
        %v3548 = vsub.f32 %v2807, %v2438
        %v3549 = vsub.f32 %v2973, %v2423
        %v3550 = vsub.f32 %v2978, %v2424
        %v3551 = vsub.f32 %v2983, %v2425
        %v3552 = vsub.f32 %v2988, %v2426
        %v3553 = vsub.f32 %v2993, %v2427
        %v3554 = vsub.f32 %v2998, %v2428
        %v3555 = vsub.f32 %v3003, %v2429
        %v3556 = vsub.f32 %v3008, %v2430
        %v3557 = vsub.f32 %v3013, %v2431
        %v3558 = vsub.f32 %v3018, %v2432
        %v3559 = vsub.f32 %v3023, %v2433
        %v3560 = vsub.f32 %v3028, %v2434
        %v3561 = vsub.f32 %v3033, %v2435
        %v3562 = vsub.f32 %v3038, %v2436
        %v3563 = vsub.f32 %v3043, %v2437
        %v3564 = vsub.f32 %v3048, %v2438
        %v3565 = vsub.f32 %v3214, %v2423
        %v3566 = vsub.f32 %v3219, %v2424
        %v3567 = vsub.f32 %v3224, %v2425
        %v3568 = vsub.f32 %v3229, %v2426
        %v3569 = vsub.f32 %v3234, %v2427
        %v3570 = vsub.f32 %v3239, %v2428
        %v3571 = vsub.f32 %v3244, %v2429
        %v3572 = vsub.f32 %v3249, %v2430
        %v3573 = vsub.f32 %v3254, %v2431
        %v3574 = vsub.f32 %v3259, %v2432
        %v3575 = vsub.f32 %v3264, %v2433
        %v3576 = vsub.f32 %v3269, %v2434
        %v3577 = vsub.f32 %v3274, %v2435
        %v3578 = vsub.f32 %v3279, %v2436
        %v3579 = vsub.f32 %v3284, %v2437
        %v3580 = vsub.f32 %v3289, %v2438
        %v3581 = vsub.f32 %v3455, %v2423
        %v3582 = vsub.f32 %v3460, %v2424
        %v3583 = vsub.f32 %v3465, %v2425
        %v3584 = vsub.f32 %v3470, %v2426
        %v3585 = vsub.f32 %v3475, %v2427
        %v3586 = vsub.f32 %v3480, %v2428
        %v3587 = vsub.f32 %v3485, %v2429
        %v3588 = vsub.f32 %v3490, %v2430
        %v3589 = vsub.f32 %v3495, %v2431
        %v3590 = vsub.f32 %v3500, %v2432
        %v3591 = vsub.f32 %v3505, %v2433
        %v3592 = vsub.f32 %v3510, %v2434
        %v3593 = vsub.f32 %v3515, %v2435
        %v3594 = vsub.f32 %v3520, %v2436
        %v3595 = vsub.f32 %v3525, %v2437
        %v3596 = vsub.f32 %v3530, %v2438
        %3597 = vst [vmem:[%s435] sm:$0xff] %v3533
        %3598 = vst [vmem:[%s435 + $0x8] sm:$0xff] %v3534
        %3599 = vst [vmem:[%s435 + $0x10] sm:$0xff] %v3535
        %3600 = vst [vmem:[%s435 + $0x18] sm:$0xff] %v3536
        %3601 = vst [vmem:[%s435 + $0x20] sm:$0xff] %v3537
        %3602 = vst [vmem:[%s435 + $0x28] sm:$0xff] %v3538
        %3603 = vst [vmem:[%s435 + $0x30] sm:$0xff] %v3539
        %3604 = vst [vmem:[%s435 + $0x38] sm:$0xff] %v3540
        %3605 = vst [vmem:[%s435 + $0x40] sm:$0xff] %v3541
        %3606 = vst [vmem:[%s435 + $0x48] sm:$0xff] %v3542
        %3607 = vst [vmem:[%s435 + $0x50] sm:$0xff] %v3543
        %3608 = vst [vmem:[%s435 + $0x58] sm:$0xff] %v3544
        %3609 = vst [vmem:[%s435 + $0x60] sm:$0xff] %v3545
        %3610 = vst [vmem:[%s435 + $0x68] sm:$0xff] %v3546
        %3611 = vst [vmem:[%s435 + $0x70] sm:$0xff] %v3547
        %3612 = vst [vmem:[%s435 + $0x78] sm:$0xff] %v3548
        %3613 = vst [vmem:[%s435 + $0x80] sm:$0xff] %v3549
        %3614 = vst [vmem:[%s435 + $0x88] sm:$0xff] %v3550
        %3615 = vst [vmem:[%s435 + $0x90] sm:$0xff] %v3551
        %3616 = vst [vmem:[%s435 + $0x98] sm:$0xff] %v3552
        %3617 = vst [vmem:[%s435 + $0xa0] sm:$0xff] %v3553
        %3618 = vst [vmem:[%s435 + $0xa8] sm:$0xff] %v3554
        %3619 = vst [vmem:[%s435 + $0xb0] sm:$0xff] %v3555
        %3620 = vst [vmem:[%s435 + $0xb8] sm:$0xff] %v3556
        %3621 = vst [vmem:[%s435 + $0xc0] sm:$0xff] %v3557
        %3622 = vst [vmem:[%s435 + $0xc8] sm:$0xff] %v3558
        %3623 = vst [vmem:[%s435 + $0xd0] sm:$0xff] %v3559
        %3624 = vst [vmem:[%s435 + $0xd8] sm:$0xff] %v3560
        %3625 = vst [vmem:[%s435 + $0xe0] sm:$0xff] %v3561
        %3626 = vst [vmem:[%s435 + $0xe8] sm:$0xff] %v3562
        %3627 = vst [vmem:[%s435 + $0xf0] sm:$0xff] %v3563
        %3628 = vst [vmem:[%s435 + $0xf8] sm:$0xff] %v3564
        %3629 = vst [vmem:[%s435 + $0x100] sm:$0xff] %v3565
        %3630 = vst [vmem:[%s435 + $0x108] sm:$0xff] %v3566
        %3631 = vst [vmem:[%s435 + $0x110] sm:$0xff] %v3567
        %3632 = vst [vmem:[%s435 + $0x118] sm:$0xff] %v3568
        %3633 = vst [vmem:[%s435 + $0x120] sm:$0xff] %v3569
        %3634 = vst [vmem:[%s435 + $0x128] sm:$0xff] %v3570
        %3635 = vst [vmem:[%s435 + $0x130] sm:$0xff] %v3571
        %3636 = vst [vmem:[%s435 + $0x138] sm:$0xff] %v3572
        %3637 = vst [vmem:[%s435 + $0x140] sm:$0xff] %v3573
        %3638 = vst [vmem:[%s435 + $0x148] sm:$0xff] %v3574
        %3639 = vst [vmem:[%s435 + $0x150] sm:$0xff] %v3575
        %3640 = vst [vmem:[%s435 + $0x158] sm:$0xff] %v3576
        %3641 = vst [vmem:[%s435 + $0x160] sm:$0xff] %v3577
        %3642 = vst [vmem:[%s435 + $0x168] sm:$0xff] %v3578
        %3643 = vst [vmem:[%s435 + $0x170] sm:$0xff] %v3579
        %3644 = vst [vmem:[%s435 + $0x178] sm:$0xff] %v3580
        %3645 = vst [vmem:[%s435 + $0x180] sm:$0xff] %v3581
        %3646 = vst [vmem:[%s435 + $0x188] sm:$0xff] %v3582
        %3647 = vst [vmem:[%s435 + $0x190] sm:$0xff] %v3583
        %3648 = vst [vmem:[%s435 + $0x198] sm:$0xff] %v3584
        %3649 = vst [vmem:[%s435 + $0x1a0] sm:$0xff] %v3585
        %3650 = vst [vmem:[%s435 + $0x1a8] sm:$0xff] %v3586
        %3651 = vst [vmem:[%s435 + $0x1b0] sm:$0xff] %v3587
        %3652 = vst [vmem:[%s435 + $0x1b8] sm:$0xff] %v3588
        %3653 = vst [vmem:[%s435 + $0x1c0] sm:$0xff] %v3589
        %3654 = vst [vmem:[%s435 + $0x1c8] sm:$0xff] %v3590
        %3655 = vst [vmem:[%s435 + $0x1d0] sm:$0xff] %v3591
        %3656 = vst [vmem:[%s435 + $0x1d8] sm:$0xff] %v3592
        %3657 = vst [vmem:[%s435 + $0x1e0] sm:$0xff] %v3593
        %3658 = vst [vmem:[%s435 + $0x1e8] sm:$0xff] %v3594
        %3659 = vst [vmem:[%s435 + $0x1f0] sm:$0xff] %v3595
        %3660 = vst [vmem:[%s435 + $0x1f8] sm:$0xff] %v3596
        %s3661 = sand.u32 %s232, 1
        %s3662 = scalar_lea.sflag [#allocation7], %s3661
        %s3663 = sand.u32 %s232, 1
        %s3664 = smul.addr %s3663, 512
        %s3665 = scalar_lea.vmem [#allocation19], %s3664
        // Predicated region
        $region89: #{tpu_custom_call.1} parent=51 // pred_check
          %p3666 = pneg %p242
        $region90: #{tpu_custom_call.1} parent=51 // pred_check_branch
          %3668 = sbr.rel (%p3666) target = $region92
        $region91: #{tpu_custom_call.1} parent=51 // pred_region
          %s3669 = smul.u32 16, %s32
          %s3671 = ssub.s32 8192, 8192
          %3672 = vsyncadd %s3662, %s3671
          %s3673 = smul.addr %s31, 64
          %s3674 = sadd.s32 %s3669, %s3673
          %s3675 = smul.addr %s3674, 128
          %s3676 = scalar_lea.hbm %s8, %s3675
          %s3677 = sshll.u32 %s3665, 4
          %s3678 = int_to_ptr.vmem [resolvable:$true] %s3677
          %3683 = dma.vmem_to_hbm [thread:$0]  %s3678, 8192, %s3676, %s3662, 128, 128, 8
        $region92: #{tpu_custom_call.1} parent=51 // pred_fallthru
          _
      $region52: #{tpu_custom_call.1} parent=5 // pred_fallthru
        _
      %p3684 = scmp.le.s32.totalorder 2, %s22
      // Predicated region
      $region93: #{tpu_custom_call.1} parent=5 // pred_check
        %p3685 = pneg %p3684
      $region94: #{tpu_custom_call.1} parent=5 // pred_check_branch
        %3687 = sbr.rel (%p3685) target = $region96
      $region95: #{tpu_custom_call.1} parent=5 // pred_region
        %s3688 = ssub.s32 %s22, 2
        // Predicated region
        $region97: #{tpu_custom_call.1} parent=95 // pred_check
          %p3689 = pneg %p248
        $region98: #{tpu_custom_call.1} parent=95 // pred_check_branch
          %3691 = sbr.rel (%p3689) target = $region100
        $region99: #{tpu_custom_call.1} parent=95 // pred_region
          %s3692 = sand.u32 %s233, 1
          %s3693 = scalar_lea.sflag [#allocation7], %s3692
          %s3694 = sand.u32 %s233, 1
          %s3695 = smul.addr %s3694, 512
          %s3696 = scalar_lea.vmem [#allocation19], %s3695
          %3697 = dma.done %s3693, 8192
        $region100: #{tpu_custom_call.1} parent=95 // pred_fallthru
          _
      $region96: #{tpu_custom_call.1} parent=5 // pred_fallthru
        _
    $region6: #{tpu_custom_call.1} parent=1 // loop_footer
      %s26 = sadd.s32 1, %s22
    $region7: #{tpu_custom_call.1} parent=1 // loop_footer_branch
      %21 = sbr.rel target = $region3
    $region8: #{tpu_custom_call.1} parent=1 // loop_exit
      _
    %3698 = vsyncpa [#allocation6], 1
    %s3699 = scalar_lea.sflag [#allocation6], 1
    %3700 = vsyncpa %s3699, 1
    %3701 = vsyncpa [#allocation9], 1
    %3702 = vsyncpa [#allocation12], 1
    %3703 = vsyncpa [#allocation15], 1
    %3704 = vsyncpa [#allocation18], 1
    %3705 = vsyncpa [#allocation7], 1
    %s3706 = scalar_lea.sflag [#allocation7], 1
    %3707 = vsyncpa %s3706, 1

</llo_original>
